<compile_context>
chip_gen: v7x
topology: tpu7x:2x2x1
jax: 0.10.0
libtpu: 0.0.40
codegen_flags: <defaults>
</compile_context>

<pallas_src>
import functools
import math
import random

import jax
import jax.numpy as jnp
from jax.experimental import pallas as pl
from jax.experimental.pallas import tpu as pltpu


# ----------------------------------------------------------------------------
# Fused decoder kernel: all layers, one timestep per grid step, state in VMEM
# ----------------------------------------------------------------------------
def _dcgru_decoder_kernel(tf_ref, supports_ref, xseq_ref, h0_ref, *rest,
                          in_dims, max_diffusion_step):
    """One grid step = one decode timestep for one batch block (all layers).

    tf_ref:       (T,) int32 SMEM (scalar prefetch) teacher-forcing schedule
    supports_ref: (S, N, N) bf16 (resident)
    xseq_ref:     (1, bb, N, in0) f32 streamed teacher input for this step
    h0_ref:       (L, bb, N, H) f32 encoder hidden state (per batch block)
    weights:      per layer [wg (M*F,2H), bg (1,2H), wc (M*F,H), bc (1,H)] bf16/f32
                  plus [wp (H,P), bp (1,P)] for the last (projection) layer
    out_ref:      (1, bb, N, P) f32
    scratch:      L x VMEM (bb, N, H) hidden states + VMEM (bb, N, P) feedback
    """
    L = len(in_dims)
    n_w = 4 * L + 2
    wrefs = rest[:n_w]
    out_ref = rest[n_w]
    h_refs = rest[n_w + 1:n_w + 1 + L]
    fb_ref = rest[n_w + 1 + L]

    S = supports_ref.shape[0]
    K = max_diffusion_step
    M = S * K + 1
    bb, N, H = h_refs[0].shape
    P = fb_ref.shape[2]
    rows = bb * N

    t = pl.program_id(1)

    # Initialize the per-layer recurrent state from the encoder state at t == 0
    # (state then stays resident in VMEM for the whole sequence).
    @pl.when(t == 0)
    def _():
        for l in range(L):
            h_refs[l][...] = h0_ref[l]

    # Layer-0 input: streamed teacher-forcing input, or the fed-back previous
    # projection output already resident in VMEM.
    @pl.when(tf_ref[t] != 0)
    def _():
        fb_ref[...] = xseq_ref[0]

    # Supports broadcast once per step over the batch block (bf16), shared by
    # every diffusion matmul in every layer below.
    # TODO(synk): a node-major (N,N)@(N, bb*C) formulation would merge these into
    # one wide MXU matmul per Chebyshev step but needs lane-crossing reshapes.
    A_b = [jnp.broadcast_to(supports_ref[s], (bb, N, N)) for s in range(S)]

    def amat(s, v):
        return jnp.einsum('bnm,bmc->bnc', A_b[s], v.astype(jnp.bfloat16),
                          preferred_element_type=jnp.float32)

    def cheb_terms(z):
        # [T_0 z, T_1(A_s) z, ..., T_K(A_s) z for each support s], all f32.
        terms = [z]
        for s in range(S):
            if K < 1:
                continue
            z1 = amat(s, z)
            terms.append(z1)
            zk_2, zk_1 = z, z1
            for _ in range(2, K + 1):
                z2 = 2.0 * amat(s, zk_1) - zk_2
                terms.append(z2)
                zk_2, zk_1 = zk_1, z2
        return terms

    def gconv(zin, w_ref, b_ref):
        # Concatenate Chebyshev terms on the lane axis and do ONE deep matmul:
        # (rows, M*F) @ (M*F, O), f32 accumulation.
        F = zin.shape[-1]
        terms = cheb_terms(zin)
        zcat = jnp.concatenate([z.astype(jnp.bfloat16) for z in terms], axis=-1)
        zcat = zcat.reshape(rows, M * F)
        return jnp.dot(zcat, w_ref[...],
                       preferred_element_type=jnp.float32) + b_ref[...]

    cur = fb_ref[...]                          # (bb, N, in_dims[0]) f32
    for l in range(L):
        wg, bg, wc, bc = wrefs[4 * l:4 * l + 4]
        is_last = (l == L - 1)

        h3 = h_refs[l][...]                    # (bb, N, H) f32
        h2 = h3.reshape(rows, H)

        # Gate conv on [x | h]  ->  r, u
        g = jax.nn.sigmoid(gconv(jnp.concatenate([cur, h3], axis=-1), wg, bg))
        r = g[:, :H]
        u = g[:, H:]
        # TODO(synk): when H is not a multiple of 128 this r/u split is a
        # mid-lane-tile slice; padding the gate columns would avoid masked moves.

        # Candidate conv on [x | r*h]
        rh = r.reshape(bb, N, H) * h3
        c = jnp.tanh(gconv(jnp.concatenate([cur, rh], axis=-1), wc, bc))

        new_h = u * h2 + (1.0 - u) * c         # (rows, H) f32
        h_refs[l][...] = new_h.reshape(bb, N, H)
        cur = new_h.reshape(bb, N, H)

        if is_last:
            wp, bp = wrefs[4 * L:4 * L + 2]
            out = jnp.dot(new_h.astype(jnp.bfloat16), wp[...],
                          preferred_element_type=jnp.float32) + bp[...]
            fb_ref[...] = out.reshape(bb, N, P)        # fed back next step
            out_ref[...] = out.reshape(1, bb, N, P)


# ----------------------------------------------------------------------------
# Decoder wrapper: ONE pallas_call for the whole decode
# ----------------------------------------------------------------------------
def dcgru_decoder_pallas(inputs, init_hidden, layer_kparams, supports_bf16, *,
                         num_nodes, hid_dim, output_dim, max_diffusion_step,
                         teacher_force, batch_block=None,
                         vmem_limit_bytes=48 * 1024 * 1024):
    """inputs: (seq, B, N, in_dim); init_hidden: (L, B, N*H).  Returns
    (seq, B, N*output_dim) with outputs[0] = 0, matching the PyTorch module."""
    seq, B = inputs.shape[0], inputs.shape[1]
    N, H, P = num_nodes, hid_dim, output_dim
    L = len(layer_kparams)
    S = supports_bf16.shape[0]
    K = max_diffusion_step
    T = seq - 1
    assert T >= 1, "need at least two input frames"

    in_dim = inputs.reshape(seq, B, -1).shape[-1] // N
    assert in_dim == P, "decoder feeds its projected output back as the input"
    in_dims = tuple([in_dim] + [H] * (L - 1))

    # No silent fallback: blocking must divide the batch (keeps the intended
    # two-core sharding on v7x).  Default = full batch (best on 1-TC v5e/v6e).
    bb = B if batch_block is None else batch_block
    if B % bb != 0:
        raise ValueError(f"batch_block={bb} must divide batch={B}")
    nb = B // bb

    x_seq = inputs.reshape(seq, B, N, in_dim).astype(jnp.float32)
    h0 = init_hidden.reshape(L, B, N, H).astype(jnp.float32)

    # Teacher-forcing schedule: step tau uses streamed inputs[tau] iff tau == 0
    # or teacher_force[tau-1]; otherwise the fed-back previous output.
    tf_flags = jnp.asarray(
        [1] + [int(bool(f)) for f in teacher_force[:T - 1]], dtype=jnp.int32)

    def x_map(b, t, tf):
        return (t, b, 0, 0)

    def out_map(b, t, tf):
        return (t, b, 0, 0)

    def h0_map(b, t, tf):
        return (0, b, 0, 0)

    def rep3(b, t, tf):
        return (0, 0, 0)

    def rep2(b, t, tf):
        return (0, 0)

    in_specs = [
        pl.BlockSpec((S, N, N), rep3),                 # supports (resident)
        pl.BlockSpec((1, bb, N, in_dim), x_map),       # streamed teacher inputs
        pl.BlockSpec((L, bb, N, H), h0_map),           # encoder hidden state
    ]
    flat_w = []
    for kp in layer_kparams:
        flat_w += [kp['wg'], kp['bg'], kp['wc'], kp['bc']]
    flat_w += [layer_kparams[-1]['wp'], layer_kparams[-1]['bp']]
    in_specs += [pl.BlockSpec(w.shape, rep2) for w in flat_w]

    grid_spec = pltpu.PrefetchScalarGridSpec(
        num_scalar_prefetch=1,
        grid=(nb, T),
        in_specs=in_specs,
        out_specs=pl.BlockSpec((1, bb, N, P), out_map),
        scratch_shapes=([pltpu.VMEM((bb, N, H), jnp.float32) for _ in range(L)]
                        + [pltpu.VMEM((bb, N, P), jnp.float32)]),
    )

    kernel = functools.partial(_dcgru_decoder_kernel,
                               in_dims=in_dims,
                               max_diffusion_step=K)

    out_seq = pl.pallas_call(
        kernel,
        grid_spec=grid_spec,
        out_shape=jax.ShapeDtypeStruct((T, B, N, P), jnp.float32),
        compiler_params=pltpu.CompilerParams(
            dimension_semantics=("parallel", "arbitrary"),
            vmem_limit_bytes=vmem_limit_bytes),
    )(tf_flags, supports_bf16, x_seq, h0, *flat_w)

    out = jnp.concatenate(
        [jnp.zeros((1, B, N, P), jnp.float32), out_seq], axis=0)
    return out.reshape(seq, B, N * P)


# ----------------------------------------------------------------------------
# Parameter construction / preparation
# ----------------------------------------------------------------------------
def _round_bf16(a):
    return a.astype(jnp.bfloat16).astype(jnp.float32)


def make_cell_params(key, in_dim, hid_dim, num_matrices, proj_dim=None):
    F = in_dim + hid_dim
    M = num_matrices
    k1, k2, k3 = jax.random.split(key, 3)

    def xavier(k, rows, cols):
        std = 1.414 * math.sqrt(2.0 / (rows + cols))
        return _round_bf16(std * jax.random.normal(k, (rows, cols), jnp.float32))

    p = {'wg': xavier(k1, F * M, 2 * hid_dim),
         'bg': jnp.zeros((2 * hid_dim,), jnp.float32),
         'wc': xavier(k2, F * M, hid_dim),
         'bc': jnp.zeros((hid_dim,), jnp.float32)}
    if proj_dim is not None:
        bound = 1.0 / math.sqrt(hid_dim)
        kp1, kp2 = jax.random.split(k3)
        p['wp'] = _round_bf16(jax.random.uniform(
            kp1, (hid_dim, proj_dim), jnp.float32, -bound, bound))
        p['bp'] = jax.random.uniform(kp2, (proj_dim,), jnp.float32, -bound, bound)
    return p


def prep_cell_params(p, in_dim, hid_dim, num_matrices):
    """Reorder the PyTorch-shaped weights for the fused kernel.

    Torch weight rows are ordered f*M + m; the kernel concatenates the Chebyshev
    terms m-major on the lane axis, so rows are reordered to m*F + f and the
    matrix is kept flat (M*F, O) for the single deep matmul per conv."""
    F = in_dim + hid_dim
    M = num_matrices

    def reorder(w, out_dim):
        wf = w.reshape(F, M, out_dim)
        return jnp.transpose(wf, (1, 0, 2)).reshape(M * F, out_dim).astype(
            jnp.bfloat16)

    kp = {'wg': reorder(p['wg'], 2 * hid_dim),
          'bg': p['bg'].reshape(1, -1).astype(jnp.float32),
          'wc': reorder(p['wc'], hid_dim),
          'bc': p['bc'].reshape(1, -1).astype(jnp.float32)}
    if 'wp' in p:
        kp['wp'] = p['wp'].astype(jnp.bfloat16)
        kp['bp'] = p['bp'].reshape(1, -1).astype(jnp.float32)
    return kp


# ----------------------------------------------------------------------------
# Pure-JAX reference (direct transliteration of the PyTorch module, f32)
# ----------------------------------------------------------------------------
def _dgc_ref(x_flat, h_flat, supports, weight, bias, N, K, out_dim):
    B = x_flat.shape[0]
    x = jnp.concatenate([x_flat.reshape(B, N, -1), h_flat.reshape(B, N, -1)], 2)
    F = x.shape[2]
    x0 = jnp.transpose(x, (1, 2, 0)).reshape(N, F * B)
    xs = [x0]
    for s in range(supports.shape[0]):
        A = supports[s]
        x1 = A @ x0
        xs.append(x1)
        xk_2, xk_1 = x0, x1
        for _ in range(2, K + 1):
            x2 = 2.0 * (A @ xk_1) - xk_2
            xs.append(x2)
            xk_2, xk_1 = xk_1, x2
    M = len(xs)
    xc = jnp.stack(xs, 0).reshape(M, N, F, B)
    xc = jnp.transpose(xc, (3, 1, 2, 0)).reshape(B * N, F * M)
    out = xc @ weight + bias
    return out.reshape(B, N * out_dim)


def _cell_ref(x_flat, h_flat, p, supports, N, H, K, proj_dim):
    B = x_flat.shape[0]
    g = jax.nn.sigmoid(_dgc_ref(x_flat, h_flat, supports, p['wg'], p['bg'],
                                N, K, 2 * H))
    g = g.reshape(B, N, 2 * H)
    r = g[..., :H].reshape(B, N * H)
    u = g[..., H:].reshape(B, N * H)
    c = jnp.tanh(_dgc_ref(x_flat, r * h_flat, supports, p['wc'], p['bc'],
                          N, K, H))
    new_h = u * h_flat + (1.0 - u) * c
    if 'wp' in p:
        out = (new_h.reshape(B * N, H) @ p['wp'] + p['bp']).reshape(B, N * proj_dim)
    else:
        out = new_h
    return out, new_h


def dcgru_decoder_ref(inputs, init_hidden, layer_params, supports, *,
                      num_nodes, hid_dim, output_dim, max_diffusion_step,
                      teacher_force):
    seq, B = inputs.shape[0], inputs.shape[1]
    N = num_nodes
    inputs_flat = inputs.reshape(seq, B, -1)
    hidden = [init_hidden[l] for l in range(len(layer_params))]
    outputs = [jnp.zeros((B, N * output_dim), jnp.float32)]
    current_input = inputs_flat[0]
    for t in range(1, seq):
        new_hidden = []
        out = None
        for l, p in enumerate(layer_params):
            out, h_new = _cell_ref(current_input, hidden[l], p, supports,
                                   N, hid_dim, max_diffusion_step, output_dim)
            current_input = out
            new_hidden.append(h_new)
        hidden = new_hidden
        outputs.append(out)
        current_input = inputs_flat[t] if teacher_force[t - 1] else out
    return jnp.stack(outputs, axis=0)


# ----------------------------------------------------------------------------
# Test
# ----------------------------------------------------------------------------
if __name__ == "__main__":
    key = jax.random.PRNGKey(0)
    seq, B, N = 8, 8, 16
    input_dim = output_dim = 2           # decoder feeds its output back -> equal
    hid = 32
    K = 2                                # max_diffusion_step
    S = 2                                # dual random walk supports
    M = S * K + 1
    num_layers = 2
    batch_block = 4                      # grid=(2, seq-1): 2-way batch "parallel"

    k_adj, k_in, k_h, k_l0, k_l1 = jax.random.split(key, 5)

    # Dense row-stochastic supports (dual random walk), densified from sparse.
    adj = jax.random.uniform(k_adj, (N, N), jnp.float32)
    adj = adj * (adj > 0.5) + jnp.eye(N, dtype=jnp.float32)
    rw = lambda a: a / jnp.sum(a, axis=1, keepdims=True)
    supports = _round_bf16(jnp.stack([rw(adj), rw(adj.T)], axis=0))

    inputs = jax.random.normal(k_in, (seq, B, N, input_dim), jnp.float32)
    init_hidden = 0.3 * jax.random.normal(k_h, (num_layers, B, N * hid),
                                          jnp.float32)

    layer_params = [
        make_cell_params(k_l0, input_dim, hid, M, proj_dim=None),
        make_cell_params(k_l1, hid, hid, M, proj_dim=output_dim),
    ]
    layer_kparams = [prep_cell_params(p, d, hid, M)
                     for p, d in zip(layer_params, (input_dim, hid))]
    # Kernel needs projection params on the last layer (like the torch module).
    supports_bf16 = supports.astype(jnp.bfloat16)

    # Deterministic host-side teacher-forcing schedule (torch uses random.random()).
    random.seed(0)
    teacher_force = tuple(random.random() < 0.5 for _ in range(seq - 1))

    out = dcgru_decoder_pallas(
        inputs, init_hidden, layer_kparams, supports_bf16,
        num_nodes=N, hid_dim=hid, output_dim=output_dim,
        max_diffusion_step=K, teacher_force=teacher_force,
        batch_block=batch_block)
    out = jax.block_until_ready(out)

    ref = dcgru_decoder_ref(
        inputs, init_hidden, layer_params, supports,
        num_nodes=N, hid_dim=hid, output_dim=output_dim,
        max_diffusion_step=K, teacher_force=teacher_force)

    assert out.shape == (seq, B, N * output_dim)
    max_err = float(jnp.max(jnp.abs(out - ref)))
    assert jnp.allclose(out, ref, atol=3e-2, rtol=3e-2), \
        f"mismatch vs reference, max abs err={max_err}"
    print("KERNEL_OK")
</pallas_src>

<mosaic_0001>
module attributes {stable_mosaic.version = 11 : i64} {
  func.func @_dcgru_decoder_kernel(%arg0: i32, %arg1: i32, %arg2: memref<7xi32, #tpu.memory_space<smem>>, %arg3: memref<2x16x16xbf16, #tpu.memory_space<vmem>>, %arg4: memref<1x4x16x2xf32, #tpu.memory_space<vmem>>, %arg5: memref<2x4x16x32xf32, #tpu.memory_space<vmem>>, %arg6: memref<170x64xbf16, #tpu.memory_space<vmem>>, %arg7: memref<1x64xf32, #tpu.memory_space<vmem>>, %arg8: memref<170x32xbf16, #tpu.memory_space<vmem>>, %arg9: memref<1x32xf32, #tpu.memory_space<vmem>>, %arg10: memref<320x64xbf16, #tpu.memory_space<vmem>>, %arg11: memref<1x64xf32, #tpu.memory_space<vmem>>, %arg12: memref<320x32xbf16, #tpu.memory_space<vmem>>, %arg13: memref<1x32xf32, #tpu.memory_space<vmem>>, %arg14: memref<32x2xbf16, #tpu.memory_space<vmem>>, %arg15: memref<1x2xf32, #tpu.memory_space<vmem>>, %arg16: memref<1x4x16x2xf32, #tpu.memory_space<vmem>>, %arg17: memref<4x16x32xf32, #tpu.memory_space<vmem>>, %arg18: memref<4x16x32xf32, #tpu.memory_space<vmem>>, %arg19: memref<4x16x2xf32, #tpu.memory_space<vmem>>) attributes {dimension_semantics = [#tpu.dimension_semantics<parallel>, #tpu.dimension_semantics<arbitrary>], iteration_bounds = array<i64: 2, 7>, scalar_prefetch = 1 : i64, scratch_operands = 3 : i64, tpu.core_type = #tpu.core_type<tc>, window_params = [{pipeline_mode = #tpu.pipeline_mode<synchronous>, transform_indices = @transform_0, window_bounds = array<i64: 2, 16, 16>}, {transform_indices = @transform_1, window_bounds = array<i64: 1, 4, 16, 2>}, {transform_indices = @transform_2, window_bounds = array<i64: 2, 4, 16, 32>}, {pipeline_mode = #tpu.pipeline_mode<synchronous>, transform_indices = @transform_3, window_bounds = array<i64: 170, 64>}, {pipeline_mode = #tpu.pipeline_mode<synchronous>, transform_indices = @transform_4, window_bounds = array<i64: 1, 64>}, {pipeline_mode = #tpu.pipeline_mode<synchronous>, transform_indices = @transform_5, window_bounds = array<i64: 170, 32>}, {pipeline_mode = #tpu.pipeline_mode<synchronous>, transform_indices = @transform_6, window_bounds = array<i64: 1, 32>}, {pipeline_mode = #tpu.pipeline_mode<synchronous>, transform_indices = @transform_7, window_bounds = array<i64: 320, 64>}, {pipeline_mode = #tpu.pipeline_mode<synchronous>, transform_indices = @transform_8, window_bounds = array<i64: 1, 64>}, {pipeline_mode = #tpu.pipeline_mode<synchronous>, transform_indices = @transform_9, window_bounds = array<i64: 320, 32>}, {pipeline_mode = #tpu.pipeline_mode<synchronous>, transform_indices = @transform_10, window_bounds = array<i64: 1, 32>}, {pipeline_mode = #tpu.pipeline_mode<synchronous>, transform_indices = @transform_11, window_bounds = array<i64: 32, 2>}, {pipeline_mode = #tpu.pipeline_mode<synchronous>, transform_indices = @transform_12, window_bounds = array<i64: 1, 2>}, {transform_indices = @transform_13, window_bounds = array<i64: 1, 4, 16, 2>}]} {
    %c0_i32 = arith.constant 0 : i32
    %0 = arith.cmpi eq, %arg1, %c0_i32 : i32
    %1 = arith.extui %0 : i1 to i32
    %c0_i32_0 = arith.constant 0 : i32
    %2 = arith.cmpi ne, %1, %c0_i32_0 : i32
    scf.if %2 {
      %c0_81 = arith.constant 0 : index
      %c0_82 = arith.constant 0 : index
      %c0_83 = arith.constant 0 : index
      %c0_84 = arith.constant 0 : index
      %174 = vector.load %arg5[%c0_81, %c0_82, %c0_83, %c0_84] : memref<2x4x16x32xf32, #tpu.memory_space<vmem>>, vector<1x4x16x32xf32>
      %175 = vector.shape_cast %174 : vector<1x4x16x32xf32> to vector<4x16x32xf32>
      %c0_85 = arith.constant 0 : index
      %c0_86 = arith.constant 0 : index
      %c0_87 = arith.constant 0 : index
      %176 = vector.load %arg17[%c0_85, %c0_86, %c0_87] : memref<4x16x32xf32, #tpu.memory_space<vmem>>, vector<4x16x32xf32>
      tpu.vector_store %arg17[%c0_85, %c0_86, %c0_87], %175 {strides = array<i32>} : memref<4x16x32xf32, #tpu.memory_space<vmem>>, vector<4x16x32xf32>,
      %c1_88 = arith.constant 1 : index
      %c0_89 = arith.constant 0 : index
      %c0_90 = arith.constant 0 : index
      %c0_91 = arith.constant 0 : index
      %177 = vector.load %arg5[%c1_88, %c0_89, %c0_90, %c0_91] : memref<2x4x16x32xf32, #tpu.memory_space<vmem>>, vector<1x4x16x32xf32>
      %178 = vector.shape_cast %177 : vector<1x4x16x32xf32> to vector<4x16x32xf32>
      %c0_92 = arith.constant 0 : index
      %c0_93 = arith.constant 0 : index
      %c0_94 = arith.constant 0 : index
      %179 = vector.load %arg18[%c0_92, %c0_93, %c0_94] : memref<4x16x32xf32, #tpu.memory_space<vmem>>, vector<4x16x32xf32>
      tpu.vector_store %arg18[%c0_92, %c0_93, %c0_94], %178 {strides = array<i32>} : memref<4x16x32xf32, #tpu.memory_space<vmem>>, vector<4x16x32xf32>,
    } else {
    }
    %3 = arith.index_cast %arg1 : i32 to index
    %4 = memref.load %arg2[%3] : memref<7xi32, #tpu.memory_space<smem>>
    %c0_i32_1 = arith.constant 0 : i32
    %5 = arith.cmpi ne, %4, %c0_i32_1 : i32
    %6 = arith.extui %5 : i1 to i32
    %c0_i32_2 = arith.constant 0 : i32
    %7 = arith.cmpi ne, %6, %c0_i32_2 : i32
    scf.if %7 {
      %c0_81 = arith.constant 0 : index
      %c0_82 = arith.constant 0 : index
      %c0_83 = arith.constant 0 : index
      %c0_84 = arith.constant 0 : index
      %174 = vector.load %arg4[%c0_81, %c0_82, %c0_83, %c0_84] : memref<1x4x16x2xf32, #tpu.memory_space<vmem>>, vector<1x4x16x2xf32>
      %175 = vector.shape_cast %174 : vector<1x4x16x2xf32> to vector<4x16x2xf32>
      %c0_85 = arith.constant 0 : index
      %c0_86 = arith.constant 0 : index
      %c0_87 = arith.constant 0 : index
      %176 = vector.load %arg19[%c0_85, %c0_86, %c0_87] : memref<4x16x2xf32, #tpu.memory_space<vmem>>, vector<4x16x2xf32>
      tpu.vector_store %arg19[%c0_85, %c0_86, %c0_87], %175 {strides = array<i32>} : memref<4x16x2xf32, #tpu.memory_space<vmem>>, vector<4x16x2xf32>,
    } else {
    }
    %c0 = arith.constant 0 : index
    %c0_3 = arith.constant 0 : index
    %c0_4 = arith.constant 0 : index
    %8 = vector.load %arg3[%c0, %c0_3, %c0_4] : memref<2x16x16xbf16, #tpu.memory_space<vmem>>, vector<1x16x16xbf16>
    %9 = vector.shape_cast %8 : vector<1x16x16xbf16> to vector<16x16xbf16>
    %10 = vector.shape_cast %9 : vector<16x16xbf16> to vector<1x16x16xbf16>
    %11 = vector.broadcast %10 : vector<1x16x16xbf16> to vector<4x16x16xbf16>
    %c1 = arith.constant 1 : index
    %c0_5 = arith.constant 0 : index
    %c0_6 = arith.constant 0 : index
    %12 = vector.load %arg3[%c1, %c0_5, %c0_6] : memref<2x16x16xbf16, #tpu.memory_space<vmem>>, vector<1x16x16xbf16>
    %13 = vector.shape_cast %12 : vector<1x16x16xbf16> to vector<16x16xbf16>
    %14 = vector.shape_cast %13 : vector<16x16xbf16> to vector<1x16x16xbf16>
    %15 = vector.broadcast %14 : vector<1x16x16xbf16> to vector<4x16x16xbf16>
    %c0_7 = arith.constant 0 : index
    %c0_8 = arith.constant 0 : index
    %c0_9 = arith.constant 0 : index
    %16 = vector.load %arg19[%c0_7, %c0_8, %c0_9] : memref<4x16x2xf32, #tpu.memory_space<vmem>>, vector<4x16x2xf32>
    %c0_10 = arith.constant 0 : index
    %c0_11 = arith.constant 0 : index
    %c0_12 = arith.constant 0 : index
    %17 = vector.load %arg17[%c0_10, %c0_11, %c0_12] : memref<4x16x32xf32, #tpu.memory_space<vmem>>, vector<4x16x32xf32>
    %18 = vector.shape_cast %17 : vector<4x16x32xf32> to vector<64x32xf32>
    %19 = tpu.concatenate %16, %17 in 2 : vector<4x16x2xf32>, vector<4x16x32xf32> -> vector<4x16x34xf32>
    %20 = arith.truncf %19 : vector<4x16x34xf32> to vector<4x16x34xbf16>
    "tpu.trace_start"() <{level = 10 : i32, message = "bnm,bmc->bnc"}> : () -> ()
    %cst = arith.constant dense<0.000000e+00> : vector<4x16x34xf32>
    %21 = tpu.matmul %11, %20, %cst {dimension_numbers = #tpu.dot_dimension_numbers<[2], [1], [1], [2], [0, 0, 0, 1, 1, 2], [0], [0]>} : vector<4x16x16xbf16>, vector<4x16x34xbf16>, vector<4x16x34xf32> -> vector<4x16x34xf32>
    "tpu.trace_stop"() : () -> ()
    %22 = arith.truncf %21 : vector<4x16x34xf32> to vector<4x16x34xbf16>
    "tpu.trace_start"() <{level = 10 : i32, message = "bnm,bmc->bnc"}> : () -> ()
    %cst_13 = arith.constant dense<0.000000e+00> : vector<4x16x34xf32>
    %23 = tpu.matmul %11, %22, %cst_13 {dimension_numbers = #tpu.dot_dimension_numbers<[2], [1], [1], [2], [0, 0, 0, 1, 1, 2], [0], [0]>} : vector<4x16x16xbf16>, vector<4x16x34xbf16>, vector<4x16x34xf32> -> vector<4x16x34xf32>
    "tpu.trace_stop"() : () -> ()
    %cst_14 = arith.constant 2.000000e+00 : f32
    %24 = vector.broadcast %cst_14 : f32 to vector<4x16x34xf32>
    %25 = arith.mulf %24, %23 : vector<4x16x34xf32>
    %26 = arith.subf %25, %19 : vector<4x16x34xf32>
    %27 = arith.truncf %19 : vector<4x16x34xf32> to vector<4x16x34xbf16>
    "tpu.trace_start"() <{level = 10 : i32, message = "bnm,bmc->bnc"}> : () -> ()
    %cst_15 = arith.constant dense<0.000000e+00> : vector<4x16x34xf32>
    %28 = tpu.matmul %15, %27, %cst_15 {dimension_numbers = #tpu.dot_dimension_numbers<[2], [1], [1], [2], [0, 0, 0, 1, 1, 2], [0], [0]>} : vector<4x16x16xbf16>, vector<4x16x34xbf16>, vector<4x16x34xf32> -> vector<4x16x34xf32>
    "tpu.trace_stop"() : () -> ()
    %29 = arith.truncf %28 : vector<4x16x34xf32> to vector<4x16x34xbf16>
    "tpu.trace_start"() <{level = 10 : i32, message = "bnm,bmc->bnc"}> : () -> ()
    %cst_16 = arith.constant dense<0.000000e+00> : vector<4x16x34xf32>
    %30 = tpu.matmul %15, %29, %cst_16 {dimension_numbers = #tpu.dot_dimension_numbers<[2], [1], [1], [2], [0, 0, 0, 1, 1, 2], [0], [0]>} : vector<4x16x16xbf16>, vector<4x16x34xbf16>, vector<4x16x34xf32> -> vector<4x16x34xf32>
    "tpu.trace_stop"() : () -> ()
    %cst_17 = arith.constant 2.000000e+00 : f32
    %31 = vector.broadcast %cst_17 : f32 to vector<4x16x34xf32>
    %32 = arith.mulf %31, %30 : vector<4x16x34xf32>
    %33 = arith.subf %32, %19 : vector<4x16x34xf32>
    %34 = arith.truncf %19 : vector<4x16x34xf32> to vector<4x16x34xbf16>
    %35 = arith.truncf %21 : vector<4x16x34xf32> to vector<4x16x34xbf16>
    %36 = arith.truncf %26 : vector<4x16x34xf32> to vector<4x16x34xbf16>
    %37 = arith.truncf %28 : vector<4x16x34xf32> to vector<4x16x34xbf16>
    %38 = arith.truncf %33 : vector<4x16x34xf32> to vector<4x16x34xbf16>
    %39 = tpu.concatenate %34, %35, %36, %37, %38 in 2 : vector<4x16x34xbf16>, vector<4x16x34xbf16>, vector<4x16x34xbf16>, vector<4x16x34xbf16>, vector<4x16x34xbf16> -> vector<4x16x170xbf16>
    %40 = vector.shape_cast %39 : vector<4x16x170xbf16> to vector<64x170xbf16>
    %c0_18 = arith.constant 0 : index
    %c0_19 = arith.constant 0 : index
    %41 = vector.load %arg6[%c0_18, %c0_19] : memref<170x64xbf16, #tpu.memory_space<vmem>>, vector<170x64xbf16>
    %cst_20 = arith.constant dense<0.000000e+00> : vector<64x64xf32>
    %42 = tpu.matmul %40, %41, %cst_20 {dimension_numbers = #tpu.dot_dimension_numbers<[1], [0], [0], [1], [0, 0, 1, 1], [], []>} : vector<64x170xbf16>, vector<170x64xbf16>, vector<64x64xf32> -> vector<64x64xf32>
    %c0_21 = arith.constant 0 : index
    %c0_22 = arith.constant 0 : index
    %43 = vector.load %arg7[%c0_21, %c0_22] : memref<1x64xf32, #tpu.memory_space<vmem>>, vector<1x64xf32>
    %44 = vector.broadcast %43 : vector<1x64xf32> to vector<64x64xf32>
    %45 = arith.addf %42, %44 : vector<64x64xf32>
    %46 = arith.negf %45 : vector<64x64xf32>
    %47 = math.exp %46 : vector<64x64xf32>
    %cst_23 = arith.constant 1.000000e+00 : f32
    %48 = vector.broadcast %cst_23 : f32 to vector<64x64xf32>
    %49 = arith.addf %48, %47 : vector<64x64xf32>
    %50 = arith.divf %48, %49 : vector<64x64xf32>
    %51 = vector.extract_strided_slice %50 {offsets = [0, 0], sizes = [64, 32], strides = [1, 1]} : vector<64x64xf32> to vector<64x32xf32>
    %52 = vector.extract_strided_slice %50 {offsets = [0, 32], sizes = [64, 32], strides = [1, 1]} : vector<64x64xf32> to vector<64x32xf32>
    %53 = vector.shape_cast %51 : vector<64x32xf32> to vector<4x16x32xf32>
    %54 = arith.mulf %53, %17 : vector<4x16x32xf32>
    %55 = tpu.concatenate %16, %54 in 2 : vector<4x16x2xf32>, vector<4x16x32xf32> -> vector<4x16x34xf32>
    %56 = arith.truncf %55 : vector<4x16x34xf32> to vector<4x16x34xbf16>
    "tpu.trace_start"() <{level = 10 : i32, message = "bnm,bmc->bnc"}> : () -> ()
    %cst_24 = arith.constant dense<0.000000e+00> : vector<4x16x34xf32>
    %57 = tpu.matmul %11, %56, %cst_24 {dimension_numbers = #tpu.dot_dimension_numbers<[2], [1], [1], [2], [0, 0, 0, 1, 1, 2], [0], [0]>} : vector<4x16x16xbf16>, vector<4x16x34xbf16>, vector<4x16x34xf32> -> vector<4x16x34xf32>
    "tpu.trace_stop"() : () -> ()
    %58 = arith.truncf %57 : vector<4x16x34xf32> to vector<4x16x34xbf16>
    "tpu.trace_start"() <{level = 10 : i32, message = "bnm,bmc->bnc"}> : () -> ()
    %cst_25 = arith.constant dense<0.000000e+00> : vector<4x16x34xf32>
    %59 = tpu.matmul %11, %58, %cst_25 {dimension_numbers = #tpu.dot_dimension_numbers<[2], [1], [1], [2], [0, 0, 0, 1, 1, 2], [0], [0]>} : vector<4x16x16xbf16>, vector<4x16x34xbf16>, vector<4x16x34xf32> -> vector<4x16x34xf32>
    "tpu.trace_stop"() : () -> ()
    %cst_26 = arith.constant 2.000000e+00 : f32
    %60 = vector.broadcast %cst_26 : f32 to vector<4x16x34xf32>
    %61 = arith.mulf %60, %59 : vector<4x16x34xf32>
    %62 = arith.subf %61, %55 : vector<4x16x34xf32>
    %63 = arith.truncf %55 : vector<4x16x34xf32> to vector<4x16x34xbf16>
    "tpu.trace_start"() <{level = 10 : i32, message = "bnm,bmc->bnc"}> : () -> ()
    %cst_27 = arith.constant dense<0.000000e+00> : vector<4x16x34xf32>
    %64 = tpu.matmul %15, %63, %cst_27 {dimension_numbers = #tpu.dot_dimension_numbers<[2], [1], [1], [2], [0, 0, 0, 1, 1, 2], [0], [0]>} : vector<4x16x16xbf16>, vector<4x16x34xbf16>, vector<4x16x34xf32> -> vector<4x16x34xf32>
    "tpu.trace_stop"() : () -> ()
    %65 = arith.truncf %64 : vector<4x16x34xf32> to vector<4x16x34xbf16>
    "tpu.trace_start"() <{level = 10 : i32, message = "bnm,bmc->bnc"}> : () -> ()
    %cst_28 = arith.constant dense<0.000000e+00> : vector<4x16x34xf32>
    %66 = tpu.matmul %15, %65, %cst_28 {dimension_numbers = #tpu.dot_dimension_numbers<[2], [1], [1], [2], [0, 0, 0, 1, 1, 2], [0], [0]>} : vector<4x16x16xbf16>, vector<4x16x34xbf16>, vector<4x16x34xf32> -> vector<4x16x34xf32>
    "tpu.trace_stop"() : () -> ()
    %cst_29 = arith.constant 2.000000e+00 : f32
    %67 = vector.broadcast %cst_29 : f32 to vector<4x16x34xf32>
    %68 = arith.mulf %67, %66 : vector<4x16x34xf32>
    %69 = arith.subf %68, %55 : vector<4x16x34xf32>
    %70 = arith.truncf %55 : vector<4x16x34xf32> to vector<4x16x34xbf16>
    %71 = arith.truncf %57 : vector<4x16x34xf32> to vector<4x16x34xbf16>
    %72 = arith.truncf %62 : vector<4x16x34xf32> to vector<4x16x34xbf16>
    %73 = arith.truncf %64 : vector<4x16x34xf32> to vector<4x16x34xbf16>
    %74 = arith.truncf %69 : vector<4x16x34xf32> to vector<4x16x34xbf16>
    %75 = tpu.concatenate %70, %71, %72, %73, %74 in 2 : vector<4x16x34xbf16>, vector<4x16x34xbf16>, vector<4x16x34xbf16>, vector<4x16x34xbf16>, vector<4x16x34xbf16> -> vector<4x16x170xbf16>
    %76 = vector.shape_cast %75 : vector<4x16x170xbf16> to vector<64x170xbf16>
    %c0_30 = arith.constant 0 : index
    %c0_31 = arith.constant 0 : index
    %77 = vector.load %arg8[%c0_30, %c0_31] : memref<170x32xbf16, #tpu.memory_space<vmem>>, vector<170x32xbf16>
    %cst_32 = arith.constant dense<0.000000e+00> : vector<64x32xf32>
    %78 = tpu.matmul %76, %77, %cst_32 {dimension_numbers = #tpu.dot_dimension_numbers<[1], [0], [0], [1], [0, 0, 1, 1], [], []>} : vector<64x170xbf16>, vector<170x32xbf16>, vector<64x32xf32> -> vector<64x32xf32>
    %c0_33 = arith.constant 0 : index
    %c0_34 = arith.constant 0 : index
    %79 = vector.load %arg9[%c0_33, %c0_34] : memref<1x32xf32, #tpu.memory_space<vmem>>, vector<1x32xf32>
    %80 = vector.broadcast %79 : vector<1x32xf32> to vector<64x32xf32>
    %81 = arith.addf %78, %80 : vector<64x32xf32>
    %82 = math.tanh %81 : vector<64x32xf32>
    %83 = arith.mulf %52, %18 : vector<64x32xf32>
    %cst_35 = arith.constant 1.000000e+00 : f32
    %84 = vector.broadcast %cst_35 : f32 to vector<64x32xf32>
    %85 = arith.subf %84, %52 : vector<64x32xf32>
    %86 = arith.mulf %85, %82 : vector<64x32xf32>
    %87 = arith.addf %83, %86 : vector<64x32xf32>
    %88 = vector.shape_cast %87 : vector<64x32xf32> to vector<4x16x32xf32>
    %c0_36 = arith.constant 0 : index
    %c0_37 = arith.constant 0 : index
    %c0_38 = arith.constant 0 : index
    %89 = vector.load %arg17[%c0_36, %c0_37, %c0_38] : memref<4x16x32xf32, #tpu.memory_space<vmem>>, vector<4x16x32xf32>
    tpu.vector_store %arg17[%c0_36, %c0_37, %c0_38], %88 {strides = array<i32>} : memref<4x16x32xf32, #tpu.memory_space<vmem>>, vector<4x16x32xf32>,
    %90 = vector.shape_cast %87 : vector<64x32xf32> to vector<4x16x32xf32>
    %c0_39 = arith.constant 0 : index
    %c0_40 = arith.constant 0 : index
    %c0_41 = arith.constant 0 : index
    %91 = vector.load %arg18[%c0_39, %c0_40, %c0_41] : memref<4x16x32xf32, #tpu.memory_space<vmem>>, vector<4x16x32xf32>
    %92 = vector.shape_cast %91 : vector<4x16x32xf32> to vector<64x32xf32>
    %93 = tpu.concatenate %90, %91 in 2 : vector<4x16x32xf32>, vector<4x16x32xf32> -> vector<4x16x64xf32>
    %94 = arith.truncf %93 : vector<4x16x64xf32> to vector<4x16x64xbf16>
    "tpu.trace_start"() <{level = 10 : i32, message = "bnm,bmc->bnc"}> : () -> ()
    %cst_42 = arith.constant dense<0.000000e+00> : vector<4x16x64xf32>
    %95 = tpu.matmul %11, %94, %cst_42 {dimension_numbers = #tpu.dot_dimension_numbers<[2], [1], [1], [2], [0, 0, 0, 1, 1, 2], [0], [0]>} : vector<4x16x16xbf16>, vector<4x16x64xbf16>, vector<4x16x64xf32> -> vector<4x16x64xf32>
    "tpu.trace_stop"() : () -> ()
    %96 = arith.truncf %95 : vector<4x16x64xf32> to vector<4x16x64xbf16>
    "tpu.trace_start"() <{level = 10 : i32, message = "bnm,bmc->bnc"}> : () -> ()
    %cst_43 = arith.constant dense<0.000000e+00> : vector<4x16x64xf32>
    %97 = tpu.matmul %11, %96, %cst_43 {dimension_numbers = #tpu.dot_dimension_numbers<[2], [1], [1], [2], [0, 0, 0, 1, 1, 2], [0], [0]>} : vector<4x16x16xbf16>, vector<4x16x64xbf16>, vector<4x16x64xf32> -> vector<4x16x64xf32>
    "tpu.trace_stop"() : () -> ()
    %cst_44 = arith.constant 2.000000e+00 : f32
    %98 = vector.broadcast %cst_44 : f32 to vector<4x16x64xf32>
    %99 = arith.mulf %98, %97 : vector<4x16x64xf32>
    %100 = arith.subf %99, %93 : vector<4x16x64xf32>
    %101 = arith.truncf %93 : vector<4x16x64xf32> to vector<4x16x64xbf16>
    "tpu.trace_start"() <{level = 10 : i32, message = "bnm,bmc->bnc"}> : () -> ()
    %cst_45 = arith.constant dense<0.000000e+00> : vector<4x16x64xf32>
    %102 = tpu.matmul %15, %101, %cst_45 {dimension_numbers = #tpu.dot_dimension_numbers<[2], [1], [1], [2], [0, 0, 0, 1, 1, 2], [0], [0]>} : vector<4x16x16xbf16>, vector<4x16x64xbf16>, vector<4x16x64xf32> -> vector<4x16x64xf32>
    "tpu.trace_stop"() : () -> ()
    %103 = arith.truncf %102 : vector<4x16x64xf32> to vector<4x16x64xbf16>
    "tpu.trace_start"() <{level = 10 : i32, message = "bnm,bmc->bnc"}> : () -> ()
    %cst_46 = arith.constant dense<0.000000e+00> : vector<4x16x64xf32>
    %104 = tpu.matmul %15, %103, %cst_46 {dimension_numbers = #tpu.dot_dimension_numbers<[2], [1], [1], [2], [0, 0, 0, 1, 1, 2], [0], [0]>} : vector<4x16x16xbf16>, vector<4x16x64xbf16>, vector<4x16x64xf32> -> vector<4x16x64xf32>
    "tpu.trace_stop"() : () -> ()
    %cst_47 = arith.constant 2.000000e+00 : f32
    %105 = vector.broadcast %cst_47 : f32 to vector<4x16x64xf32>
    %106 = arith.mulf %105, %104 : vector<4x16x64xf32>
    %107 = arith.subf %106, %93 : vector<4x16x64xf32>
    %108 = arith.truncf %93 : vector<4x16x64xf32> to vector<4x16x64xbf16>
    %109 = arith.truncf %95 : vector<4x16x64xf32> to vector<4x16x64xbf16>
    %110 = arith.truncf %100 : vector<4x16x64xf32> to vector<4x16x64xbf16>
    %111 = arith.truncf %102 : vector<4x16x64xf32> to vector<4x16x64xbf16>
    %112 = arith.truncf %107 : vector<4x16x64xf32> to vector<4x16x64xbf16>
    %113 = tpu.concatenate %108, %109, %110, %111, %112 in 2 : vector<4x16x64xbf16>, vector<4x16x64xbf16>, vector<4x16x64xbf16>, vector<4x16x64xbf16>, vector<4x16x64xbf16> -> vector<4x16x320xbf16>
    %114 = vector.shape_cast %113 : vector<4x16x320xbf16> to vector<64x320xbf16>
    %c0_48 = arith.constant 0 : index
    %c0_49 = arith.constant 0 : index
    %115 = vector.load %arg10[%c0_48, %c0_49] : memref<320x64xbf16, #tpu.memory_space<vmem>>, vector<320x64xbf16>
    %cst_50 = arith.constant dense<0.000000e+00> : vector<64x64xf32>
    %116 = tpu.matmul %114, %115, %cst_50 {dimension_numbers = #tpu.dot_dimension_numbers<[1], [0], [0], [1], [0, 0, 1, 1], [], []>} : vector<64x320xbf16>, vector<320x64xbf16>, vector<64x64xf32> -> vector<64x64xf32>
    %c0_51 = arith.constant 0 : index
    %c0_52 = arith.constant 0 : index
    %117 = vector.load %arg11[%c0_51, %c0_52] : memref<1x64xf32, #tpu.memory_space<vmem>>, vector<1x64xf32>
    %118 = vector.broadcast %117 : vector<1x64xf32> to vector<64x64xf32>
    %119 = arith.addf %116, %118 : vector<64x64xf32>
    %120 = arith.negf %119 : vector<64x64xf32>
    %121 = math.exp %120 : vector<64x64xf32>
    %cst_53 = arith.constant 1.000000e+00 : f32
    %122 = vector.broadcast %cst_53 : f32 to vector<64x64xf32>
    %123 = arith.addf %122, %121 : vector<64x64xf32>
    %124 = arith.divf %122, %123 : vector<64x64xf32>
    %125 = vector.extract_strided_slice %124 {offsets = [0, 0], sizes = [64, 32], strides = [1, 1]} : vector<64x64xf32> to vector<64x32xf32>
    %126 = vector.extract_strided_slice %124 {offsets = [0, 32], sizes = [64, 32], strides = [1, 1]} : vector<64x64xf32> to vector<64x32xf32>
    %127 = vector.shape_cast %125 : vector<64x32xf32> to vector<4x16x32xf32>
    %128 = arith.mulf %127, %91 : vector<4x16x32xf32>
    %129 = tpu.concatenate %90, %128 in 2 : vector<4x16x32xf32>, vector<4x16x32xf32> -> vector<4x16x64xf32>
    %130 = arith.truncf %129 : vector<4x16x64xf32> to vector<4x16x64xbf16>
    "tpu.trace_start"() <{level = 10 : i32, message = "bnm,bmc->bnc"}> : () -> ()
    %cst_54 = arith.constant dense<0.000000e+00> : vector<4x16x64xf32>
    %131 = tpu.matmul %11, %130, %cst_54 {dimension_numbers = #tpu.dot_dimension_numbers<[2], [1], [1], [2], [0, 0, 0, 1, 1, 2], [0], [0]>} : vector<4x16x16xbf16>, vector<4x16x64xbf16>, vector<4x16x64xf32> -> vector<4x16x64xf32>
    "tpu.trace_stop"() : () -> ()
    %132 = arith.truncf %131 : vector<4x16x64xf32> to vector<4x16x64xbf16>
    "tpu.trace_start"() <{level = 10 : i32, message = "bnm,bmc->bnc"}> : () -> ()
    %cst_55 = arith.constant dense<0.000000e+00> : vector<4x16x64xf32>
    %133 = tpu.matmul %11, %132, %cst_55 {dimension_numbers = #tpu.dot_dimension_numbers<[2], [1], [1], [2], [0, 0, 0, 1, 1, 2], [0], [0]>} : vector<4x16x16xbf16>, vector<4x16x64xbf16>, vector<4x16x64xf32> -> vector<4x16x64xf32>
    "tpu.trace_stop"() : () -> ()
    %cst_56 = arith.constant 2.000000e+00 : f32
    %134 = vector.broadcast %cst_56 : f32 to vector<4x16x64xf32>
    %135 = arith.mulf %134, %133 : vector<4x16x64xf32>
    %136 = arith.subf %135, %129 : vector<4x16x64xf32>
    %137 = arith.truncf %129 : vector<4x16x64xf32> to vector<4x16x64xbf16>
    "tpu.trace_start"() <{level = 10 : i32, message = "bnm,bmc->bnc"}> : () -> ()
    %cst_57 = arith.constant dense<0.000000e+00> : vector<4x16x64xf32>
    %138 = tpu.matmul %15, %137, %cst_57 {dimension_numbers = #tpu.dot_dimension_numbers<[2], [1], [1], [2], [0, 0, 0, 1, 1, 2], [0], [0]>} : vector<4x16x16xbf16>, vector<4x16x64xbf16>, vector<4x16x64xf32> -> vector<4x16x64xf32>
    "tpu.trace_stop"() : () -> ()
    %139 = arith.truncf %138 : vector<4x16x64xf32> to vector<4x16x64xbf16>
    "tpu.trace_start"() <{level = 10 : i32, message = "bnm,bmc->bnc"}> : () -> ()
    %cst_58 = arith.constant dense<0.000000e+00> : vector<4x16x64xf32>
    %140 = tpu.matmul %15, %139, %cst_58 {dimension_numbers = #tpu.dot_dimension_numbers<[2], [1], [1], [2], [0, 0, 0, 1, 1, 2], [0], [0]>} : vector<4x16x16xbf16>, vector<4x16x64xbf16>, vector<4x16x64xf32> -> vector<4x16x64xf32>
    "tpu.trace_stop"() : () -> ()
    %cst_59 = arith.constant 2.000000e+00 : f32
    %141 = vector.broadcast %cst_59 : f32 to vector<4x16x64xf32>
    %142 = arith.mulf %141, %140 : vector<4x16x64xf32>
    %143 = arith.subf %142, %129 : vector<4x16x64xf32>
    %144 = arith.truncf %129 : vector<4x16x64xf32> to vector<4x16x64xbf16>
    %145 = arith.truncf %131 : vector<4x16x64xf32> to vector<4x16x64xbf16>
    %146 = arith.truncf %136 : vector<4x16x64xf32> to vector<4x16x64xbf16>
    %147 = arith.truncf %138 : vector<4x16x64xf32> to vector<4x16x64xbf16>
    %148 = arith.truncf %143 : vector<4x16x64xf32> to vector<4x16x64xbf16>
    %149 = tpu.concatenate %144, %145, %146, %147, %148 in 2 : vector<4x16x64xbf16>, vector<4x16x64xbf16>, vector<4x16x64xbf16>, vector<4x16x64xbf16>, vector<4x16x64xbf16> -> vector<4x16x320xbf16>
    %150 = vector.shape_cast %149 : vector<4x16x320xbf16> to vector<64x320xbf16>
    %c0_60 = arith.constant 0 : index
    %c0_61 = arith.constant 0 : index
    %151 = vector.load %arg12[%c0_60, %c0_61] : memref<320x32xbf16, #tpu.memory_space<vmem>>, vector<320x32xbf16>
    %cst_62 = arith.constant dense<0.000000e+00> : vector<64x32xf32>
    %152 = tpu.matmul %150, %151, %cst_62 {dimension_numbers = #tpu.dot_dimension_numbers<[1], [0], [0], [1], [0, 0, 1, 1], [], []>} : vector<64x320xbf16>, vector<320x32xbf16>, vector<64x32xf32> -> vector<64x32xf32>
    %c0_63 = arith.constant 0 : index
    %c0_64 = arith.constant 0 : index
    %153 = vector.load %arg13[%c0_63, %c0_64] : memref<1x32xf32, #tpu.memory_space<vmem>>, vector<1x32xf32>
    %154 = vector.broadcast %153 : vector<1x32xf32> to vector<64x32xf32>
    %155 = arith.addf %152, %154 : vector<64x32xf32>
    %156 = math.tanh %155 : vector<64x32xf32>
    %157 = arith.mulf %126, %92 : vector<64x32xf32>
    %cst_65 = arith.constant 1.000000e+00 : f32
    %158 = vector.broadcast %cst_65 : f32 to vector<64x32xf32>
    %159 = arith.subf %158, %126 : vector<64x32xf32>
    %160 = arith.mulf %159, %156 : vector<64x32xf32>
    %161 = arith.addf %157, %160 : vector<64x32xf32>
    %162 = vector.shape_cast %161 : vector<64x32xf32> to vector<4x16x32xf32>
    %c0_66 = arith.constant 0 : index
    %c0_67 = arith.constant 0 : index
    %c0_68 = arith.constant 0 : index
    %163 = vector.load %arg18[%c0_66, %c0_67, %c0_68] : memref<4x16x32xf32, #tpu.memory_space<vmem>>, vector<4x16x32xf32>
    tpu.vector_store %arg18[%c0_66, %c0_67, %c0_68], %162 {strides = array<i32>} : memref<4x16x32xf32, #tpu.memory_space<vmem>>, vector<4x16x32xf32>,
    %164 = arith.truncf %161 : vector<64x32xf32> to vector<64x32xbf16>
    %c0_69 = arith.constant 0 : index
    %c0_70 = arith.constant 0 : index
    %165 = vector.load %arg14[%c0_69, %c0_70] : memref<32x2xbf16, #tpu.memory_space<vmem>>, vector<32x2xbf16>
    %cst_71 = arith.constant dense<0.000000e+00> : vector<64x2xf32>
    %166 = tpu.matmul %164, %165, %cst_71 {dimension_numbers = #tpu.dot_dimension_numbers<[1], [0], [0], [1], [0, 0, 1, 1], [], []>} : vector<64x32xbf16>, vector<32x2xbf16>, vector<64x2xf32> -> vector<64x2xf32>
    %c0_72 = arith.constant 0 : index
    %c0_73 = arith.constant 0 : index
    %167 = vector.load %arg15[%c0_72, %c0_73] : memref<1x2xf32, #tpu.memory_space<vmem>>, vector<1x2xf32>
    %168 = vector.broadcast %167 : vector<1x2xf32> to vector<64x2xf32>
    %169 = arith.addf %166, %168 : vector<64x2xf32>
    %170 = vector.shape_cast %169 : vector<64x2xf32> to vector<4x16x2xf32>
    %c0_74 = arith.constant 0 : index
    %c0_75 = arith.constant 0 : index
    %c0_76 = arith.constant 0 : index
    %171 = vector.load %arg19[%c0_74, %c0_75, %c0_76] : memref<4x16x2xf32, #tpu.memory_space<vmem>>, vector<4x16x2xf32>
    tpu.vector_store %arg19[%c0_74, %c0_75, %c0_76], %170 {strides = array<i32>} : memref<4x16x2xf32, #tpu.memory_space<vmem>>, vector<4x16x2xf32>,
    %172 = vector.shape_cast %169 : vector<64x2xf32> to vector<1x4x16x2xf32>
    %c0_77 = arith.constant 0 : index
    %c0_78 = arith.constant 0 : index
    %c0_79 = arith.constant 0 : index
    %c0_80 = arith.constant 0 : index
    %173 = vector.load %arg16[%c0_77, %c0_78, %c0_79, %c0_80] : memref<1x4x16x2xf32, #tpu.memory_space<vmem>>, vector<1x4x16x2xf32>
    tpu.vector_store %arg16[%c0_77, %c0_78, %c0_79, %c0_80], %172 {strides = array<i32>} : memref<1x4x16x2xf32, #tpu.memory_space<vmem>>, vector<1x4x16x2xf32>,
    return
  }
  func.func @transform_0(%arg0: i32, %arg1: i32, %arg2: memref<7xi32, #tpu.memory_space<smem>>) -> (i32, i32, i32) {
    %c0_i32 = arith.constant 0 : i32
    %c0_i32_0 = arith.constant 0 : i32
    %c0_i32_1 = arith.constant 0 : i32
    %c0_i32_2 = arith.constant 0 : i32
    return %c0_i32, %c0_i32_0, %c0_i32_1 : i32, i32, i32
  }
  func.func @transform_1(%arg0: i32, %arg1: i32, %arg2: memref<7xi32, #tpu.memory_space<smem>>) -> (i32, i32, i32, i32) {
    %c0_i32 = arith.constant 0 : i32
    %c0_i32_0 = arith.constant 0 : i32
    %c0_i32_1 = arith.constant 0 : i32
    return %arg1, %arg0, %c0_i32, %c0_i32_0 : i32, i32, i32, i32
  }
  func.func @transform_2(%arg0: i32, %arg1: i32, %arg2: memref<7xi32, #tpu.memory_space<smem>>) -> (i32, i32, i32, i32) {
    %c0_i32 = arith.constant 0 : i32
    %c0_i32_0 = arith.constant 0 : i32
    %c0_i32_1 = arith.constant 0 : i32
    %c0_i32_2 = arith.constant 0 : i32
    return %c0_i32, %arg0, %c0_i32_0, %c0_i32_1 : i32, i32, i32, i32
  }
  func.func @transform_3(%arg0: i32, %arg1: i32, %arg2: memref<7xi32, #tpu.memory_space<smem>>) -> (i32, i32) {
    %c0_i32 = arith.constant 0 : i32
    %c0_i32_0 = arith.constant 0 : i32
    %c0_i32_1 = arith.constant 0 : i32
    return %c0_i32, %c0_i32_0 : i32, i32
  }
  func.func @transform_4(%arg0: i32, %arg1: i32, %arg2: memref<7xi32, #tpu.memory_space<smem>>) -> (i32, i32) {
    %c0_i32 = arith.constant 0 : i32
    %c0_i32_0 = arith.constant 0 : i32
    %c0_i32_1 = arith.constant 0 : i32
    return %c0_i32, %c0_i32_0 : i32, i32
  }
  func.func @transform_5(%arg0: i32, %arg1: i32, %arg2: memref<7xi32, #tpu.memory_space<smem>>) -> (i32, i32) {
    %c0_i32 = arith.constant 0 : i32
    %c0_i32_0 = arith.constant 0 : i32
    %c0_i32_1 = arith.constant 0 : i32
    return %c0_i32, %c0_i32_0 : i32, i32
  }
  func.func @transform_6(%arg0: i32, %arg1: i32, %arg2: memref<7xi32, #tpu.memory_space<smem>>) -> (i32, i32) {
    %c0_i32 = arith.constant 0 : i32
    %c0_i32_0 = arith.constant 0 : i32
    %c0_i32_1 = arith.constant 0 : i32
    return %c0_i32, %c0_i32_0 : i32, i32
  }
  func.func @transform_7(%arg0: i32, %arg1: i32, %arg2: memref<7xi32, #tpu.memory_space<smem>>) -> (i32, i32) {
    %c0_i32 = arith.constant 0 : i32
    %c0_i32_0 = arith.constant 0 : i32
    %c0_i32_1 = arith.constant 0 : i32
    return %c0_i32, %c0_i32_0 : i32, i32
  }
  func.func @transform_8(%arg0: i32, %arg1: i32, %arg2: memref<7xi32, #tpu.memory_space<smem>>) -> (i32, i32) {
    %c0_i32 = arith.constant 0 : i32
    %c0_i32_0 = arith.constant 0 : i32
    %c0_i32_1 = arith.constant 0 : i32
    return %c0_i32, %c0_i32_0 : i32, i32
  }
  func.func @transform_9(%arg0: i32, %arg1: i32, %arg2: memref<7xi32, #tpu.memory_space<smem>>) -> (i32, i32) {
    %c0_i32 = arith.constant 0 : i32
    %c0_i32_0 = arith.constant 0 : i32
    %c0_i32_1 = arith.constant 0 : i32
    return %c0_i32, %c0_i32_0 : i32, i32
  }
  func.func @transform_10(%arg0: i32, %arg1: i32, %arg2: memref<7xi32, #tpu.memory_space<smem>>) -> (i32, i32) {
    %c0_i32 = arith.constant 0 : i32
    %c0_i32_0 = arith.constant 0 : i32
    %c0_i32_1 = arith.constant 0 : i32
    return %c0_i32, %c0_i32_0 : i32, i32
  }
  func.func @transform_11(%arg0: i32, %arg1: i32, %arg2: memref<7xi32, #tpu.memory_space<smem>>) -> (i32, i32) {
    %c0_i32 = arith.constant 0 : i32
    %c0_i32_0 = arith.constant 0 : i32
    %c0_i32_1 = arith.constant 0 : i32
    return %c0_i32, %c0_i32_0 : i32, i32
  }
  func.func @transform_12(%arg0: i32, %arg1: i32, %arg2: memref<7xi32, #tpu.memory_space<smem>>) -> (i32, i32) {
    %c0_i32 = arith.constant 0 : i32
    %c0_i32_0 = arith.constant 0 : i32
    %c0_i32_1 = arith.constant 0 : i32
    return %c0_i32, %c0_i32_0 : i32, i32
  }
  func.func @transform_13(%arg0: i32, %arg1: i32, %arg2: memref<7xi32, #tpu.memory_space<smem>>) -> (i32, i32, i32, i32) {
    %c0_i32 = arith.constant 0 : i32
    %c0_i32_0 = arith.constant 0 : i32
    %c0_i32_1 = arith.constant 0 : i32
    return %arg1, %arg0, %c0_i32, %c0_i32_0 : i32, i32, i32, i32
  }
}

</mosaic_0001>

<llo_original>
// kernel: tpu_custom_call.1
$region0: #{tpu_custom_call.1}
  #allocation0 [shape = 'u32[]', space=smem, size = 0x4, offset = 0x4, fixed_abs, tag = 'smem constant byte address 0x4 - core index']
  #allocation1 [shape = 'u32[144,128]{1,0:T(1,128)}', space=vmem, size = 0x12000, scoped, tag = 'internal scratch']
  #allocation2 [shape = 'f32[4,16,32]{2,1,0:T(8,128)}', space=vmem, size = 0x8000, scoped, tag = 'scratch operand']
  #allocation3 [shape = 'f32[4,16,32]{2,1,0:T(8,128)}', space=vmem, size = 0x8000, scoped, tag = 'scratch operand']
  #allocation4 [shape = 'f32[4,16,2]{2,1,0:T(8,128)}', space=vmem, size = 0x8000, scoped, tag = 'scratch operand']
  #allocation5 [shape = 's32[1]{0}', space=sflag, size = 0x4, scoped, tag = 'scoped memory for tpu_custom_call.1']
  #allocation6 [shape = 'u8[512]{0}', space=smem, size = 0x200, scoped, tag = 'prefetched SMEM operand 0']
  %s0 = inlined_call_operand.vmem [shape: s32[7], index: 0, kind: input, shape index: {}]
  %s1 = inlined_call_operand.vmem [shape: bf16[2,16,16], index: 1, kind: input, shape index: {}]
  %s2 = inlined_call_operand.vmem [shape: f32[8,8,16,2], index: 2, kind: input, shape index: {}]
  %s3 = inlined_call_operand.vmem [shape: f32[2,8,16,32], index: 3, kind: input, shape index: {}]
  %s4 = inlined_call_operand.vmem [shape: bf16[170,64], index: 4, kind: input, shape index: {}]
  %s5 = inlined_call_operand.vmem [shape: f32[1,64], index: 5, kind: input, shape index: {}]
  %s6 = inlined_call_operand.vmem [shape: bf16[170,32], index: 6, kind: input, shape index: {}]
  %s7 = inlined_call_operand.vmem [shape: f32[1,32], index: 7, kind: input, shape index: {}]
  %s8 = inlined_call_operand.vmem [shape: bf16[320,64], index: 8, kind: input, shape index: {}]
  %s9 = inlined_call_operand.vmem [shape: f32[1,64], index: 9, kind: input, shape index: {}]
  %s10 = inlined_call_operand.vmem [shape: bf16[320,32], index: 10, kind: input, shape index: {}]
  %s11 = inlined_call_operand.vmem [shape: f32[1,32], index: 11, kind: input, shape index: {}]
  %s12 = inlined_call_operand.vmem [shape: bf16[32,2], index: 12, kind: input, shape index: {}]
  %s13 = inlined_call_operand.vmem [shape: f32[1,2], index: 13, kind: input, shape index: {}]
  %s14 = inlined_call_operand.vmem [shape: f32[7,8,16,2], index: 14, kind: output, shape index: {}]
  %s15 = sld [smem:[#allocation0]]
  $region131: #{tpu_custom_call.1} parent=0
    _
  %s17 = ssub.s32 1, %s15
  %s18 = scalar_select 0, %s17, %s15
  %s19 = sshll.u32 %s0, 4
  %s20 = int_to_ptr.vmem [resolvable:$true] %s19
  %22 = dma.vmem_to_smem %s20, 16, [#allocation6], [#allocation5]
  %23 = dma.done [#allocation5], 16
  %24 = sfence
  $region1: #{tpu_custom_call.1} parent=0
    #allocation7 [shape = 'u8[131072]{0}', space=vmem, size = 0x20000, scoped, tag = 'input window, operand 3']
    loop: start=0, step=1, limit=16
    $region2: #{tpu_custom_call.1} parent=1 // loop_pre_header
      _
    $region3: #{tpu_custom_call.1} parent=1 // loop_header
      %s26 = sphi 0, %s30
      %p27 = scmp.ge.s32.totalorder %s26, 16
      %s33 = sphi 0, %s45
      %s34 = sphi 0, %s41
      %s35 = sphi 0, %s33
      %s36 = sphi 0, %s34
      %s37 = sphi 0, %s35
      %s38 = sphi 0, %s36
      %s46 = sphi 0, %s46
      %s48 = sphi 0, %s46
      %s49 = sphi 0, %s48
      %s63 = sphi 0, %s49
      %s71 = sphi 0, %s73
      %s74 = sphi 0, %s71
      %s75 = sphi 0, %s74
      %s91 = sphi 0, %s75
      %s97 = sphi 0, %s99
      %s100 = sphi 0, %s97
      %s101 = sphi 0, %s100
      %s117 = sphi 0, %s101
      %s121 = sphi 0, %s121
      %s123 = sphi 0, %s121
      %s124 = sphi 0, %s123
      %s138 = sphi 0, %s124
      %s142 = sphi 0, %s142
      %s144 = sphi 0, %s142
      %s145 = sphi 0, %s144
      %s159 = sphi 0, %s145
      %s163 = sphi 0, %s163
      %s165 = sphi 0, %s163
      %s166 = sphi 0, %s165
      %s180 = sphi 0, %s166
      %s184 = sphi 0, %s184
      %s186 = sphi 0, %s184
      %s187 = sphi 0, %s186
      %s201 = sphi 0, %s187
      %s205 = sphi 0, %s205
      %s207 = sphi 0, %s205
      %s208 = sphi 0, %s207
      %s222 = sphi 0, %s208
      %s226 = sphi 0, %s226
      %s228 = sphi 0, %s226
      %s229 = sphi 0, %s228
      %s243 = sphi 0, %s229
      %s247 = sphi 0, %s247
      %s249 = sphi 0, %s247
      %s250 = sphi 0, %s249
      %s264 = sphi 0, %s250
      %s268 = sphi 0, %s268
      %s270 = sphi 0, %s268
      %s271 = sphi 0, %s270
      %s285 = sphi 0, %s271
      %s289 = sphi 0, %s289
      %s291 = sphi 0, %s289
      %s292 = sphi 0, %s291
      %s306 = sphi 0, %s292
      %s310 = sphi 0, %s310
      %s312 = sphi 0, %s310
      %s313 = sphi 0, %s312
      %s327 = sphi 0, %s313
      %s335 = sphi 0, %s337
      %s338 = sphi 0, %s335
      %s339 = sphi 0, %s338
      %s355 = sphi 0, %s339
    $region4: #{tpu_custom_call.1} parent=1 // loop_header_branch
      %29 = sbr.rel (%p27) target = $region8
    $region5: #{tpu_custom_call.1} parent=1 // loop_body
      %s31 = ssub.s32 %s26, 1
      %s32 = ssub.s32 %s26, 2
      %s39 = sadd.s32 1, %s34
      %p40 = scmp.ge.s32.totalorder %s39, 7
      %s41 = scalar_select %p40, 0, %s39
      %s42 = sadd.s32 1, %s33
      %s43 = scalar_select %p40, %s42, %s33
      %p44 = scmp.ge.s32.totalorder %s43, 2
      %s45 = scalar_select %p44, 0, %s43
      %s47 = sadd.s32 %s46, 1
      %p50 = scmp.eq.s32.totalorder %s26, 13
      %p51 = scmp.ne.s32.totalorder %s46, %s48
      %p52 = scmp.eq.s32.totalorder %s26, 0
      %p53 = por %p51, %p52
      %p54 = scmp.ne.s32.totalorder %s46, %s48
      %p55 = scmp.eq.s32.totalorder %s31, 13
      %p56 = por %p54, %p55
      %p57 = scmp.ne.s32.totalorder %s48, %s49
      %p58 = scmp.eq.s32.totalorder %s31, 0
      %p59 = por %p57, %p58
      %p60 = scmp.ne.s32.totalorder %s48, %s49
      %p61 = scmp.eq.s32.totalorder %s32, 13
      %p62 = por %p60, %p61
      %p64 = scmp.ne.s32.totalorder %s49, %s63
      %p65 = scmp.eq.s32.totalorder %s32, 0
      %p66 = por %p64, %p65
      %s67 = ssub.s32 %s34, %s41
      %s68 = ssub.s32 %s33, %s45
      %s69 = sor.u32 %s67, %s68
      %p70 = scmp.eq.s32.totalorder %s69, 0
      %s72 = sadd.s32 %s71, 1
      %s73 = scalar_select %p70, %s71, %s72
      %p76 = pneg %p70
      %p77 = scmp.eq.s32.totalorder %s26, 13
      %p78 = por %p76, %p77
      %p79 = scmp.ne.s32.totalorder %s71, %s74
      %p80 = scmp.eq.s32.totalorder %s26, 0
      %p81 = por %p79, %p80
      %p82 = scmp.ne.s32.totalorder %s71, %s74
      %p83 = scmp.eq.s32.totalorder %s31, 13
      %p84 = por %p82, %p83
      %p85 = scmp.ne.s32.totalorder %s74, %s75
      %p86 = scmp.eq.s32.totalorder %s31, 0
      %p87 = por %p85, %p86
      %p88 = scmp.ne.s32.totalorder %s74, %s75
      %p89 = scmp.eq.s32.totalorder %s32, 13
      %p90 = por %p88, %p89
      %p92 = scmp.ne.s32.totalorder %s75, %s91
      %p93 = scmp.eq.s32.totalorder %s32, 0
      %p94 = por %p92, %p93
      %s95 = ssub.s32 %s33, %s45
      %p96 = scmp.eq.s32.totalorder %s95, 0
      %s98 = sadd.s32 %s97, 1
      %s99 = scalar_select %p96, %s97, %s98
      %p102 = pneg %p96
      %p103 = scmp.eq.s32.totalorder %s26, 13
      %p104 = por %p102, %p103
      %p105 = scmp.ne.s32.totalorder %s97, %s100
      %p106 = scmp.eq.s32.totalorder %s26, 0
      %p107 = por %p105, %p106
      %p108 = scmp.ne.s32.totalorder %s97, %s100
      %p109 = scmp.eq.s32.totalorder %s31, 13
      %p110 = por %p108, %p109
      %p111 = scmp.ne.s32.totalorder %s100, %s101
      %p112 = scmp.eq.s32.totalorder %s31, 0
      %p113 = por %p111, %p112
      %p114 = scmp.ne.s32.totalorder %s100, %s101
      %p115 = scmp.eq.s32.totalorder %s32, 13
      %p116 = por %p114, %p115
      %p118 = scmp.ne.s32.totalorder %s101, %s117
      %p119 = scmp.eq.s32.totalorder %s32, 0
      %p120 = por %p118, %p119
      %s122 = sadd.s32 %s121, 1
      %p125 = scmp.eq.s32.totalorder %s26, 13
      %p126 = scmp.ne.s32.totalorder %s121, %s123
      %p127 = scmp.eq.s32.totalorder %s26, 0
      %p128 = por %p126, %p127
      %p129 = scmp.ne.s32.totalorder %s121, %s123
      %p130 = scmp.eq.s32.totalorder %s31, 13
      %p131 = por %p129, %p130
      %p132 = scmp.ne.s32.totalorder %s123, %s124
      %p133 = scmp.eq.s32.totalorder %s31, 0
      %p134 = por %p132, %p133
      %p135 = scmp.ne.s32.totalorder %s123, %s124
      %p136 = scmp.eq.s32.totalorder %s32, 13
      %p137 = por %p135, %p136
      %p139 = scmp.ne.s32.totalorder %s124, %s138
      %p140 = scmp.eq.s32.totalorder %s32, 0
      %p141 = por %p139, %p140
      %s143 = sadd.s32 %s142, 1
      %p146 = scmp.eq.s32.totalorder %s26, 13
      %p147 = scmp.ne.s32.totalorder %s142, %s144
      %p148 = scmp.eq.s32.totalorder %s26, 0
      %p149 = por %p147, %p148
      %p150 = scmp.ne.s32.totalorder %s142, %s144
      %p151 = scmp.eq.s32.totalorder %s31, 13
      %p152 = por %p150, %p151
      %p153 = scmp.ne.s32.totalorder %s144, %s145
      %p154 = scmp.eq.s32.totalorder %s31, 0
      %p155 = por %p153, %p154
      %p156 = scmp.ne.s32.totalorder %s144, %s145
      %p157 = scmp.eq.s32.totalorder %s32, 13
      %p158 = por %p156, %p157
      %p160 = scmp.ne.s32.totalorder %s145, %s159
      %p161 = scmp.eq.s32.totalorder %s32, 0
      %p162 = por %p160, %p161
      %s164 = sadd.s32 %s163, 1
      %p167 = scmp.eq.s32.totalorder %s26, 13
      %p168 = scmp.ne.s32.totalorder %s163, %s165
      %p169 = scmp.eq.s32.totalorder %s26, 0
      %p170 = por %p168, %p169
      %p171 = scmp.ne.s32.totalorder %s163, %s165
      %p172 = scmp.eq.s32.totalorder %s31, 13
      %p173 = por %p171, %p172
      %p174 = scmp.ne.s32.totalorder %s165, %s166
      %p175 = scmp.eq.s32.totalorder %s31, 0
      %p176 = por %p174, %p175
      %p177 = scmp.ne.s32.totalorder %s165, %s166
      %p178 = scmp.eq.s32.totalorder %s32, 13
      %p179 = por %p177, %p178
      %p181 = scmp.ne.s32.totalorder %s166, %s180
      %p182 = scmp.eq.s32.totalorder %s32, 0
      %p183 = por %p181, %p182
      %s185 = sadd.s32 %s184, 1
      %p188 = scmp.eq.s32.totalorder %s26, 13
      %p189 = scmp.ne.s32.totalorder %s184, %s186
      %p190 = scmp.eq.s32.totalorder %s26, 0
      %p191 = por %p189, %p190
      %p192 = scmp.ne.s32.totalorder %s184, %s186
      %p193 = scmp.eq.s32.totalorder %s31, 13
      %p194 = por %p192, %p193
      %p195 = scmp.ne.s32.totalorder %s186, %s187
      %p196 = scmp.eq.s32.totalorder %s31, 0
      %p197 = por %p195, %p196
      %p198 = scmp.ne.s32.totalorder %s186, %s187
      %p199 = scmp.eq.s32.totalorder %s32, 13
      %p200 = por %p198, %p199
      %p202 = scmp.ne.s32.totalorder %s187, %s201
      %p203 = scmp.eq.s32.totalorder %s32, 0
      %p204 = por %p202, %p203
      %s206 = sadd.s32 %s205, 1
      %p209 = scmp.eq.s32.totalorder %s26, 13
      %p210 = scmp.ne.s32.totalorder %s205, %s207
      %p211 = scmp.eq.s32.totalorder %s26, 0
      %p212 = por %p210, %p211
      %p213 = scmp.ne.s32.totalorder %s205, %s207
      %p214 = scmp.eq.s32.totalorder %s31, 13
      %p215 = por %p213, %p214
      %p216 = scmp.ne.s32.totalorder %s207, %s208
      %p217 = scmp.eq.s32.totalorder %s31, 0
      %p218 = por %p216, %p217
      %p219 = scmp.ne.s32.totalorder %s207, %s208
      %p220 = scmp.eq.s32.totalorder %s32, 13
      %p221 = por %p219, %p220
      %p223 = scmp.ne.s32.totalorder %s208, %s222
      %p224 = scmp.eq.s32.totalorder %s32, 0
      %p225 = por %p223, %p224
      %s227 = sadd.s32 %s226, 1
      %p230 = scmp.eq.s32.totalorder %s26, 13
      %p231 = scmp.ne.s32.totalorder %s226, %s228
      %p232 = scmp.eq.s32.totalorder %s26, 0
      %p233 = por %p231, %p232
      %p234 = scmp.ne.s32.totalorder %s226, %s228
      %p235 = scmp.eq.s32.totalorder %s31, 13
      %p236 = por %p234, %p235
      %p237 = scmp.ne.s32.totalorder %s228, %s229
      %p238 = scmp.eq.s32.totalorder %s31, 0
      %p239 = por %p237, %p238
      %p240 = scmp.ne.s32.totalorder %s228, %s229
      %p241 = scmp.eq.s32.totalorder %s32, 13
      %p242 = por %p240, %p241
      %p244 = scmp.ne.s32.totalorder %s229, %s243
      %p245 = scmp.eq.s32.totalorder %s32, 0
      %p246 = por %p244, %p245
      %s248 = sadd.s32 %s247, 1
      %p251 = scmp.eq.s32.totalorder %s26, 13
      %p252 = scmp.ne.s32.totalorder %s247, %s249
      %p253 = scmp.eq.s32.totalorder %s26, 0
      %p254 = por %p252, %p253
      %p255 = scmp.ne.s32.totalorder %s247, %s249
      %p256 = scmp.eq.s32.totalorder %s31, 13
      %p257 = por %p255, %p256
      %p258 = scmp.ne.s32.totalorder %s249, %s250
      %p259 = scmp.eq.s32.totalorder %s31, 0
      %p260 = por %p258, %p259
      %p261 = scmp.ne.s32.totalorder %s249, %s250
      %p262 = scmp.eq.s32.totalorder %s32, 13
      %p263 = por %p261, %p262
      %p265 = scmp.ne.s32.totalorder %s250, %s264
      %p266 = scmp.eq.s32.totalorder %s32, 0
      %p267 = por %p265, %p266
      %s269 = sadd.s32 %s268, 1
      %p272 = scmp.eq.s32.totalorder %s26, 13
      %p273 = scmp.ne.s32.totalorder %s268, %s270
      %p274 = scmp.eq.s32.totalorder %s26, 0
      %p275 = por %p273, %p274
      %p276 = scmp.ne.s32.totalorder %s268, %s270
      %p277 = scmp.eq.s32.totalorder %s31, 13
      %p278 = por %p276, %p277
      %p279 = scmp.ne.s32.totalorder %s270, %s271
      %p280 = scmp.eq.s32.totalorder %s31, 0
      %p281 = por %p279, %p280
      %p282 = scmp.ne.s32.totalorder %s270, %s271
      %p283 = scmp.eq.s32.totalorder %s32, 13
      %p284 = por %p282, %p283
      %p286 = scmp.ne.s32.totalorder %s271, %s285
      %p287 = scmp.eq.s32.totalorder %s32, 0
      %p288 = por %p286, %p287
      %s290 = sadd.s32 %s289, 1
      %p293 = scmp.eq.s32.totalorder %s26, 13
      %p294 = scmp.ne.s32.totalorder %s289, %s291
      %p295 = scmp.eq.s32.totalorder %s26, 0
      %p296 = por %p294, %p295
      %p297 = scmp.ne.s32.totalorder %s289, %s291
      %p298 = scmp.eq.s32.totalorder %s31, 13
      %p299 = por %p297, %p298
      %p300 = scmp.ne.s32.totalorder %s291, %s292
      %p301 = scmp.eq.s32.totalorder %s31, 0
      %p302 = por %p300, %p301
      %p303 = scmp.ne.s32.totalorder %s291, %s292
      %p304 = scmp.eq.s32.totalorder %s32, 13
      %p305 = por %p303, %p304
      %p307 = scmp.ne.s32.totalorder %s292, %s306
      %p308 = scmp.eq.s32.totalorder %s32, 0
      %p309 = por %p307, %p308
      %s311 = sadd.s32 %s310, 1
      %p314 = scmp.eq.s32.totalorder %s26, 13
      %p315 = scmp.ne.s32.totalorder %s310, %s312
      %p316 = scmp.eq.s32.totalorder %s26, 0
      %p317 = por %p315, %p316
      %p318 = scmp.ne.s32.totalorder %s310, %s312
      %p319 = scmp.eq.s32.totalorder %s31, 13
      %p320 = por %p318, %p319
      %p321 = scmp.ne.s32.totalorder %s312, %s313
      %p322 = scmp.eq.s32.totalorder %s31, 0
      %p323 = por %p321, %p322
      %p324 = scmp.ne.s32.totalorder %s312, %s313
      %p325 = scmp.eq.s32.totalorder %s32, 13
      %p326 = por %p324, %p325
      %p328 = scmp.ne.s32.totalorder %s313, %s327
      %p329 = scmp.eq.s32.totalorder %s32, 0
      %p330 = por %p328, %p329
      %s331 = ssub.s32 %s34, %s41
      %s332 = ssub.s32 %s33, %s45
      %s333 = sor.u32 %s331, %s332
      %p334 = scmp.eq.s32.totalorder %s333, 0
      %s336 = sadd.s32 %s335, 1
      %s337 = scalar_select %p334, %s335, %s336
      %p340 = pneg %p334
      %p341 = scmp.eq.s32.totalorder %s26, 13
      %p342 = por %p340, %p341
      %p343 = scmp.ne.s32.totalorder %s335, %s338
      %p344 = scmp.eq.s32.totalorder %s26, 0
      %p345 = por %p343, %p344
      %p346 = scmp.ne.s32.totalorder %s335, %s338
      %p347 = scmp.eq.s32.totalorder %s31, 13
      %p348 = por %p346, %p347
      %p349 = scmp.ne.s32.totalorder %s338, %s339
      %p350 = scmp.eq.s32.totalorder %s31, 0
      %p351 = por %p349, %p350
      %p352 = scmp.ne.s32.totalorder %s338, %s339
      %p353 = scmp.eq.s32.totalorder %s32, 13
      %p354 = por %p352, %p353
      %p356 = scmp.ne.s32.totalorder %s339, %s355
      %p357 = scmp.eq.s32.totalorder %s32, 0
      %p358 = por %p356, %p357
      %p359 = scmp.le.s32.totalorder 1, %s26
      %p360 = scmp.lt.s32.totalorder %s26, 15
      %p361 = pnand %p359, %p360
      %p362 = pneg %p361
      // Predicated region
      $region9: #{tpu_custom_call.1} parent=5 // pred_check
        _
      $region10: #{tpu_custom_call.1} parent=5 // pred_check_branch
        %364 = sbr.rel (%p361) target = $region12
      $region11: #{tpu_custom_call.1} parent=5 // pred_region
        %s365 = ssub.s32 %s26, 1
        // Predicated region
        $region13: #{tpu_custom_call.1} parent=11 // pred_check
          %p366 = pneg %p59
        $region14: #{tpu_custom_call.1} parent=11 // pred_check_branch
          %368 = sbr.rel (%p366) target = $region16
        $region15: #{tpu_custom_call.1} parent=11 // pred_region
          _
        $region16: #{tpu_custom_call.1} parent=11 // pred_fallthru
          _
        // Predicated region
        $region17: #{tpu_custom_call.1} parent=11 // pred_check
          %p369 = pneg %p134
        $region18: #{tpu_custom_call.1} parent=11 // pred_check_branch
          %371 = sbr.rel (%p369) target = $region20
        $region19: #{tpu_custom_call.1} parent=11 // pred_region
          _
        $region20: #{tpu_custom_call.1} parent=11 // pred_fallthru
          _
        // Predicated region
        $region21: #{tpu_custom_call.1} parent=11 // pred_check
          %p372 = pneg %p155
        $region22: #{tpu_custom_call.1} parent=11 // pred_check_branch
          %374 = sbr.rel (%p372) target = $region24
        $region23: #{tpu_custom_call.1} parent=11 // pred_region
          _
        $region24: #{tpu_custom_call.1} parent=11 // pred_fallthru
          _
        // Predicated region
        $region25: #{tpu_custom_call.1} parent=11 // pred_check
          %p375 = pneg %p176
        $region26: #{tpu_custom_call.1} parent=11 // pred_check_branch
          %377 = sbr.rel (%p375) target = $region28
        $region27: #{tpu_custom_call.1} parent=11 // pred_region
          _
        $region28: #{tpu_custom_call.1} parent=11 // pred_fallthru
          _
        // Predicated region
        $region29: #{tpu_custom_call.1} parent=11 // pred_check
          %p378 = pneg %p197
        $region30: #{tpu_custom_call.1} parent=11 // pred_check_branch
          %380 = sbr.rel (%p378) target = $region32
        $region31: #{tpu_custom_call.1} parent=11 // pred_region
          _
        $region32: #{tpu_custom_call.1} parent=11 // pred_fallthru
          _
        // Predicated region
        $region33: #{tpu_custom_call.1} parent=11 // pred_check
          %p381 = pneg %p218
        $region34: #{tpu_custom_call.1} parent=11 // pred_check_branch
          %383 = sbr.rel (%p381) target = $region36
        $region35: #{tpu_custom_call.1} parent=11 // pred_region
          _
        $region36: #{tpu_custom_call.1} parent=11 // pred_fallthru
          _
        // Predicated region
        $region37: #{tpu_custom_call.1} parent=11 // pred_check
          %p384 = pneg %p239
        $region38: #{tpu_custom_call.1} parent=11 // pred_check_branch
          %386 = sbr.rel (%p384) target = $region40
        $region39: #{tpu_custom_call.1} parent=11 // pred_region
          _
        $region40: #{tpu_custom_call.1} parent=11 // pred_fallthru
          _
        // Predicated region
        $region41: #{tpu_custom_call.1} parent=11 // pred_check
          %p387 = pneg %p260
        $region42: #{tpu_custom_call.1} parent=11 // pred_check_branch
          %389 = sbr.rel (%p387) target = $region44
        $region43: #{tpu_custom_call.1} parent=11 // pred_region
          _
        $region44: #{tpu_custom_call.1} parent=11 // pred_fallthru
          _
        // Predicated region
        $region45: #{tpu_custom_call.1} parent=11 // pred_check
          %p390 = pneg %p281
        $region46: #{tpu_custom_call.1} parent=11 // pred_check_branch
          %392 = sbr.rel (%p390) target = $region48
        $region47: #{tpu_custom_call.1} parent=11 // pred_region
          _
        $region48: #{tpu_custom_call.1} parent=11 // pred_fallthru
          _
        // Predicated region
        $region49: #{tpu_custom_call.1} parent=11 // pred_check
          %p393 = pneg %p302
        $region50: #{tpu_custom_call.1} parent=11 // pred_check_branch
          %395 = sbr.rel (%p393) target = $region52
        $region51: #{tpu_custom_call.1} parent=11 // pred_region
          _
        $region52: #{tpu_custom_call.1} parent=11 // pred_fallthru
          _
        // Predicated region
        $region53: #{tpu_custom_call.1} parent=11 // pred_check
          %p396 = pneg %p323
        $region54: #{tpu_custom_call.1} parent=11 // pred_check_branch
          %398 = sbr.rel (%p396) target = $region56
        $region55: #{tpu_custom_call.1} parent=11 // pred_region
          _
        $region56: #{tpu_custom_call.1} parent=11 // pred_fallthru
          _
      $region12: #{tpu_custom_call.1} parent=5 // pred_fallthru
        _
      %p399 = scmp.lt.s32.totalorder %s26, 14
      // Predicated region
      $region57: #{tpu_custom_call.1} parent=5 // pred_check
        %p400 = pneg %p399
      $region58: #{tpu_custom_call.1} parent=5 // pred_check_branch
        %402 = sbr.rel (%p400) target = $region60
      $region59: #{tpu_custom_call.1} parent=5 // pred_region
        // Predicated region
        $region61: #{tpu_custom_call.1} parent=59 // pred_check
          %p403 = pneg %p81
        $region62: #{tpu_custom_call.1} parent=59 // pred_check_branch
          %405 = sbr.rel (%p403) target = $region64
        $region63: #{tpu_custom_call.1} parent=59 // pred_region
          %s406 = smul.u32 4, %s33
          %p407 = scmp.lt.s32.totalorder %s34, 7
          %s408 = scalar_select %p407, %s34, 7
          %p409 = scmp.lt.s32.totalorder %s406, 7
          %s410 = scalar_select %p409, %s406, 7
          %s411 = smul.addr %s410, 2
          %s412 = smul.addr %s408, 16
          %s413 = sadd.s32 %s411, %s412
          %s414 = smul.addr %s413, 8
          %s415 = scalar_lea.vmem %s2, %s414
          %s416 = smul.u32 4, %s33
        $region64: #{tpu_custom_call.1} parent=59 // pred_fallthru
          _
        // Predicated region
        $region65: #{tpu_custom_call.1} parent=59 // pred_check
          %p417 = pneg %p107
        $region66: #{tpu_custom_call.1} parent=59 // pred_check_branch
          %419 = sbr.rel (%p417) target = $region68
        $region67: #{tpu_custom_call.1} parent=59 // pred_region
          %s420 = sand.u32 %s97, 1
          %s421 = sand.u32 %s97, 1
          %s422 = smul.addr %s421, 128
          %s423 = scalar_lea.vmem [#allocation7], %s422
          %s424 = smul.u32 4, %s33
          %s425 = smul.addr %s424, 2
          %s426 = smul.addr %s425, 8
          %s427 = scalar_lea.vmem %s3, %s426
          // Predicated region
          $region69: #{tpu_custom_call.1} parent=67 // pred_check
            _
          $region70: #{tpu_custom_call.1} parent=67 // pred_check_branch
            %429 = sbr.rel (0) target = $region72
          $region71: #{tpu_custom_call.1} parent=67 // pred_region
            // Predicated region
            $region73: #{tpu_custom_call.1} parent=71 // pred_check
              _
            $region74: #{tpu_custom_call.1} parent=71 // pred_check_branch
              %431 = sbr.rel (0) target = $region76
            $region75: #{tpu_custom_call.1} parent=71 // pred_region
              // Predicated region
              $region88: #{tpu_custom_call.1} parent=75 // pred_check
                _
              $region89: #{tpu_custom_call.1} parent=75 // pred_check_branch
                %476 = sbr.rel (0) target = $region91
              $region90: #{tpu_custom_call.1} parent=75 // pred_region
                loop: start=0, step=1, limit=1
                $region92: #{tpu_custom_call.1} parent=90 // loop_pre_header
                  _
                $region93: #{tpu_custom_call.1} parent=90 // loop_header
                  %s478 = sphi 0, %s482
                  %p479 = scmp.ge.s32.totalorder %s478, 1
                  %s483 = sphi %s427, %s427
                  %s484 = sphi %s423, %s423
                $region94: #{tpu_custom_call.1} parent=90 // loop_header_branch
                  %481 = sbr.rel (%p479) target = $region98
                $region95: #{tpu_custom_call.1} parent=90 // loop_body
                  %v485 = vld [vmem:[%s483] sm:$0xff]
                  %486 = vst [vmem:[%s484] sm:$0xff] %v485
                  %v487 = vld [vmem:[%s483 + $0x8] sm:$0xff]
                  %488 = vst [vmem:[%s484 + $0x8] sm:$0xff] %v487
                  %v489 = vld [vmem:[%s483 + $0x10] sm:$0xff]
                  %490 = vst [vmem:[%s484 + $0x10] sm:$0xff] %v489
                  %v491 = vld [vmem:[%s483 + $0x18] sm:$0xff]
                  %492 = vst [vmem:[%s484 + $0x18] sm:$0xff] %v491
                  %v493 = vld [vmem:[%s483 + $0x20] sm:$0xff]
                  %494 = vst [vmem:[%s484 + $0x20] sm:$0xff] %v493
                  %v495 = vld [vmem:[%s483 + $0x28] sm:$0xff]
                  %496 = vst [vmem:[%s484 + $0x28] sm:$0xff] %v495
                  %v497 = vld [vmem:[%s483 + $0x30] sm:$0xff]
                  %498 = vst [vmem:[%s484 + $0x30] sm:$0xff] %v497
                  %v499 = vld [vmem:[%s483 + $0x38] sm:$0xff]
                  %500 = vst [vmem:[%s484 + $0x38] sm:$0xff] %v499
                  %v501 = vld [vmem:[%s483 + $0x80] sm:$0xff]
                  %502 = vst [vmem:[%s484 + $0x40] sm:$0xff] %v501
                  %v503 = vld [vmem:[%s483 + $0x88] sm:$0xff]
                  %504 = vst [vmem:[%s484 + $0x48] sm:$0xff] %v503
                  %v505 = vld [vmem:[%s483 + $0x90] sm:$0xff]
                  %506 = vst [vmem:[%s484 + $0x50] sm:$0xff] %v505
                  %v507 = vld [vmem:[%s483 + $0x98] sm:$0xff]
                  %508 = vst [vmem:[%s484 + $0x58] sm:$0xff] %v507
                  %v509 = vld [vmem:[%s483 + $0xa0] sm:$0xff]
                  %510 = vst [vmem:[%s484 + $0x60] sm:$0xff] %v509
                  %v511 = vld [vmem:[%s483 + $0xa8] sm:$0xff]
                  %512 = vst [vmem:[%s484 + $0x68] sm:$0xff] %v511
                  %v513 = vld [vmem:[%s483 + $0xb0] sm:$0xff]
                  %514 = vst [vmem:[%s484 + $0x70] sm:$0xff] %v513
                  %v515 = vld [vmem:[%s483 + $0xb8] sm:$0xff]
                  %516 = vst [vmem:[%s484 + $0x78] sm:$0xff] %v515
                $region96: #{tpu_custom_call.1} parent=90 // loop_footer
                  %s482 = sadd.s32 1, %s478
                $region97: #{tpu_custom_call.1} parent=90 // loop_footer_branch
                  %477 = sbr.rel target = $region93
                $region98: #{tpu_custom_call.1} parent=90 // loop_exit
                  _
              $region91: #{tpu_custom_call.1} parent=75 // pred_fallthru
                _
              // Predicated region
              $region99: #{tpu_custom_call.1} parent=75 // pred_check
                _
              $region100: #{tpu_custom_call.1} parent=75 // pred_check_branch
                %518 = sbr.rel target = $region102
              $region101: #{tpu_custom_call.1} parent=75 // pred_region
                _
              $region102: #{tpu_custom_call.1} parent=75 // pred_fallthru
                _
            $region76: #{tpu_custom_call.1} parent=71 // pred_fallthru
              _
            // Predicated region
            $region77: #{tpu_custom_call.1} parent=71 // pred_check
              _
            $region78: #{tpu_custom_call.1} parent=71 // pred_check_branch
              %433 = sbr.rel target = $region80
            $region79: #{tpu_custom_call.1} parent=71 // pred_region
              loop: start=0, step=1, limit=1
              $region81: #{tpu_custom_call.1} parent=79 // loop_pre_header
                _
              $region82: #{tpu_custom_call.1} parent=79 // loop_header
                %s436 = sphi 0, %s440
                %p437 = scmp.ge.s32.totalorder %s436, 1
                %s441 = sphi %s427, %s427
                %s442 = sphi %s423, %s423
              $region83: #{tpu_custom_call.1} parent=79 // loop_header_branch
                %439 = sbr.rel (%p437) target = $region87
              $region84: #{tpu_custom_call.1} parent=79 // loop_body
                %v443 = vld [vmem:[%s441] sm:$0xff]
                %444 = vst [vmem:[%s442] sm:$0xff] %v443
                %v445 = vld [vmem:[%s441 + $0x8] sm:$0xff]
                %446 = vst [vmem:[%s442 + $0x8] sm:$0xff] %v445
                %v447 = vld [vmem:[%s441 + $0x10] sm:$0xff]
                %448 = vst [vmem:[%s442 + $0x10] sm:$0xff] %v447
                %v449 = vld [vmem:[%s441 + $0x18] sm:$0xff]
                %450 = vst [vmem:[%s442 + $0x18] sm:$0xff] %v449
                %v451 = vld [vmem:[%s441 + $0x20] sm:$0xff]
                %452 = vst [vmem:[%s442 + $0x20] sm:$0xff] %v451
                %v453 = vld [vmem:[%s441 + $0x28] sm:$0xff]
                %454 = vst [vmem:[%s442 + $0x28] sm:$0xff] %v453
                %v455 = vld [vmem:[%s441 + $0x30] sm:$0xff]
                %456 = vst [vmem:[%s442 + $0x30] sm:$0xff] %v455
                %v457 = vld [vmem:[%s441 + $0x38] sm:$0xff]
                %458 = vst [vmem:[%s442 + $0x38] sm:$0xff] %v457
                %v459 = vld [vmem:[%s441 + $0x80] sm:$0xff]
                %460 = vst [vmem:[%s442 + $0x40] sm:$0xff] %v459
                %v461 = vld [vmem:[%s441 + $0x88] sm:$0xff]
                %462 = vst [vmem:[%s442 + $0x48] sm:$0xff] %v461
                %v463 = vld [vmem:[%s441 + $0x90] sm:$0xff]
                %464 = vst [vmem:[%s442 + $0x50] sm:$0xff] %v463
                %v465 = vld [vmem:[%s441 + $0x98] sm:$0xff]
                %466 = vst [vmem:[%s442 + $0x58] sm:$0xff] %v465
                %v467 = vld [vmem:[%s441 + $0xa0] sm:$0xff]
                %468 = vst [vmem:[%s442 + $0x60] sm:$0xff] %v467
                %v469 = vld [vmem:[%s441 + $0xa8] sm:$0xff]
                %470 = vst [vmem:[%s442 + $0x68] sm:$0xff] %v469
                %v471 = vld [vmem:[%s441 + $0xb0] sm:$0xff]
                %472 = vst [vmem:[%s442 + $0x70] sm:$0xff] %v471
                %v473 = vld [vmem:[%s441 + $0xb8] sm:$0xff]
                %474 = vst [vmem:[%s442 + $0x78] sm:$0xff] %v473
              $region85: #{tpu_custom_call.1} parent=79 // loop_footer
                %s440 = sadd.s32 1, %s436
              $region86: #{tpu_custom_call.1} parent=79 // loop_footer_branch
                %435 = sbr.rel target = $region82
              $region87: #{tpu_custom_call.1} parent=79 // loop_exit
                _
            $region80: #{tpu_custom_call.1} parent=71 // pred_fallthru
              _
          $region72: #{tpu_custom_call.1} parent=67 // pred_fallthru
            _
          %519 = vnop
        $region68: #{tpu_custom_call.1} parent=59 // pred_fallthru
          _
      $region60: #{tpu_custom_call.1} parent=5 // pred_fallthru
        _
      %p520 = scmp.le.s32.totalorder 1, %s26
      %p521 = scmp.lt.s32.totalorder %s26, 15
      %p522 = pnand %p520, %p521
      %p523 = pneg %p522
      // Predicated region
      $region103: #{tpu_custom_call.1} parent=5 // pred_check
        _
      $region104: #{tpu_custom_call.1} parent=5 // pred_check_branch
        %525 = sbr.rel (%p522) target = $region106
      $region105: #{tpu_custom_call.1} parent=5 // pred_region
        %s526 = ssub.s32 %s26, 1
        %s527 = sand.u32 %s100, 1
        %s528 = sand.u32 %s100, 1
        %s529 = smul.addr %s528, 128
        %s530 = scalar_lea.vmem [#allocation7], %s529
        // Predicated region
        $region107: #{tpu_custom_call.1} parent=105 // pred_check
          %p531 = pneg %p113
        $region108: #{tpu_custom_call.1} parent=105 // pred_check_branch
          %533 = sbr.rel (%p531) target = $region110
        $region109: #{tpu_custom_call.1} parent=105 // pred_region
          _
        $region110: #{tpu_custom_call.1} parent=105 // pred_fallthru
          _
        %p534 = pneg %p59
        %p535 = pneg %p56
        %s536 = smul.u32 4, %s35
        %p537 = scmp.lt.s32.totalorder %s36, 7
        %s538 = scalar_select %p537, %s36, 7
        %p539 = scmp.lt.s32.totalorder %s536, 7
        %s540 = scalar_select %p539, %s536, 7
        %s541 = smul.addr %s540, 2
        %s542 = smul.addr %s538, 16
        %s543 = sadd.s32 %s541, %s542
        %s544 = smul.addr %s543, 8
        %s545 = scalar_lea.vmem %s2, %s544
        %p546 = pneg %p87
        %p547 = pneg %p84
        %s548 = sand.u32 %s100, 1
        %s549 = sand.u32 %s100, 1
        %s550 = smul.addr %s549, 128
        %s551 = scalar_lea.vmem [#allocation7], %s550
        %p552 = pneg %p113
        %p553 = pneg %p110
        %p554 = pneg %p134
        %p555 = pneg %p131
        %p556 = pneg %p155
        %p557 = pneg %p152
        %p558 = pneg %p176
        %p559 = pneg %p173
        %p560 = pneg %p197
        %p561 = pneg %p194
        %p562 = pneg %p218
        %p563 = pneg %p215
        %p564 = pneg %p239
        %p565 = pneg %p236
        %p566 = pneg %p260
        %p567 = pneg %p257
        %p568 = pneg %p281
        %p569 = pneg %p278
        %p570 = pneg %p302
        %p571 = pneg %p299
        %p572 = pneg %p323
        %p573 = pneg %p320
        %p574 = pneg %p351
        %p575 = pneg %p348
        %s576 = smul.u32 4, %s35
        %p577 = scmp.lt.s32.totalorder %s36, 6
        %s578 = scalar_select %p577, %s36, 6
        %p579 = scmp.lt.s32.totalorder %s576, 7
        %s580 = scalar_select %p579, %s576, 7
        %s581 = smul.addr %s580, 2
        %s582 = smul.addr %s578, 16
        %s583 = sadd.s32 %s581, %s582
        %s584 = smul.addr %s583, 8
        %s585 = scalar_lea.vmem %s14, %s584
        %s586 = smul.u32 4, %s35
        %p587 = scmp.lt.s32.totalorder %s36, 7
        %s588 = scalar_select %p587, %s36, 7
        %p589 = scmp.lt.s32.totalorder %s586, 7
        %s590 = scalar_select %p589, %s586, 7
        %s591 = smul.addr %s590, 2
        %s592 = smul.addr %s588, 16
        %s593 = sadd.s32 %s591, %s592
        %s594 = smul.addr %s593, 8
        %s595 = scalar_lea.vmem %s2, %s594
        %s596 = smul.u32 4, %s35
        %s597 = smul.u32 4, %s35
        %s598 = smul.u32 4, %s35
        %p599 = scmp.lt.s32.totalorder %s36, 6
        %s600 = scalar_select %p599, %s36, 6
        %p601 = scmp.lt.s32.totalorder %s598, 7
        %s602 = scalar_select %p601, %s598, 7
        %s603 = smul.addr %s602, 2
        %s604 = smul.addr %s600, 16
        %s605 = sadd.s32 %s603, %s604
        %s606 = smul.addr %s605, 8
        %s607 = scalar_lea.vmem %s14, %s606
        %s608 = smul.u32 4, %s35
        %p610 = scmp.eq.s32.totalorder %s36, 0
        // Predicated region
        $region111: #{tpu_custom_call.1} parent=105 // pred_check
          %p611 = pneg %p610
        $region112: #{tpu_custom_call.1} parent=105 // pred_check_branch
          %613 = sbr.rel (%p611) target = $region114
        $region113: #{tpu_custom_call.1} parent=105 // pred_region
          %v614 = vld [vmem:[%s530] sm:$0xff]
          %v615 = vld [vmem:[%s530 + $0x8] sm:$0xff]
          %v616 = vld [vmem:[%s530 + $0x10] sm:$0xff]
          %v617 = vld [vmem:[%s530 + $0x18] sm:$0xff]
          %v618 = vld [vmem:[%s530 + $0x20] sm:$0xff]
          %v619 = vld [vmem:[%s530 + $0x28] sm:$0xff]
          %v620 = vld [vmem:[%s530 + $0x30] sm:$0xff]
          %v621 = vld [vmem:[%s530 + $0x38] sm:$0xff]
          %vm622 = vcmask 261120
          %623 = vst.msk [vmem:[#allocation2] sm:$0xff] %vm622, %v614
          %624 = vst.msk [vmem:[#allocation2 + $0x8] sm:$0xff] %vm622, %v615
          %625 = vst.msk [vmem:[#allocation2 + $0x10] sm:$0xff] %vm622, %v616
          %626 = vst.msk [vmem:[#allocation2 + $0x18] sm:$0xff] %vm622, %v617
          %627 = vst.msk [vmem:[#allocation2 + $0x20] sm:$0xff] %vm622, %v618
          %628 = vst.msk [vmem:[#allocation2 + $0x28] sm:$0xff] %vm622, %v619
          %629 = vst.msk [vmem:[#allocation2 + $0x30] sm:$0xff] %vm622, %v620
          %630 = vst.msk [vmem:[#allocation2 + $0x38] sm:$0xff] %vm622, %v621
          %s631 = scalar_lea.vmem %s530, 64 [#allocation7]
          %v632 = vld [vmem:[%s631] sm:$0xff]
          %v633 = vld [vmem:[%s631 + $0x8] sm:$0xff]
          %v634 = vld [vmem:[%s631 + $0x10] sm:$0xff]
          %v635 = vld [vmem:[%s631 + $0x18] sm:$0xff]
          %v636 = vld [vmem:[%s631 + $0x20] sm:$0xff]
          %v637 = vld [vmem:[%s631 + $0x28] sm:$0xff]
          %v638 = vld [vmem:[%s631 + $0x30] sm:$0xff]
          %v639 = vld [vmem:[%s631 + $0x38] sm:$0xff]
          %640 = vst.msk [vmem:[#allocation3] sm:$0xff] %vm622, %v632
          %641 = vst.msk [vmem:[#allocation3 + $0x8] sm:$0xff] %vm622, %v633
          %642 = vst.msk [vmem:[#allocation3 + $0x10] sm:$0xff] %vm622, %v634
          %643 = vst.msk [vmem:[#allocation3 + $0x18] sm:$0xff] %vm622, %v635
          %644 = vst.msk [vmem:[#allocation3 + $0x20] sm:$0xff] %vm622, %v636
          %645 = vst.msk [vmem:[#allocation3 + $0x28] sm:$0xff] %vm622, %v637
          %646 = vst.msk [vmem:[#allocation3 + $0x30] sm:$0xff] %vm622, %v638
          %647 = vst.msk [vmem:[#allocation3 + $0x38] sm:$0xff] %vm622, %v639
        $region114: #{tpu_custom_call.1} parent=105 // pred_fallthru
          _
        %s648 = sld [smem:[#allocation6 + %s36]]
        %p649 = scmp.ne.s32.totalorder %s648, 0
        // Predicated region
        $region115: #{tpu_custom_call.1} parent=105 // pred_check
          %p650 = pneg %p649
        $region116: #{tpu_custom_call.1} parent=105 // pred_check_branch
          %652 = sbr.rel (%p650) target = $region118
        $region117: #{tpu_custom_call.1} parent=105 // pred_region
          %v653 = vld [vmem:[%s595] sm:$0xff]
          %v654 = vld [vmem:[%s595 + $0x8] sm:$0xff]
          %v655 = vld [vmem:[%s595 + $0x10] sm:$0xff]
          %v656 = vld [vmem:[%s595 + $0x18] sm:$0xff]
          %v657 = vld [vmem:[%s595 + $0x20] sm:$0xff]
          %v658 = vld [vmem:[%s595 + $0x28] sm:$0xff]
          %v659 = vld [vmem:[%s595 + $0x30] sm:$0xff]
          %v660 = vld [vmem:[%s595 + $0x38] sm:$0xff]
          %vm661 = vcmask 15360
          %662 = vst.msk [vmem:[#allocation4] sm:$0xff] %vm661, %v653
          %663 = vst.msk [vmem:[#allocation4 + $0x8] sm:$0xff] %vm661, %v654
          %664 = vst.msk [vmem:[#allocation4 + $0x10] sm:$0xff] %vm661, %v655
          %665 = vst.msk [vmem:[#allocation4 + $0x18] sm:$0xff] %vm661, %v656
          %666 = vst.msk [vmem:[#allocation4 + $0x20] sm:$0xff] %vm661, %v657
          %667 = vst.msk [vmem:[#allocation4 + $0x28] sm:$0xff] %vm661, %v658
          %668 = vst.msk [vmem:[#allocation4 + $0x30] sm:$0xff] %vm661, %v659
          %669 = vst.msk [vmem:[#allocation4 + $0x38] sm:$0xff] %vm661, %v660
        $region118: #{tpu_custom_call.1} parent=105 // pred_fallthru
          _
        %v670 = vld [vmem:[%s1] sm:$0xf]
        %v671 = vld [vmem:[%s1 + $0x4] sm:$0xf]
        %s672 = scalar_lea.vmem %s1, 8
        %v673 = vld [vmem:[%s672] sm:$0xf]
        %v674 = vld [vmem:[%s672 + $0x4] sm:$0xf]
        %v675 = vld [vmem:[#allocation4] sm:$0xff]
        %v676 = vld [vmem:[#allocation4 + $0x8] sm:$0xff]
        %v677 = vld [vmem:[#allocation4 + $0x10] sm:$0xff]
        %v678 = vld [vmem:[#allocation4 + $0x18] sm:$0xff]
        %v679 = vld [vmem:[#allocation4 + $0x20] sm:$0xff]
        %v680 = vld [vmem:[#allocation4 + $0x28] sm:$0xff]
        %v681 = vld [vmem:[#allocation4 + $0x30] sm:$0xff]
        %v682 = vld [vmem:[#allocation4 + $0x38] sm:$0xff]
        %v683 = vld [vmem:[#allocation2] sm:$0xff]
        %v684 = vld [vmem:[#allocation2 + $0x8] sm:$0xff]
        %v685 = vld [vmem:[#allocation2 + $0x10] sm:$0xff]
        %v686 = vld [vmem:[#allocation2 + $0x18] sm:$0xff]
        %v687 = vld [vmem:[#allocation2 + $0x20] sm:$0xff]
        %v688 = vld [vmem:[#allocation2 + $0x28] sm:$0xff]
        %v689 = vld [vmem:[#allocation2 + $0x30] sm:$0xff]
        %v690 = vld [vmem:[#allocation2 + $0x38] sm:$0xff]
        %699 = vrot.lane.b32.xlu0 %v683, 2
        %v700 = vpop.permute.xlu0 %699
        %701 = vrot.lane.b32.xlu0 %v684, 2
        %v702 = vpop.permute.xlu0 %701
        %703 = vrot.lane.b32.xlu0 %v685, 2
        %v704 = vpop.permute.xlu0 %703
        %705 = vrot.lane.b32.xlu0 %v686, 2
        %v706 = vpop.permute.xlu0 %705
        %707 = vrot.lane.b32.xlu0 %v687, 2
        %v708 = vpop.permute.xlu0 %707
        %709 = vrot.lane.b32.xlu0 %v688, 2
        %v710 = vpop.permute.xlu0 %709
        %711 = vrot.lane.b32.xlu0 %v689, 2
        %v712 = vpop.permute.xlu0 %711
        %713 = vrot.lane.b32.xlu0 %v690, 2
        %v714 = vpop.permute.xlu0 %713
        %vm723 = vcmask 15360
        %v724 = vsel %vm723, %v675, %v700
        %v725 = vsel %vm723, %v676, %v702
        %v726 = vsel %vm723, %v677, %v704
        %v727 = vsel %vm723, %v678, %v706
        %v728 = vsel %vm723, %v679, %v708
        %v729 = vsel %vm723, %v680, %v710
        %v730 = vsel %vm723, %v681, %v712
        %v731 = vsel %vm723, %v682, %v714
        %v732 = vpack.c.bf16 %v725, %v724
        %v733 = vpack.c.bf16 %v727, %v726
        %v734 = vpack.c.bf16 %v729, %v728
        %v735 = vpack.c.bf16 %v731, %v730
        %v738 = vunpack.c.l.b16 %v670
        %v739 = vunpack.c.l.b16 %v671
        %v740 = vpack.c.b16 %v739, %v738
        %vm741 = vcmask 130048
        %v743 = vsel %vm741, %v740, 0
        %745 = vmatprep.subr.bf16.mxu0 0
        %746 = vmatpush1.bf16.msra.mxu0 %v732
        %747 = vmatprep.subr.bf16.mxu0 0
        %748 = vmatpush1.bf16.msra.mxu0 0
        %749 = vmatprep.subr.bf16.mxu0 0
        %750 = vmatpush1.bf16.msra.mxu0 0
        %751 = vmatprep.subr.bf16.mxu0 0
        %752 = vmatpush1.bf16.msra.mxu0 0
        %753 = vmatprep.subr.bf16.mxu0 0
        %754 = vmatpush1.bf16.msra.mxu0 0
        %755 = vmatprep.subr.bf16.mxu0 0
        %756 = vmatpush1.bf16.msra.mxu0 0
        %757 = vmatprep.subr.bf16.mxu0 0
        %758 = vmatpush1.bf16.msra.mxu0 0
        %759 = vmatprep.subr.bf16.mxu0 0
        %760 = vmatpush1.bf16.msra.mxu0 0
        %761 = vmatprep.subr.bf16.mxu0 0
        %762 = vmatpush1.bf16.msra.mxu0 0
        %763 = vmatprep.subr.bf16.mxu0 0
        %764 = vmatpush1.bf16.msra.mxu0 0
        %765 = vmatprep.subr.bf16.mxu0 0
        %766 = vmatpush1.bf16.msra.mxu0 0
        %767 = vmatprep.subr.bf16.mxu0 0
        %768 = vmatpush1.bf16.msra.mxu0 0
        %769 = vmatprep.subr.bf16.mxu0 0
        %770 = vmatpush1.bf16.msra.mxu0 0
        %771 = vmatprep.subr.bf16.mxu0 0
        %772 = vmatpush1.bf16.msra.mxu0 0
        %773 = vmatprep.subr.bf16.mxu0 0
        %774 = vmatpush1.bf16.msra.mxu0 0
        %775 = vmatprep.subr.bf16.mxu0 0
        %776 = vmatpush1.bf16.msra.mxu0 0
        %777 = vmatprep.mubr.bf16.mxu0 0
        %778 = vmatmul.mubr.bf16.gmra.mrb[0].mxu0 %v743
        %v779 = vpop.f32.mrb[0].mxu0
        %v780 = vadd.f32 0.0, %v779
        %v781 = vpop.f32.mrb[0].mxu0
        %v782 = vpop.f32.mrb[0].mxu0
        %v783 = vadd.f32 0.0, %v782
        %v784 = vpop.f32.mrb[0].mxu0
        %785 = vdwg.mxu0
        %786 = vmatprep.subr.bf16.mxu0 0
        %787 = vmatpush1.bf16.msra.mxu0 %v733
        %788 = vmatprep.subr.bf16.mxu0 0
        %789 = vmatpush1.bf16.msra.mxu0 0
        %790 = vmatprep.subr.bf16.mxu0 0
        %791 = vmatpush1.bf16.msra.mxu0 0
        %792 = vmatprep.subr.bf16.mxu0 0
        %793 = vmatpush1.bf16.msra.mxu0 0
        %794 = vmatprep.subr.bf16.mxu0 0
        %795 = vmatpush1.bf16.msra.mxu0 0
        %796 = vmatprep.subr.bf16.mxu0 0
        %797 = vmatpush1.bf16.msra.mxu0 0
        %798 = vmatprep.subr.bf16.mxu0 0
        %799 = vmatpush1.bf16.msra.mxu0 0
        %800 = vmatprep.subr.bf16.mxu0 0
        %801 = vmatpush1.bf16.msra.mxu0 0
        %802 = vmatprep.subr.bf16.mxu0 0
        %803 = vmatpush1.bf16.msra.mxu0 0
        %804 = vmatprep.subr.bf16.mxu0 0
        %805 = vmatpush1.bf16.msra.mxu0 0
        %806 = vmatprep.subr.bf16.mxu0 0
        %807 = vmatpush1.bf16.msra.mxu0 0
        %808 = vmatprep.subr.bf16.mxu0 0
        %809 = vmatpush1.bf16.msra.mxu0 0
        %810 = vmatprep.subr.bf16.mxu0 0
        %811 = vmatpush1.bf16.msra.mxu0 0
        %812 = vmatprep.subr.bf16.mxu0 0
        %813 = vmatpush1.bf16.msra.mxu0 0
        %814 = vmatprep.subr.bf16.mxu0 0
        %815 = vmatpush1.bf16.msra.mxu0 0
        %816 = vmatprep.subr.bf16.mxu0 0
        %817 = vmatpush1.bf16.msra.mxu0 0
        %818 = vmatprep.mubr.bf16.mxu0 0
        %819 = vmatmul.mubr.bf16.gmra.mrb[0].mxu0 %v743
        %v820 = vpop.f32.mrb[0].mxu0
        %v821 = vadd.f32 0.0, %v820
        %v822 = vpop.f32.mrb[0].mxu0
        %v823 = vpop.f32.mrb[0].mxu0
        %v824 = vadd.f32 0.0, %v823
        %v825 = vpop.f32.mrb[0].mxu0
        %826 = vdwg.mxu0
        %827 = vmatprep.subr.bf16.mxu0 0
        %828 = vmatpush1.bf16.msra.mxu0 %v734
        %829 = vmatprep.subr.bf16.mxu0 0
        %830 = vmatpush1.bf16.msra.mxu0 0
        %831 = vmatprep.subr.bf16.mxu0 0
        %832 = vmatpush1.bf16.msra.mxu0 0
        %833 = vmatprep.subr.bf16.mxu0 0
        %834 = vmatpush1.bf16.msra.mxu0 0
        %835 = vmatprep.subr.bf16.mxu0 0
        %836 = vmatpush1.bf16.msra.mxu0 0
        %837 = vmatprep.subr.bf16.mxu0 0
        %838 = vmatpush1.bf16.msra.mxu0 0
        %839 = vmatprep.subr.bf16.mxu0 0
        %840 = vmatpush1.bf16.msra.mxu0 0
        %841 = vmatprep.subr.bf16.mxu0 0
        %842 = vmatpush1.bf16.msra.mxu0 0
        %843 = vmatprep.subr.bf16.mxu0 0
        %844 = vmatpush1.bf16.msra.mxu0 0
        %845 = vmatprep.subr.bf16.mxu0 0
        %846 = vmatpush1.bf16.msra.mxu0 0
        %847 = vmatprep.subr.bf16.mxu0 0
        %848 = vmatpush1.bf16.msra.mxu0 0
        %849 = vmatprep.subr.bf16.mxu0 0
        %850 = vmatpush1.bf16.msra.mxu0 0
        %851 = vmatprep.subr.bf16.mxu0 0
        %852 = vmatpush1.bf16.msra.mxu0 0
        %853 = vmatprep.subr.bf16.mxu0 0
        %854 = vmatpush1.bf16.msra.mxu0 0
        %855 = vmatprep.subr.bf16.mxu0 0
        %856 = vmatpush1.bf16.msra.mxu0 0
        %857 = vmatprep.subr.bf16.mxu0 0
        %858 = vmatpush1.bf16.msra.mxu0 0
        %859 = vmatprep.mubr.bf16.mxu0 0
        %860 = vmatmul.mubr.bf16.gmra.mrb[0].mxu0 %v743
        %v861 = vpop.f32.mrb[0].mxu0
        %v862 = vadd.f32 0.0, %v861
        %v863 = vpop.f32.mrb[0].mxu0
        %v864 = vpop.f32.mrb[0].mxu0
        %v865 = vadd.f32 0.0, %v864
        %v866 = vpop.f32.mrb[0].mxu0
        %867 = vdwg.mxu0
        %868 = vmatprep.subr.bf16.mxu0 0
        %869 = vmatpush1.bf16.msra.mxu0 %v735
        %870 = vmatprep.subr.bf16.mxu0 0
        %871 = vmatpush1.bf16.msra.mxu0 0
        %872 = vmatprep.subr.bf16.mxu0 0
        %873 = vmatpush1.bf16.msra.mxu0 0
        %874 = vmatprep.subr.bf16.mxu0 0
        %875 = vmatpush1.bf16.msra.mxu0 0
        %876 = vmatprep.subr.bf16.mxu0 0
        %877 = vmatpush1.bf16.msra.mxu0 0
        %878 = vmatprep.subr.bf16.mxu0 0
        %879 = vmatpush1.bf16.msra.mxu0 0
        %880 = vmatprep.subr.bf16.mxu0 0
        %881 = vmatpush1.bf16.msra.mxu0 0
        %882 = vmatprep.subr.bf16.mxu0 0
        %883 = vmatpush1.bf16.msra.mxu0 0
        %884 = vmatprep.subr.bf16.mxu0 0
        %885 = vmatpush1.bf16.msra.mxu0 0
        %886 = vmatprep.subr.bf16.mxu0 0
        %887 = vmatpush1.bf16.msra.mxu0 0
        %888 = vmatprep.subr.bf16.mxu0 0
        %889 = vmatpush1.bf16.msra.mxu0 0
        %890 = vmatprep.subr.bf16.mxu0 0
        %891 = vmatpush1.bf16.msra.mxu0 0
        %892 = vmatprep.subr.bf16.mxu0 0
        %893 = vmatpush1.bf16.msra.mxu0 0
        %894 = vmatprep.subr.bf16.mxu0 0
        %895 = vmatpush1.bf16.msra.mxu0 0
        %896 = vmatprep.subr.bf16.mxu0 0
        %897 = vmatpush1.bf16.msra.mxu0 0
        %898 = vmatprep.subr.bf16.mxu0 0
        %899 = vmatpush1.bf16.msra.mxu0 0
        %900 = vmatprep.mubr.bf16.mxu0 0
        %901 = vmatmul.mubr.bf16.gmra.mrb[0].mxu0 %v743
        %v902 = vpop.f32.mrb[0].mxu0
        %v903 = vadd.f32 0.0, %v902
        %v904 = vpop.f32.mrb[0].mxu0
        %v905 = vpop.f32.mrb[0].mxu0
        %v906 = vadd.f32 0.0, %v905
        %v907 = vpop.f32.mrb[0].mxu0
        %908 = vdwg.mxu0
        %v909 = vpack.c.bf16 %v783, %v780
        %v910 = vpack.c.bf16 %v824, %v821
        %v911 = vpack.c.bf16 %v865, %v862
        %v912 = vpack.c.bf16 %v906, %v903
        %913 = vmatprep.subr.bf16.mxu0 0
        %914 = vmatpush1.bf16.msra.mxu0 %v909
        %915 = vmatprep.subr.bf16.mxu0 0
        %916 = vmatpush1.bf16.msra.mxu0 0
        %917 = vmatprep.subr.bf16.mxu0 0
        %918 = vmatpush1.bf16.msra.mxu0 0
        %919 = vmatprep.subr.bf16.mxu0 0
        %920 = vmatpush1.bf16.msra.mxu0 0
        %921 = vmatprep.subr.bf16.mxu0 0
        %922 = vmatpush1.bf16.msra.mxu0 0
        %923 = vmatprep.subr.bf16.mxu0 0
        %924 = vmatpush1.bf16.msra.mxu0 0
        %925 = vmatprep.subr.bf16.mxu0 0
        %926 = vmatpush1.bf16.msra.mxu0 0
        %927 = vmatprep.subr.bf16.mxu0 0
        %928 = vmatpush1.bf16.msra.mxu0 0
        %929 = vmatprep.subr.bf16.mxu0 0
        %930 = vmatpush1.bf16.msra.mxu0 0
        %931 = vmatprep.subr.bf16.mxu0 0
        %932 = vmatpush1.bf16.msra.mxu0 0
        %933 = vmatprep.subr.bf16.mxu0 0
        %934 = vmatpush1.bf16.msra.mxu0 0
        %935 = vmatprep.subr.bf16.mxu0 0
        %936 = vmatpush1.bf16.msra.mxu0 0
        %937 = vmatprep.subr.bf16.mxu0 0
        %938 = vmatpush1.bf16.msra.mxu0 0
        %939 = vmatprep.subr.bf16.mxu0 0
        %940 = vmatpush1.bf16.msra.mxu0 0
        %941 = vmatprep.subr.bf16.mxu0 0
        %942 = vmatpush1.bf16.msra.mxu0 0
        %943 = vmatprep.subr.bf16.mxu0 0
        %944 = vmatpush1.bf16.msra.mxu0 0
        %945 = vmatprep.mubr.bf16.mxu0 0
        %946 = vmatmul.mubr.bf16.gmra.mrb[0].mxu0 %v743
        %v947 = vpop.f32.mrb[0].mxu0
        %v948 = vadd.f32 0.0, %v947
        %v949 = vpop.f32.mrb[0].mxu0
        %v950 = vpop.f32.mrb[0].mxu0
        %v951 = vadd.f32 0.0, %v950
        %v952 = vpop.f32.mrb[0].mxu0
        %953 = vdwg.mxu0
        %954 = vmatprep.subr.bf16.mxu0 0
        %955 = vmatpush1.bf16.msra.mxu0 %v910
        %956 = vmatprep.subr.bf16.mxu0 0
        %957 = vmatpush1.bf16.msra.mxu0 0
        %958 = vmatprep.subr.bf16.mxu0 0
        %959 = vmatpush1.bf16.msra.mxu0 0
        %960 = vmatprep.subr.bf16.mxu0 0
        %961 = vmatpush1.bf16.msra.mxu0 0
        %962 = vmatprep.subr.bf16.mxu0 0
        %963 = vmatpush1.bf16.msra.mxu0 0
        %964 = vmatprep.subr.bf16.mxu0 0
        %965 = vmatpush1.bf16.msra.mxu0 0
        %966 = vmatprep.subr.bf16.mxu0 0
        %967 = vmatpush1.bf16.msra.mxu0 0
        %968 = vmatprep.subr.bf16.mxu0 0
        %969 = vmatpush1.bf16.msra.mxu0 0
        %970 = vmatprep.subr.bf16.mxu0 0
        %971 = vmatpush1.bf16.msra.mxu0 0
        %972 = vmatprep.subr.bf16.mxu0 0
        %973 = vmatpush1.bf16.msra.mxu0 0
        %974 = vmatprep.subr.bf16.mxu0 0
        %975 = vmatpush1.bf16.msra.mxu0 0
        %976 = vmatprep.subr.bf16.mxu0 0
        %977 = vmatpush1.bf16.msra.mxu0 0
        %978 = vmatprep.subr.bf16.mxu0 0
        %979 = vmatpush1.bf16.msra.mxu0 0
        %980 = vmatprep.subr.bf16.mxu0 0
        %981 = vmatpush1.bf16.msra.mxu0 0
        %982 = vmatprep.subr.bf16.mxu0 0
        %983 = vmatpush1.bf16.msra.mxu0 0
        %984 = vmatprep.subr.bf16.mxu0 0
        %985 = vmatpush1.bf16.msra.mxu0 0
        %986 = vmatprep.mubr.bf16.mxu0 0
        %987 = vmatmul.mubr.bf16.gmra.mrb[0].mxu0 %v743
        %v988 = vpop.f32.mrb[0].mxu0
        %v989 = vadd.f32 0.0, %v988
        %v990 = vpop.f32.mrb[0].mxu0
        %v991 = vpop.f32.mrb[0].mxu0
        %v992 = vadd.f32 0.0, %v991
        %v993 = vpop.f32.mrb[0].mxu0
        %994 = vdwg.mxu0
        %995 = vmatprep.subr.bf16.mxu0 0
        %996 = vmatpush1.bf16.msra.mxu0 %v911
        %997 = vmatprep.subr.bf16.mxu0 0
        %998 = vmatpush1.bf16.msra.mxu0 0
        %999 = vmatprep.subr.bf16.mxu0 0
        %1000 = vmatpush1.bf16.msra.mxu0 0
        %1001 = vmatprep.subr.bf16.mxu0 0
        %1002 = vmatpush1.bf16.msra.mxu0 0
        %1003 = vmatprep.subr.bf16.mxu0 0
        %1004 = vmatpush1.bf16.msra.mxu0 0
        %1005 = vmatprep.subr.bf16.mxu0 0
        %1006 = vmatpush1.bf16.msra.mxu0 0
        %1007 = vmatprep.subr.bf16.mxu0 0
        %1008 = vmatpush1.bf16.msra.mxu0 0
        %1009 = vmatprep.subr.bf16.mxu0 0
        %1010 = vmatpush1.bf16.msra.mxu0 0
        %1011 = vmatprep.subr.bf16.mxu0 0
        %1012 = vmatpush1.bf16.msra.mxu0 0
        %1013 = vmatprep.subr.bf16.mxu0 0
        %1014 = vmatpush1.bf16.msra.mxu0 0
        %1015 = vmatprep.subr.bf16.mxu0 0
        %1016 = vmatpush1.bf16.msra.mxu0 0
        %1017 = vmatprep.subr.bf16.mxu0 0
        %1018 = vmatpush1.bf16.msra.mxu0 0
        %1019 = vmatprep.subr.bf16.mxu0 0
        %1020 = vmatpush1.bf16.msra.mxu0 0
        %1021 = vmatprep.subr.bf16.mxu0 0
        %1022 = vmatpush1.bf16.msra.mxu0 0
        %1023 = vmatprep.subr.bf16.mxu0 0
        %1024 = vmatpush1.bf16.msra.mxu0 0
        %1025 = vmatprep.subr.bf16.mxu0 0
        %1026 = vmatpush1.bf16.msra.mxu0 0
        %1027 = vmatprep.mubr.bf16.mxu0 0
        %1028 = vmatmul.mubr.bf16.gmra.mrb[0].mxu0 %v743
        %v1029 = vpop.f32.mrb[0].mxu0
        %v1030 = vadd.f32 0.0, %v1029
        %v1031 = vpop.f32.mrb[0].mxu0
        %v1032 = vpop.f32.mrb[0].mxu0
        %v1033 = vadd.f32 0.0, %v1032
        %v1034 = vpop.f32.mrb[0].mxu0
        %1035 = vdwg.mxu0
        %1036 = vmatprep.subr.bf16.mxu0 0
        %1037 = vmatpush1.bf16.msra.mxu0 %v912
        %1038 = vmatprep.subr.bf16.mxu0 0
        %1039 = vmatpush1.bf16.msra.mxu0 0
        %1040 = vmatprep.subr.bf16.mxu0 0
        %1041 = vmatpush1.bf16.msra.mxu0 0
        %1042 = vmatprep.subr.bf16.mxu0 0
        %1043 = vmatpush1.bf16.msra.mxu0 0
        %1044 = vmatprep.subr.bf16.mxu0 0
        %1045 = vmatpush1.bf16.msra.mxu0 0
        %1046 = vmatprep.subr.bf16.mxu0 0
        %1047 = vmatpush1.bf16.msra.mxu0 0
        %1048 = vmatprep.subr.bf16.mxu0 0
        %1049 = vmatpush1.bf16.msra.mxu0 0
        %1050 = vmatprep.subr.bf16.mxu0 0
        %1051 = vmatpush1.bf16.msra.mxu0 0
        %1052 = vmatprep.subr.bf16.mxu0 0
        %1053 = vmatpush1.bf16.msra.mxu0 0
        %1054 = vmatprep.subr.bf16.mxu0 0
        %1055 = vmatpush1.bf16.msra.mxu0 0
        %1056 = vmatprep.subr.bf16.mxu0 0
        %1057 = vmatpush1.bf16.msra.mxu0 0
        %1058 = vmatprep.subr.bf16.mxu0 0
        %1059 = vmatpush1.bf16.msra.mxu0 0
        %1060 = vmatprep.subr.bf16.mxu0 0
        %1061 = vmatpush1.bf16.msra.mxu0 0
        %1062 = vmatprep.subr.bf16.mxu0 0
        %1063 = vmatpush1.bf16.msra.mxu0 0
        %1064 = vmatprep.subr.bf16.mxu0 0
        %1065 = vmatpush1.bf16.msra.mxu0 0
        %1066 = vmatprep.subr.bf16.mxu0 0
        %1067 = vmatpush1.bf16.msra.mxu0 0
        %1068 = vmatprep.mubr.bf16.mxu0 0
        %1069 = vmatmul.mubr.bf16.gmra.mrb[0].mxu0 %v743
        %v1070 = vpop.f32.mrb[0].mxu0
        %v1071 = vadd.f32 0.0, %v1070
        %v1072 = vpop.f32.mrb[0].mxu0
        %v1073 = vpop.f32.mrb[0].mxu0
        %v1074 = vadd.f32 0.0, %v1073
        %v1075 = vpop.f32.mrb[0].mxu0
        %1076 = vdwg.mxu0
        %v1077 = vmul.f32 %v948, 2.0
        %v1078 = vmul.f32 %v951, 2.0
        %v1079 = vmul.f32 %v989, 2.0
        %v1080 = vmul.f32 %v992, 2.0
        %v1081 = vmul.f32 %v1030, 2.0
        %v1082 = vmul.f32 %v1033, 2.0
        %v1083 = vmul.f32 %v1071, 2.0
        %v1084 = vmul.f32 %v1074, 2.0
        %v1085 = vsub.f32 %v1077, %v724
        %v1086 = vsub.f32 %v1078, %v725
        %v1087 = vsub.f32 %v1079, %v726
        %v1088 = vsub.f32 %v1080, %v727
        %v1089 = vsub.f32 %v1081, %v728
        %v1090 = vsub.f32 %v1082, %v729
        %v1091 = vsub.f32 %v1083, %v730
        %v1092 = vsub.f32 %v1084, %v731
        %v1095 = vunpack.c.l.b16 %v673
        %v1096 = vunpack.c.l.b16 %v674
        %v1097 = vpack.c.b16 %v1096, %v1095
        %v1099 = vsel %vm741, %v1097, 0
        %1101 = vmatprep.subr.bf16.mxu0 0
        %1102 = vmatpush1.bf16.msra.mxu0 %v732
        %1103 = vmatprep.subr.bf16.mxu0 0
        %1104 = vmatpush1.bf16.msra.mxu0 0
        %1105 = vmatprep.subr.bf16.mxu0 0
        %1106 = vmatpush1.bf16.msra.mxu0 0
        %1107 = vmatprep.subr.bf16.mxu0 0
        %1108 = vmatpush1.bf16.msra.mxu0 0
        %1109 = vmatprep.subr.bf16.mxu0 0
        %1110 = vmatpush1.bf16.msra.mxu0 0
        %1111 = vmatprep.subr.bf16.mxu0 0
        %1112 = vmatpush1.bf16.msra.mxu0 0
        %1113 = vmatprep.subr.bf16.mxu0 0
        %1114 = vmatpush1.bf16.msra.mxu0 0
        %1115 = vmatprep.subr.bf16.mxu0 0
        %1116 = vmatpush1.bf16.msra.mxu0 0
        %1117 = vmatprep.subr.bf16.mxu0 0
        %1118 = vmatpush1.bf16.msra.mxu0 0
        %1119 = vmatprep.subr.bf16.mxu0 0
        %1120 = vmatpush1.bf16.msra.mxu0 0
        %1121 = vmatprep.subr.bf16.mxu0 0
        %1122 = vmatpush1.bf16.msra.mxu0 0
        %1123 = vmatprep.subr.bf16.mxu0 0
        %1124 = vmatpush1.bf16.msra.mxu0 0
        %1125 = vmatprep.subr.bf16.mxu0 0
        %1126 = vmatpush1.bf16.msra.mxu0 0
        %1127 = vmatprep.subr.bf16.mxu0 0
        %1128 = vmatpush1.bf16.msra.mxu0 0
        %1129 = vmatprep.subr.bf16.mxu0 0
        %1130 = vmatpush1.bf16.msra.mxu0 0
        %1131 = vmatprep.subr.bf16.mxu0 0
        %1132 = vmatpush1.bf16.msra.mxu0 0
        %1133 = vmatprep.mubr.bf16.mxu0 0
        %1134 = vmatmul.mubr.bf16.gmra.mrb[0].mxu0 %v1099
        %v1135 = vpop.f32.mrb[0].mxu0
        %v1136 = vadd.f32 0.0, %v1135
        %v1137 = vpop.f32.mrb[0].mxu0
        %v1138 = vpop.f32.mrb[0].mxu0
        %v1139 = vadd.f32 0.0, %v1138
        %v1140 = vpop.f32.mrb[0].mxu0
        %1141 = vdwg.mxu0
        %1142 = vmatprep.subr.bf16.mxu0 0
        %1143 = vmatpush1.bf16.msra.mxu0 %v733
        %1144 = vmatprep.subr.bf16.mxu0 0
        %1145 = vmatpush1.bf16.msra.mxu0 0
        %1146 = vmatprep.subr.bf16.mxu0 0
        %1147 = vmatpush1.bf16.msra.mxu0 0
        %1148 = vmatprep.subr.bf16.mxu0 0
        %1149 = vmatpush1.bf16.msra.mxu0 0
        %1150 = vmatprep.subr.bf16.mxu0 0
        %1151 = vmatpush1.bf16.msra.mxu0 0
        %1152 = vmatprep.subr.bf16.mxu0 0
        %1153 = vmatpush1.bf16.msra.mxu0 0
        %1154 = vmatprep.subr.bf16.mxu0 0
        %1155 = vmatpush1.bf16.msra.mxu0 0
        %1156 = vmatprep.subr.bf16.mxu0 0
        %1157 = vmatpush1.bf16.msra.mxu0 0
        %1158 = vmatprep.subr.bf16.mxu0 0
        %1159 = vmatpush1.bf16.msra.mxu0 0
        %1160 = vmatprep.subr.bf16.mxu0 0
        %1161 = vmatpush1.bf16.msra.mxu0 0
        %1162 = vmatprep.subr.bf16.mxu0 0
        %1163 = vmatpush1.bf16.msra.mxu0 0
        %1164 = vmatprep.subr.bf16.mxu0 0
        %1165 = vmatpush1.bf16.msra.mxu0 0
        %1166 = vmatprep.subr.bf16.mxu0 0
        %1167 = vmatpush1.bf16.msra.mxu0 0
        %1168 = vmatprep.subr.bf16.mxu0 0
        %1169 = vmatpush1.bf16.msra.mxu0 0
        %1170 = vmatprep.subr.bf16.mxu0 0
        %1171 = vmatpush1.bf16.msra.mxu0 0
        %1172 = vmatprep.subr.bf16.mxu0 0
        %1173 = vmatpush1.bf16.msra.mxu0 0
        %1174 = vmatprep.mubr.bf16.mxu0 0
        %1175 = vmatmul.mubr.bf16.gmra.mrb[0].mxu0 %v1099
        %v1176 = vpop.f32.mrb[0].mxu0
        %v1177 = vadd.f32 0.0, %v1176
        %v1178 = vpop.f32.mrb[0].mxu0
        %v1179 = vpop.f32.mrb[0].mxu0
        %v1180 = vadd.f32 0.0, %v1179
        %v1181 = vpop.f32.mrb[0].mxu0
        %1182 = vdwg.mxu0
        %1183 = vmatprep.subr.bf16.mxu0 0
        %1184 = vmatpush1.bf16.msra.mxu0 %v734
        %1185 = vmatprep.subr.bf16.mxu0 0
        %1186 = vmatpush1.bf16.msra.mxu0 0
        %1187 = vmatprep.subr.bf16.mxu0 0
        %1188 = vmatpush1.bf16.msra.mxu0 0
        %1189 = vmatprep.subr.bf16.mxu0 0
        %1190 = vmatpush1.bf16.msra.mxu0 0
        %1191 = vmatprep.subr.bf16.mxu0 0
        %1192 = vmatpush1.bf16.msra.mxu0 0
        %1193 = vmatprep.subr.bf16.mxu0 0
        %1194 = vmatpush1.bf16.msra.mxu0 0
        %1195 = vmatprep.subr.bf16.mxu0 0
        %1196 = vmatpush1.bf16.msra.mxu0 0
        %1197 = vmatprep.subr.bf16.mxu0 0
        %1198 = vmatpush1.bf16.msra.mxu0 0
        %1199 = vmatprep.subr.bf16.mxu0 0
        %1200 = vmatpush1.bf16.msra.mxu0 0
        %1201 = vmatprep.subr.bf16.mxu0 0
        %1202 = vmatpush1.bf16.msra.mxu0 0
        %1203 = vmatprep.subr.bf16.mxu0 0
        %1204 = vmatpush1.bf16.msra.mxu0 0
        %1205 = vmatprep.subr.bf16.mxu0 0
        %1206 = vmatpush1.bf16.msra.mxu0 0
        %1207 = vmatprep.subr.bf16.mxu0 0
        %1208 = vmatpush1.bf16.msra.mxu0 0
        %1209 = vmatprep.subr.bf16.mxu0 0
        %1210 = vmatpush1.bf16.msra.mxu0 0
        %1211 = vmatprep.subr.bf16.mxu0 0
        %1212 = vmatpush1.bf16.msra.mxu0 0
        %1213 = vmatprep.subr.bf16.mxu0 0
        %1214 = vmatpush1.bf16.msra.mxu0 0
        %1215 = vmatprep.mubr.bf16.mxu0 0
        %1216 = vmatmul.mubr.bf16.gmra.mrb[0].mxu0 %v1099
        %v1217 = vpop.f32.mrb[0].mxu0
        %v1218 = vadd.f32 0.0, %v1217
        %v1219 = vpop.f32.mrb[0].mxu0
        %v1220 = vpop.f32.mrb[0].mxu0
        %v1221 = vadd.f32 0.0, %v1220
        %v1222 = vpop.f32.mrb[0].mxu0
        %1223 = vdwg.mxu0
        %1224 = vmatprep.subr.bf16.mxu0 0
        %1225 = vmatpush1.bf16.msra.mxu0 %v735
        %1226 = vmatprep.subr.bf16.mxu0 0
        %1227 = vmatpush1.bf16.msra.mxu0 0
        %1228 = vmatprep.subr.bf16.mxu0 0
        %1229 = vmatpush1.bf16.msra.mxu0 0
        %1230 = vmatprep.subr.bf16.mxu0 0
        %1231 = vmatpush1.bf16.msra.mxu0 0
        %1232 = vmatprep.subr.bf16.mxu0 0
        %1233 = vmatpush1.bf16.msra.mxu0 0
        %1234 = vmatprep.subr.bf16.mxu0 0
        %1235 = vmatpush1.bf16.msra.mxu0 0
        %1236 = vmatprep.subr.bf16.mxu0 0
        %1237 = vmatpush1.bf16.msra.mxu0 0
        %1238 = vmatprep.subr.bf16.mxu0 0
        %1239 = vmatpush1.bf16.msra.mxu0 0
        %1240 = vmatprep.subr.bf16.mxu0 0
        %1241 = vmatpush1.bf16.msra.mxu0 0
        %1242 = vmatprep.subr.bf16.mxu0 0
        %1243 = vmatpush1.bf16.msra.mxu0 0
        %1244 = vmatprep.subr.bf16.mxu0 0
        %1245 = vmatpush1.bf16.msra.mxu0 0
        %1246 = vmatprep.subr.bf16.mxu0 0
        %1247 = vmatpush1.bf16.msra.mxu0 0
        %1248 = vmatprep.subr.bf16.mxu0 0
        %1249 = vmatpush1.bf16.msra.mxu0 0
        %1250 = vmatprep.subr.bf16.mxu0 0
        %1251 = vmatpush1.bf16.msra.mxu0 0
        %1252 = vmatprep.subr.bf16.mxu0 0
        %1253 = vmatpush1.bf16.msra.mxu0 0
        %1254 = vmatprep.subr.bf16.mxu0 0
        %1255 = vmatpush1.bf16.msra.mxu0 0
        %1256 = vmatprep.mubr.bf16.mxu0 0
        %1257 = vmatmul.mubr.bf16.gmra.mrb[0].mxu0 %v1099
        %v1258 = vpop.f32.mrb[0].mxu0
        %v1259 = vadd.f32 0.0, %v1258
        %v1260 = vpop.f32.mrb[0].mxu0
        %v1261 = vpop.f32.mrb[0].mxu0
        %v1262 = vadd.f32 0.0, %v1261
        %v1263 = vpop.f32.mrb[0].mxu0
        %1264 = vdwg.mxu0
        %v1265 = vpack.c.bf16 %v1139, %v1136
        %v1266 = vpack.c.bf16 %v1180, %v1177
        %v1267 = vpack.c.bf16 %v1221, %v1218
        %v1268 = vpack.c.bf16 %v1262, %v1259
        %1269 = vmatprep.subr.bf16.mxu0 0
        %1270 = vmatpush1.bf16.msra.mxu0 %v1265
        %1271 = vmatprep.subr.bf16.mxu0 0
        %1272 = vmatpush1.bf16.msra.mxu0 0
        %1273 = vmatprep.subr.bf16.mxu0 0
        %1274 = vmatpush1.bf16.msra.mxu0 0
        %1275 = vmatprep.subr.bf16.mxu0 0
        %1276 = vmatpush1.bf16.msra.mxu0 0
        %1277 = vmatprep.subr.bf16.mxu0 0
        %1278 = vmatpush1.bf16.msra.mxu0 0
        %1279 = vmatprep.subr.bf16.mxu0 0
        %1280 = vmatpush1.bf16.msra.mxu0 0
        %1281 = vmatprep.subr.bf16.mxu0 0
        %1282 = vmatpush1.bf16.msra.mxu0 0
        %1283 = vmatprep.subr.bf16.mxu0 0
        %1284 = vmatpush1.bf16.msra.mxu0 0
        %1285 = vmatprep.subr.bf16.mxu0 0
        %1286 = vmatpush1.bf16.msra.mxu0 0
        %1287 = vmatprep.subr.bf16.mxu0 0
        %1288 = vmatpush1.bf16.msra.mxu0 0
        %1289 = vmatprep.subr.bf16.mxu0 0
        %1290 = vmatpush1.bf16.msra.mxu0 0
        %1291 = vmatprep.subr.bf16.mxu0 0
        %1292 = vmatpush1.bf16.msra.mxu0 0
        %1293 = vmatprep.subr.bf16.mxu0 0
        %1294 = vmatpush1.bf16.msra.mxu0 0
        %1295 = vmatprep.subr.bf16.mxu0 0
        %1296 = vmatpush1.bf16.msra.mxu0 0
        %1297 = vmatprep.subr.bf16.mxu0 0
        %1298 = vmatpush1.bf16.msra.mxu0 0
        %1299 = vmatprep.subr.bf16.mxu0 0
        %1300 = vmatpush1.bf16.msra.mxu0 0
        %1301 = vmatprep.mubr.bf16.mxu0 0
        %1302 = vmatmul.mubr.bf16.gmra.mrb[0].mxu0 %v1099
        %v1303 = vpop.f32.mrb[0].mxu0
        %v1304 = vadd.f32 0.0, %v1303
        %v1305 = vpop.f32.mrb[0].mxu0
        %v1306 = vpop.f32.mrb[0].mxu0
        %v1307 = vadd.f32 0.0, %v1306
        %v1308 = vpop.f32.mrb[0].mxu0
        %1309 = vdwg.mxu0
        %1310 = vmatprep.subr.bf16.mxu0 0
        %1311 = vmatpush1.bf16.msra.mxu0 %v1266
        %1312 = vmatprep.subr.bf16.mxu0 0
        %1313 = vmatpush1.bf16.msra.mxu0 0
        %1314 = vmatprep.subr.bf16.mxu0 0
        %1315 = vmatpush1.bf16.msra.mxu0 0
        %1316 = vmatprep.subr.bf16.mxu0 0
        %1317 = vmatpush1.bf16.msra.mxu0 0
        %1318 = vmatprep.subr.bf16.mxu0 0
        %1319 = vmatpush1.bf16.msra.mxu0 0
        %1320 = vmatprep.subr.bf16.mxu0 0
        %1321 = vmatpush1.bf16.msra.mxu0 0
        %1322 = vmatprep.subr.bf16.mxu0 0
        %1323 = vmatpush1.bf16.msra.mxu0 0
        %1324 = vmatprep.subr.bf16.mxu0 0
        %1325 = vmatpush1.bf16.msra.mxu0 0
        %1326 = vmatprep.subr.bf16.mxu0 0
        %1327 = vmatpush1.bf16.msra.mxu0 0
        %1328 = vmatprep.subr.bf16.mxu0 0
        %1329 = vmatpush1.bf16.msra.mxu0 0
        %1330 = vmatprep.subr.bf16.mxu0 0
        %1331 = vmatpush1.bf16.msra.mxu0 0
        %1332 = vmatprep.subr.bf16.mxu0 0
        %1333 = vmatpush1.bf16.msra.mxu0 0
        %1334 = vmatprep.subr.bf16.mxu0 0
        %1335 = vmatpush1.bf16.msra.mxu0 0
        %1336 = vmatprep.subr.bf16.mxu0 0
        %1337 = vmatpush1.bf16.msra.mxu0 0
        %1338 = vmatprep.subr.bf16.mxu0 0
        %1339 = vmatpush1.bf16.msra.mxu0 0
        %1340 = vmatprep.subr.bf16.mxu0 0
        %1341 = vmatpush1.bf16.msra.mxu0 0
        %1342 = vmatprep.mubr.bf16.mxu0 0
        %1343 = vmatmul.mubr.bf16.gmra.mrb[0].mxu0 %v1099
        %v1344 = vpop.f32.mrb[0].mxu0
        %v1345 = vadd.f32 0.0, %v1344
        %v1346 = vpop.f32.mrb[0].mxu0
        %v1347 = vpop.f32.mrb[0].mxu0
        %v1348 = vadd.f32 0.0, %v1347
        %v1349 = vpop.f32.mrb[0].mxu0
        %1350 = vdwg.mxu0
        %1351 = vmatprep.subr.bf16.mxu0 0
        %1352 = vmatpush1.bf16.msra.mxu0 %v1267
        %1353 = vmatprep.subr.bf16.mxu0 0
        %1354 = vmatpush1.bf16.msra.mxu0 0
        %1355 = vmatprep.subr.bf16.mxu0 0
        %1356 = vmatpush1.bf16.msra.mxu0 0
        %1357 = vmatprep.subr.bf16.mxu0 0
        %1358 = vmatpush1.bf16.msra.mxu0 0
        %1359 = vmatprep.subr.bf16.mxu0 0
        %1360 = vmatpush1.bf16.msra.mxu0 0
        %1361 = vmatprep.subr.bf16.mxu0 0
        %1362 = vmatpush1.bf16.msra.mxu0 0
        %1363 = vmatprep.subr.bf16.mxu0 0
        %1364 = vmatpush1.bf16.msra.mxu0 0
        %1365 = vmatprep.subr.bf16.mxu0 0
        %1366 = vmatpush1.bf16.msra.mxu0 0
        %1367 = vmatprep.subr.bf16.mxu0 0
        %1368 = vmatpush1.bf16.msra.mxu0 0
        %1369 = vmatprep.subr.bf16.mxu0 0
        %1370 = vmatpush1.bf16.msra.mxu0 0
        %1371 = vmatprep.subr.bf16.mxu0 0
        %1372 = vmatpush1.bf16.msra.mxu0 0
        %1373 = vmatprep.subr.bf16.mxu0 0
        %1374 = vmatpush1.bf16.msra.mxu0 0
        %1375 = vmatprep.subr.bf16.mxu0 0
        %1376 = vmatpush1.bf16.msra.mxu0 0
        %1377 = vmatprep.subr.bf16.mxu0 0
        %1378 = vmatpush1.bf16.msra.mxu0 0
        %1379 = vmatprep.subr.bf16.mxu0 0
        %1380 = vmatpush1.bf16.msra.mxu0 0
        %1381 = vmatprep.subr.bf16.mxu0 0
        %1382 = vmatpush1.bf16.msra.mxu0 0
        %1383 = vmatprep.mubr.bf16.mxu0 0
        %1384 = vmatmul.mubr.bf16.gmra.mrb[0].mxu0 %v1099
        %v1385 = vpop.f32.mrb[0].mxu0
        %v1386 = vadd.f32 0.0, %v1385
        %v1387 = vpop.f32.mrb[0].mxu0
        %v1388 = vpop.f32.mrb[0].mxu0
        %v1389 = vadd.f32 0.0, %v1388
        %v1390 = vpop.f32.mrb[0].mxu0
        %1391 = vdwg.mxu0
        %1392 = vmatprep.subr.bf16.mxu0 0
        %1393 = vmatpush1.bf16.msra.mxu0 %v1268
        %1394 = vmatprep.subr.bf16.mxu0 0
        %1395 = vmatpush1.bf16.msra.mxu0 0
        %1396 = vmatprep.subr.bf16.mxu0 0
        %1397 = vmatpush1.bf16.msra.mxu0 0
        %1398 = vmatprep.subr.bf16.mxu0 0
        %1399 = vmatpush1.bf16.msra.mxu0 0
        %1400 = vmatprep.subr.bf16.mxu0 0
        %1401 = vmatpush1.bf16.msra.mxu0 0
        %1402 = vmatprep.subr.bf16.mxu0 0
        %1403 = vmatpush1.bf16.msra.mxu0 0
        %1404 = vmatprep.subr.bf16.mxu0 0
        %1405 = vmatpush1.bf16.msra.mxu0 0
        %1406 = vmatprep.subr.bf16.mxu0 0
        %1407 = vmatpush1.bf16.msra.mxu0 0
        %1408 = vmatprep.subr.bf16.mxu0 0
        %1409 = vmatpush1.bf16.msra.mxu0 0
        %1410 = vmatprep.subr.bf16.mxu0 0
        %1411 = vmatpush1.bf16.msra.mxu0 0
        %1412 = vmatprep.subr.bf16.mxu0 0
        %1413 = vmatpush1.bf16.msra.mxu0 0
        %1414 = vmatprep.subr.bf16.mxu0 0
        %1415 = vmatpush1.bf16.msra.mxu0 0
        %1416 = vmatprep.subr.bf16.mxu0 0
        %1417 = vmatpush1.bf16.msra.mxu0 0
        %1418 = vmatprep.subr.bf16.mxu0 0
        %1419 = vmatpush1.bf16.msra.mxu0 0
        %1420 = vmatprep.subr.bf16.mxu0 0
        %1421 = vmatpush1.bf16.msra.mxu0 0
        %1422 = vmatprep.subr.bf16.mxu0 0
        %1423 = vmatpush1.bf16.msra.mxu0 0
        %1424 = vmatprep.mubr.bf16.mxu0 0
        %1425 = vmatmul.mubr.bf16.gmra.mrb[0].mxu0 %v1099
        %v1426 = vpop.f32.mrb[0].mxu0
        %v1427 = vadd.f32 0.0, %v1426
        %v1428 = vpop.f32.mrb[0].mxu0
        %v1429 = vpop.f32.mrb[0].mxu0
        %v1430 = vadd.f32 0.0, %v1429
        %v1431 = vpop.f32.mrb[0].mxu0
        %1432 = vdwg.mxu0
        %v1433 = vmul.f32 %v1304, 2.0
        %v1434 = vmul.f32 %v1307, 2.0
        %v1435 = vmul.f32 %v1345, 2.0
        %v1436 = vmul.f32 %v1348, 2.0
        %v1437 = vmul.f32 %v1386, 2.0
        %v1438 = vmul.f32 %v1389, 2.0
        %v1439 = vmul.f32 %v1427, 2.0
        %v1440 = vmul.f32 %v1430, 2.0
        %v1441 = vsub.f32 %v1433, %v724
        %v1442 = vsub.f32 %v1434, %v725
        %v1443 = vsub.f32 %v1435, %v726
        %v1444 = vsub.f32 %v1436, %v727
        %v1445 = vsub.f32 %v1437, %v728
        %v1446 = vsub.f32 %v1438, %v729
        %v1447 = vsub.f32 %v1439, %v730
        %v1448 = vsub.f32 %v1440, %v731
        %v1449 = vpack.c.bf16 %v1086, %v1085
        %v1450 = vpack.c.bf16 %v1088, %v1087
        %v1451 = vpack.c.bf16 %v1090, %v1089
        %v1452 = vpack.c.bf16 %v1092, %v1091
        %v1453 = vpack.c.bf16 %v1442, %v1441
        %v1454 = vpack.c.bf16 %v1444, %v1443
        %v1455 = vpack.c.bf16 %v1446, %v1445
        %v1456 = vpack.c.bf16 %v1448, %v1447
        %1461 = vrot.lane.b32.xlu0 %v909, 34
        %v1462 = vpop.permute.xlu0 %1461
        %1463 = vrot.lane.b32.xlu0 %v910, 34
        %v1464 = vpop.permute.xlu0 %1463
        %1465 = vrot.lane.b32.xlu0 %v911, 34
        %v1466 = vpop.permute.xlu0 %1465
        %1467 = vrot.lane.b32.xlu0 %v912, 34
        %v1468 = vpop.permute.xlu0 %1467
        %1473 = vrot.lane.b32.xlu0 %v1449, 68
        %v1474 = vpop.permute.xlu0 %1473
        %1475 = vrot.lane.b32.xlu0 %v1450, 68
        %v1476 = vpop.permute.xlu0 %1475
        %1477 = vrot.lane.b32.xlu0 %v1451, 68
        %v1478 = vpop.permute.xlu0 %1477
        %1479 = vrot.lane.b32.xlu0 %v1452, 68
        %v1480 = vpop.permute.xlu0 %1479
        %1485 = vrot.lane.b32.xlu0 %v1265, 102
        %v1486 = vpop.permute.xlu0 %1485
        %1487 = vrot.lane.b32.xlu0 %v1266, 102
        %v1488 = vpop.permute.xlu0 %1487
        %1489 = vrot.lane.b32.xlu0 %v1267, 102
        %v1490 = vpop.permute.xlu0 %1489
        %1491 = vrot.lane.b32.xlu0 %v1268, 102
        %v1492 = vpop.permute.xlu0 %1491
        %1497 = vrot.lane.b32.xlu0 %v1453, 8
        %v1498 = vpop.permute.xlu0 %1497
        %1499 = vrot.lane.b32.xlu0 %v1454, 8
        %v1500 = vpop.permute.xlu0 %1499
        %1501 = vrot.lane.b32.xlu0 %v1455, 8
        %v1502 = vpop.permute.xlu0 %1501
        %1503 = vrot.lane.b32.xlu0 %v1456, 8
        %v1504 = vpop.permute.xlu0 %1503
        %vm1505 = vcmask 277504
        %v1508 = vsel %vm1505, %v732, %v1462
        %v1511 = vsel %vm1505, %v733, %v1464
        %v1514 = vsel %vm1505, %v734, %v1466
        %v1517 = vsel %vm1505, %v735, %v1468
        %vm1518 = vcmask 556032
        %v1520 = vsel %vm1518, %v1508, %v1474
        %v1522 = vsel %vm1518, %v1511, %v1476
        %v1524 = vsel %vm1518, %v1514, %v1478
        %v1526 = vsel %vm1518, %v1517, %v1480
        %vm1527 = vcmask 834560
        %v1529 = vsel %vm1527, %v1520, %v1486
        %v1532 = vsel %vm1527, %v1522, %v1488
        %v1535 = vsel %vm1527, %v1524, %v1490
        %v1538 = vsel %vm1527, %v1526, %v1492
        %vm1540 = vcmask 64512
        %v1542 = vsel %vm1540, %v1486, %v1498
        %v1544 = vsel %vm1540, %v1488, %v1500
        %v1546 = vsel %vm1540, %v1490, %v1502
        %v1548 = vsel %vm1540, %v1492, %v1504
        %v1549 = vld [vmem:[%s4] sm:$0xf]
        %v1550 = vld [vmem:[%s4 + $0x4] sm:$0xf]
        %v1551 = vld [vmem:[%s4 + $0x8] sm:$0xf]
        %v1552 = vld [vmem:[%s4 + $0xc] sm:$0xf]
        %v1553 = vld [vmem:[%s4 + $0x10] sm:$0xf]
        %v1554 = vld [vmem:[%s4 + $0x14] sm:$0xf]
        %v1555 = vld [vmem:[%s4 + $0x18] sm:$0xf]
        %v1556 = vld [vmem:[%s4 + $0x1c] sm:$0xf]
        %v1557 = vld [vmem:[%s4 + $0x20] sm:$0xf]
        %v1558 = vld [vmem:[%s4 + $0x24] sm:$0xf]
        %v1559 = vld [vmem:[%s4 + $0x28] sm:$0xf]
        %v1560 = vld [vmem:[%s4 + $0x2c] sm:$0xf]
        %v1561 = vld [vmem:[%s4 + $0x30] sm:$0xf]
        %v1562 = vld [vmem:[%s4 + $0x34] sm:$0xf]
        %v1563 = vld [vmem:[%s4 + $0x38] sm:$0xf]
        %v1564 = vld [vmem:[%s4 + $0x3c] sm:$0xf]
        %v1565 = vld [vmem:[%s4 + $0x40] sm:$0xf]
        %v1566 = vld [vmem:[%s4 + $0x44] sm:$0xf]
        %v1567 = vld [vmem:[%s4 + $0x48] sm:$0xf]
        %v1568 = vld [vmem:[%s4 + $0x4c] sm:$0xf]
        %v1569 = vld [vmem:[%s4 + $0x50] sm:$0xf]
        %v1570 = vld [vmem:[%s4 + $0x54] sm:$0x1]
        %v1571 = vld [vmem:[%s5] sm:$0x1]
        %v1573 = vlaneseq
        %v1574 = vshrl.u32 %v1573, 7
        %v1575 = vsub.s32 0, %v1574
        %v1576 = vrot.slane %v1571, %v1575
        %v1600 = vunpack.c.l.b16 %v1549
        %v1601 = vunpack.c.l.b16 %v1550
        %v1602 = vunpack.c.l.b16 %v1551
        %v1603 = vunpack.c.l.b16 %v1552
        %v1604 = vunpack.c.l.b16 %v1553
        %v1605 = vunpack.c.l.b16 %v1554
        %v1606 = vunpack.c.l.b16 %v1555
        %v1607 = vunpack.c.l.b16 %v1556
        %v1608 = vunpack.c.l.b16 %v1557
        %v1609 = vunpack.c.l.b16 %v1558
        %v1610 = vunpack.c.l.b16 %v1559
        %v1611 = vunpack.c.l.b16 %v1560
        %v1612 = vunpack.c.l.b16 %v1561
        %v1613 = vunpack.c.l.b16 %v1562
        %v1614 = vunpack.c.l.b16 %v1563
        %v1615 = vunpack.c.l.b16 %v1564
        %v1616 = vunpack.c.l.b16 %v1565
        %v1617 = vunpack.c.l.b16 %v1566
        %v1618 = vunpack.c.l.b16 %v1567
        %v1619 = vunpack.c.l.b16 %v1568
        %v1620 = vunpack.c.l.b16 %v1569
        %v1621 = vunpack.c.l.b16 %v1570
        %v1622 = vpack.c.b16 %v1601, %v1600
        %v1623 = vpack.c.b16 %v1603, %v1602
        %v1624 = vpack.c.b16 %v1605, %v1604
        %v1625 = vpack.c.b16 %v1607, %v1606
        %v1626 = vpack.c.b16 %v1609, %v1608
        %v1627 = vpack.c.b16 %v1611, %v1610
        %v1628 = vpack.c.b16 %v1613, %v1612
        %v1629 = vpack.c.b16 %v1615, %v1614
        %v1630 = vpack.c.b16 %v1617, %v1616
        %v1631 = vpack.c.b16 %v1619, %v1618
        %v1632 = vpack.c.b16 %v1621, %v1620
        %vm1643 = vcmask 343040
        %v1644 = vsel %vm1643, %v1542, 0
        %v1646 = vsel %vm1643, %v1544, 0
        %v1648 = vsel %vm1643, %v1546, 0
        %v1650 = vsel %vm1643, %v1548, 0
        %vm1652 = vcmask 1044480
        %v1654 = vsel %vm1652, %v1632, 0
        %1656 = vmatprep.subr.bf16.mxu0 0
        %1657 = vmatpush1.bf16.msra.mxu0 %v1622
        %1658 = vmatprep.subr.bf16.mxu0 0
        %1659 = vmatpush1.bf16.msra.mxu0 %v1623
        %1660 = vmatprep.subr.bf16.mxu0 0
        %1661 = vmatpush1.bf16.msra.mxu0 %v1624
        %1662 = vmatprep.subr.bf16.mxu0 0
        %1663 = vmatpush1.bf16.msra.mxu0 %v1625
        %1664 = vmatprep.subr.bf16.mxu0 0
        %1665 = vmatpush1.bf16.msra.mxu0 %v1626
        %1666 = vmatprep.subr.bf16.mxu0 0
        %1667 = vmatpush1.bf16.msra.mxu0 %v1627
        %1668 = vmatprep.subr.bf16.mxu0 0
        %1669 = vmatpush1.bf16.msra.mxu0 %v1628
        %1670 = vmatprep.subr.bf16.mxu0 0
        %1671 = vmatpush1.bf16.msra.mxu0 %v1629
        %1672 = vmatprep.subr.bf16.mxu0 0
        %1673 = vmatpush1.bf16.msra.mxu0 %v1630
        %1674 = vmatprep.subr.bf16.mxu0 0
        %1675 = vmatpush1.bf16.msra.mxu0 %v1631
        %1676 = vmatprep.subr.bf16.mxu0 0
        %1677 = vmatpush1.bf16.msra.mxu0 %v1654
        %1678 = vmatprep.subr.bf16.mxu0 0
        %1679 = vmatpush1.bf16.msra.mxu0 0
        %1680 = vmatprep.subr.bf16.mxu0 0
        %1681 = vmatpush1.bf16.msra.mxu0 0
        %1682 = vmatprep.subr.bf16.mxu0 0
        %1683 = vmatpush1.bf16.msra.mxu0 0
        %1684 = vmatprep.subr.bf16.mxu0 0
        %1685 = vmatpush1.bf16.msra.mxu0 0
        %1686 = vmatprep.subr.bf16.mxu0 0
        %1687 = vmatpush1.bf16.msra.mxu0 0
        %1688 = vmatprep.mubr.bf16.mxu0 %v1644
        %1689 = vmatmul.mubr.bf16.gmra.mrb[0].mxu0 %v1529
        %v1690 = vpop.f32.mrb[0].mxu0
        %v1691 = vadd.f32 %v1576, %v1690
        %v1692 = vpop.f32.mrb[0].mxu0
        %v1693 = vpop.f32.mrb[0].mxu0
        %v1694 = vadd.f32 %v1576, %v1693
        %v1695 = vpop.f32.mrb[0].mxu0
        %1696 = vmatprep.mubr.bf16.mxu0 %v1646
        %1697 = vmatmul.mubr.bf16.gmra.mrb[0].mxu0 %v1532
        %v1698 = vpop.f32.mrb[0].mxu0
        %v1699 = vadd.f32 %v1576, %v1698
        %v1700 = vpop.f32.mrb[0].mxu0
        %v1701 = vpop.f32.mrb[0].mxu0
        %v1702 = vadd.f32 %v1576, %v1701
        %v1703 = vpop.f32.mrb[0].mxu0
        %1704 = vmatprep.mubr.bf16.mxu0 %v1648
        %1705 = vmatmul.mubr.bf16.gmra.mrb[0].mxu0 %v1535
        %v1706 = vpop.f32.mrb[0].mxu0
        %v1707 = vadd.f32 %v1576, %v1706
        %v1708 = vpop.f32.mrb[0].mxu0
        %v1709 = vpop.f32.mrb[0].mxu0
        %v1710 = vadd.f32 %v1576, %v1709
        %v1711 = vpop.f32.mrb[0].mxu0
        %1712 = vmatprep.mubr.bf16.mxu0 %v1650
        %1713 = vmatmul.mubr.bf16.gmra.mrb[0].mxu0 %v1538
        %v1714 = vpop.f32.mrb[0].mxu0
        %v1715 = vadd.f32 %v1576, %v1714
        %v1716 = vpop.f32.mrb[0].mxu0
        %v1717 = vpop.f32.mrb[0].mxu0
        %v1718 = vadd.f32 %v1576, %v1717
        %v1719 = vpop.f32.mrb[0].mxu0
        %1720 = vdwg.mxu0
        %v1721 = vxor.u32 %v1691, 2147483648
        %v1722 = vxor.u32 %v1694, 2147483648
        %v1723 = vxor.u32 %v1699, 2147483648
        %v1724 = vxor.u32 %v1702, 2147483648
        %v1725 = vxor.u32 %v1707, 2147483648
        %v1726 = vxor.u32 %v1710, 2147483648
        %v1727 = vxor.u32 %v1715, 2147483648
        %v1728 = vxor.u32 %v1718, 2147483648
        %v1729 = vmul.f32 %v1721, 1.442695
        %v1730 = vpow.pop %v1729
        %v1731 = vmul.f32 %v1722, 1.442695
        %v1732 = vpow.pop %v1731
        %v1733 = vmul.f32 %v1723, 1.442695
        %v1734 = vpow.pop %v1733
        %v1735 = vmul.f32 %v1724, 1.442695
        %v1736 = vpow.pop %v1735
        %v1737 = vmul.f32 %v1725, 1.442695
        %v1738 = vpow.pop %v1737
        %v1739 = vmul.f32 %v1726, 1.442695
        %v1740 = vpow.pop %v1739
        %v1741 = vmul.f32 %v1727, 1.442695
        %v1742 = vpow.pop %v1741
        %v1743 = vmul.f32 %v1728, 1.442695
        %v1744 = vpow.pop %v1743
        %v1745 = vadd.f32 %v1730, 1.0
        %v1746 = vadd.f32 %v1732, 1.0
        %v1747 = vadd.f32 %v1734, 1.0
        %v1748 = vadd.f32 %v1736, 1.0
        %v1749 = vadd.f32 %v1738, 1.0
        %v1750 = vadd.f32 %v1740, 1.0
        %v1751 = vadd.f32 %v1742, 1.0
        %v1752 = vadd.f32 %v1744, 1.0
        %v1753 = vrcp.pop %v1745
        %v1754 = vmul.f32 1.0, %v1753
        %v1755 = vrcp.pop %v1746
        %v1756 = vmul.f32 1.0, %v1755
        %v1757 = vrcp.pop %v1747
        %v1758 = vmul.f32 1.0, %v1757
        %v1759 = vrcp.pop %v1748
        %v1760 = vmul.f32 1.0, %v1759
        %v1761 = vrcp.pop %v1749
        %v1762 = vmul.f32 1.0, %v1761
        %v1763 = vrcp.pop %v1750
        %v1764 = vmul.f32 1.0, %v1763
        %v1765 = vrcp.pop %v1751
        %v1766 = vmul.f32 1.0, %v1765
        %v1767 = vrcp.pop %v1752
        %v1768 = vmul.f32 1.0, %v1767
        %v1769 = vmul.f32 %v1754, %v683
        %v1770 = vmul.f32 %v1756, %v684
        %v1771 = vmul.f32 %v1758, %v685
        %v1772 = vmul.f32 %v1760, %v686
        %v1773 = vmul.f32 %v1762, %v687
        %v1774 = vmul.f32 %v1764, %v688
        %v1775 = vmul.f32 %v1766, %v689
        %v1776 = vmul.f32 %v1768, %v690
        %1785 = vrot.lane.b32.xlu0 %v1769, 2
        %v1786 = vpop.permute.xlu0 %1785
        %1787 = vrot.lane.b32.xlu0 %v1770, 2
        %v1788 = vpop.permute.xlu0 %1787
        %1789 = vrot.lane.b32.xlu0 %v1771, 2
        %v1790 = vpop.permute.xlu0 %1789
        %1791 = vrot.lane.b32.xlu0 %v1772, 2
        %v1792 = vpop.permute.xlu0 %1791
        %1793 = vrot.lane.b32.xlu0 %v1773, 2
        %v1794 = vpop.permute.xlu0 %1793
        %1795 = vrot.lane.b32.xlu0 %v1774, 2
        %v1796 = vpop.permute.xlu0 %1795
        %1797 = vrot.lane.b32.xlu0 %v1775, 2
        %v1798 = vpop.permute.xlu0 %1797
        %1799 = vrot.lane.b32.xlu0 %v1776, 2
        %v1800 = vpop.permute.xlu0 %1799
        %v1809 = vsel %vm723, %v675, %v1786
        %v1810 = vsel %vm723, %v676, %v1788
        %v1811 = vsel %vm723, %v677, %v1790
        %v1812 = vsel %vm723, %v678, %v1792
        %v1813 = vsel %vm723, %v679, %v1794
        %v1814 = vsel %vm723, %v680, %v1796
        %v1815 = vsel %vm723, %v681, %v1798
        %v1816 = vsel %vm723, %v682, %v1800
        %v1817 = vpack.c.bf16 %v1810, %v1809
        %v1818 = vpack.c.bf16 %v1812, %v1811
        %v1819 = vpack.c.bf16 %v1814, %v1813
        %v1820 = vpack.c.bf16 %v1816, %v1815
        %1821 = vmatprep.subr.bf16.mxu0 0
        %1822 = vmatpush1.bf16.msra.mxu0 %v1817
        %1823 = vmatprep.subr.bf16.mxu0 0
        %1824 = vmatpush1.bf16.msra.mxu0 0
        %1825 = vmatprep.subr.bf16.mxu0 0
        %1826 = vmatpush1.bf16.msra.mxu0 0
        %1827 = vmatprep.subr.bf16.mxu0 0
        %1828 = vmatpush1.bf16.msra.mxu0 0
        %1829 = vmatprep.subr.bf16.mxu0 0
        %1830 = vmatpush1.bf16.msra.mxu0 0
        %1831 = vmatprep.subr.bf16.mxu0 0
        %1832 = vmatpush1.bf16.msra.mxu0 0
        %1833 = vmatprep.subr.bf16.mxu0 0
        %1834 = vmatpush1.bf16.msra.mxu0 0
        %1835 = vmatprep.subr.bf16.mxu0 0
        %1836 = vmatpush1.bf16.msra.mxu0 0
        %1837 = vmatprep.subr.bf16.mxu0 0
        %1838 = vmatpush1.bf16.msra.mxu0 0
        %1839 = vmatprep.subr.bf16.mxu0 0
        %1840 = vmatpush1.bf16.msra.mxu0 0
        %1841 = vmatprep.subr.bf16.mxu0 0
        %1842 = vmatpush1.bf16.msra.mxu0 0
        %1843 = vmatprep.subr.bf16.mxu0 0
        %1844 = vmatpush1.bf16.msra.mxu0 0
        %1845 = vmatprep.subr.bf16.mxu0 0
        %1846 = vmatpush1.bf16.msra.mxu0 0
        %1847 = vmatprep.subr.bf16.mxu0 0
        %1848 = vmatpush1.bf16.msra.mxu0 0
        %1849 = vmatprep.subr.bf16.mxu0 0
        %1850 = vmatpush1.bf16.msra.mxu0 0
        %1851 = vmatprep.subr.bf16.mxu0 0
        %1852 = vmatpush1.bf16.msra.mxu0 0
        %1853 = vmatprep.mubr.bf16.mxu0 0
        %1854 = vmatmul.mubr.bf16.gmra.mrb[0].mxu0 %v743
        %v1855 = vpop.f32.mrb[0].mxu0
        %v1856 = vadd.f32 0.0, %v1855
        %v1857 = vpop.f32.mrb[0].mxu0
        %v1858 = vpop.f32.mrb[0].mxu0
        %v1859 = vadd.f32 0.0, %v1858
        %v1860 = vpop.f32.mrb[0].mxu0
        %1861 = vdwg.mxu0
        %1862 = vmatprep.subr.bf16.mxu0 0
        %1863 = vmatpush1.bf16.msra.mxu0 %v1818
        %1864 = vmatprep.subr.bf16.mxu0 0
        %1865 = vmatpush1.bf16.msra.mxu0 0
        %1866 = vmatprep.subr.bf16.mxu0 0
        %1867 = vmatpush1.bf16.msra.mxu0 0
        %1868 = vmatprep.subr.bf16.mxu0 0
        %1869 = vmatpush1.bf16.msra.mxu0 0
        %1870 = vmatprep.subr.bf16.mxu0 0
        %1871 = vmatpush1.bf16.msra.mxu0 0
        %1872 = vmatprep.subr.bf16.mxu0 0
        %1873 = vmatpush1.bf16.msra.mxu0 0
        %1874 = vmatprep.subr.bf16.mxu0 0
        %1875 = vmatpush1.bf16.msra.mxu0 0
        %1876 = vmatprep.subr.bf16.mxu0 0
        %1877 = vmatpush1.bf16.msra.mxu0 0
        %1878 = vmatprep.subr.bf16.mxu0 0
        %1879 = vmatpush1.bf16.msra.mxu0 0
        %1880 = vmatprep.subr.bf16.mxu0 0
        %1881 = vmatpush1.bf16.msra.mxu0 0
        %1882 = vmatprep.subr.bf16.mxu0 0
        %1883 = vmatpush1.bf16.msra.mxu0 0
        %1884 = vmatprep.subr.bf16.mxu0 0
        %1885 = vmatpush1.bf16.msra.mxu0 0
        %1886 = vmatprep.subr.bf16.mxu0 0
        %1887 = vmatpush1.bf16.msra.mxu0 0
        %1888 = vmatprep.subr.bf16.mxu0 0
        %1889 = vmatpush1.bf16.msra.mxu0 0
        %1890 = vmatprep.subr.bf16.mxu0 0
        %1891 = vmatpush1.bf16.msra.mxu0 0
        %1892 = vmatprep.subr.bf16.mxu0 0
        %1893 = vmatpush1.bf16.msra.mxu0 0
        %1894 = vmatprep.mubr.bf16.mxu0 0
        %1895 = vmatmul.mubr.bf16.gmra.mrb[0].mxu0 %v743
        %v1896 = vpop.f32.mrb[0].mxu0
        %v1897 = vadd.f32 0.0, %v1896
        %v1898 = vpop.f32.mrb[0].mxu0
        %v1899 = vpop.f32.mrb[0].mxu0
        %v1900 = vadd.f32 0.0, %v1899
        %v1901 = vpop.f32.mrb[0].mxu0
        %1902 = vdwg.mxu0
        %1903 = vmatprep.subr.bf16.mxu0 0
        %1904 = vmatpush1.bf16.msra.mxu0 %v1819
        %1905 = vmatprep.subr.bf16.mxu0 0
        %1906 = vmatpush1.bf16.msra.mxu0 0
        %1907 = vmatprep.subr.bf16.mxu0 0
        %1908 = vmatpush1.bf16.msra.mxu0 0
        %1909 = vmatprep.subr.bf16.mxu0 0
        %1910 = vmatpush1.bf16.msra.mxu0 0
        %1911 = vmatprep.subr.bf16.mxu0 0
        %1912 = vmatpush1.bf16.msra.mxu0 0
        %1913 = vmatprep.subr.bf16.mxu0 0
        %1914 = vmatpush1.bf16.msra.mxu0 0
        %1915 = vmatprep.subr.bf16.mxu0 0
        %1916 = vmatpush1.bf16.msra.mxu0 0
        %1917 = vmatprep.subr.bf16.mxu0 0
        %1918 = vmatpush1.bf16.msra.mxu0 0
        %1919 = vmatprep.subr.bf16.mxu0 0
        %1920 = vmatpush1.bf16.msra.mxu0 0
        %1921 = vmatprep.subr.bf16.mxu0 0
        %1922 = vmatpush1.bf16.msra.mxu0 0
        %1923 = vmatprep.subr.bf16.mxu0 0
        %1924 = vmatpush1.bf16.msra.mxu0 0
        %1925 = vmatprep.subr.bf16.mxu0 0
        %1926 = vmatpush1.bf16.msra.mxu0 0
        %1927 = vmatprep.subr.bf16.mxu0 0
        %1928 = vmatpush1.bf16.msra.mxu0 0
        %1929 = vmatprep.subr.bf16.mxu0 0
        %1930 = vmatpush1.bf16.msra.mxu0 0
        %1931 = vmatprep.subr.bf16.mxu0 0
        %1932 = vmatpush1.bf16.msra.mxu0 0
        %1933 = vmatprep.subr.bf16.mxu0 0
        %1934 = vmatpush1.bf16.msra.mxu0 0
        %1935 = vmatprep.mubr.bf16.mxu0 0
        %1936 = vmatmul.mubr.bf16.gmra.mrb[0].mxu0 %v743
        %v1937 = vpop.f32.mrb[0].mxu0
        %v1938 = vadd.f32 0.0, %v1937
        %v1939 = vpop.f32.mrb[0].mxu0
        %v1940 = vpop.f32.mrb[0].mxu0
        %v1941 = vadd.f32 0.0, %v1940
        %v1942 = vpop.f32.mrb[0].mxu0
        %1943 = vdwg.mxu0
        %1944 = vmatprep.subr.bf16.mxu0 0
        %1945 = vmatpush1.bf16.msra.mxu0 %v1820
        %1946 = vmatprep.subr.bf16.mxu0 0
        %1947 = vmatpush1.bf16.msra.mxu0 0
        %1948 = vmatprep.subr.bf16.mxu0 0
        %1949 = vmatpush1.bf16.msra.mxu0 0
        %1950 = vmatprep.subr.bf16.mxu0 0
        %1951 = vmatpush1.bf16.msra.mxu0 0
        %1952 = vmatprep.subr.bf16.mxu0 0
        %1953 = vmatpush1.bf16.msra.mxu0 0
        %1954 = vmatprep.subr.bf16.mxu0 0
        %1955 = vmatpush1.bf16.msra.mxu0 0
        %1956 = vmatprep.subr.bf16.mxu0 0
        %1957 = vmatpush1.bf16.msra.mxu0 0
        %1958 = vmatprep.subr.bf16.mxu0 0
        %1959 = vmatpush1.bf16.msra.mxu0 0
        %1960 = vmatprep.subr.bf16.mxu0 0
        %1961 = vmatpush1.bf16.msra.mxu0 0
        %1962 = vmatprep.subr.bf16.mxu0 0
        %1963 = vmatpush1.bf16.msra.mxu0 0
        %1964 = vmatprep.subr.bf16.mxu0 0
        %1965 = vmatpush1.bf16.msra.mxu0 0
        %1966 = vmatprep.subr.bf16.mxu0 0
        %1967 = vmatpush1.bf16.msra.mxu0 0
        %1968 = vmatprep.subr.bf16.mxu0 0
        %1969 = vmatpush1.bf16.msra.mxu0 0
        %1970 = vmatprep.subr.bf16.mxu0 0
        %1971 = vmatpush1.bf16.msra.mxu0 0
        %1972 = vmatprep.subr.bf16.mxu0 0
        %1973 = vmatpush1.bf16.msra.mxu0 0
        %1974 = vmatprep.subr.bf16.mxu0 0
        %1975 = vmatpush1.bf16.msra.mxu0 0
        %1976 = vmatprep.mubr.bf16.mxu0 0
        %1977 = vmatmul.mubr.bf16.gmra.mrb[0].mxu0 %v743
        %v1978 = vpop.f32.mrb[0].mxu0
        %v1979 = vadd.f32 0.0, %v1978
        %v1980 = vpop.f32.mrb[0].mxu0
        %v1981 = vpop.f32.mrb[0].mxu0
        %v1982 = vadd.f32 0.0, %v1981
        %v1983 = vpop.f32.mrb[0].mxu0
        %1984 = vdwg.mxu0
        %v1985 = vpack.c.bf16 %v1859, %v1856
        %v1986 = vpack.c.bf16 %v1900, %v1897
        %v1987 = vpack.c.bf16 %v1941, %v1938
        %v1988 = vpack.c.bf16 %v1982, %v1979
        %1989 = vmatprep.subr.bf16.mxu0 0
        %1990 = vmatpush1.bf16.msra.mxu0 %v1985
        %1991 = vmatprep.subr.bf16.mxu0 0
        %1992 = vmatpush1.bf16.msra.mxu0 0
        %1993 = vmatprep.subr.bf16.mxu0 0
        %1994 = vmatpush1.bf16.msra.mxu0 0
        %1995 = vmatprep.subr.bf16.mxu0 0
        %1996 = vmatpush1.bf16.msra.mxu0 0
        %1997 = vmatprep.subr.bf16.mxu0 0
        %1998 = vmatpush1.bf16.msra.mxu0 0
        %1999 = vmatprep.subr.bf16.mxu0 0
        %2000 = vmatpush1.bf16.msra.mxu0 0
        %2001 = vmatprep.subr.bf16.mxu0 0
        %2002 = vmatpush1.bf16.msra.mxu0 0
        %2003 = vmatprep.subr.bf16.mxu0 0
        %2004 = vmatpush1.bf16.msra.mxu0 0
        %2005 = vmatprep.subr.bf16.mxu0 0
        %2006 = vmatpush1.bf16.msra.mxu0 0
        %2007 = vmatprep.subr.bf16.mxu0 0
        %2008 = vmatpush1.bf16.msra.mxu0 0
        %2009 = vmatprep.subr.bf16.mxu0 0
        %2010 = vmatpush1.bf16.msra.mxu0 0
        %2011 = vmatprep.subr.bf16.mxu0 0
        %2012 = vmatpush1.bf16.msra.mxu0 0
        %2013 = vmatprep.subr.bf16.mxu0 0
        %2014 = vmatpush1.bf16.msra.mxu0 0
        %2015 = vmatprep.subr.bf16.mxu0 0
        %2016 = vmatpush1.bf16.msra.mxu0 0
        %2017 = vmatprep.subr.bf16.mxu0 0
        %2018 = vmatpush1.bf16.msra.mxu0 0
        %2019 = vmatprep.subr.bf16.mxu0 0
        %2020 = vmatpush1.bf16.msra.mxu0 0
        %2021 = vmatprep.mubr.bf16.mxu0 0
        %2022 = vmatmul.mubr.bf16.gmra.mrb[0].mxu0 %v743
        %v2023 = vpop.f32.mrb[0].mxu0
        %v2024 = vadd.f32 0.0, %v2023
        %v2025 = vpop.f32.mrb[0].mxu0
        %v2026 = vpop.f32.mrb[0].mxu0
        %v2027 = vadd.f32 0.0, %v2026
        %v2028 = vpop.f32.mrb[0].mxu0
        %2029 = vdwg.mxu0
        %2030 = vmatprep.subr.bf16.mxu0 0
        %2031 = vmatpush1.bf16.msra.mxu0 %v1986
        %2032 = vmatprep.subr.bf16.mxu0 0
        %2033 = vmatpush1.bf16.msra.mxu0 0
        %2034 = vmatprep.subr.bf16.mxu0 0
        %2035 = vmatpush1.bf16.msra.mxu0 0
        %2036 = vmatprep.subr.bf16.mxu0 0
        %2037 = vmatpush1.bf16.msra.mxu0 0
        %2038 = vmatprep.subr.bf16.mxu0 0
        %2039 = vmatpush1.bf16.msra.mxu0 0
        %2040 = vmatprep.subr.bf16.mxu0 0
        %2041 = vmatpush1.bf16.msra.mxu0 0
        %2042 = vmatprep.subr.bf16.mxu0 0
        %2043 = vmatpush1.bf16.msra.mxu0 0
        %2044 = vmatprep.subr.bf16.mxu0 0
        %2045 = vmatpush1.bf16.msra.mxu0 0
        %2046 = vmatprep.subr.bf16.mxu0 0
        %2047 = vmatpush1.bf16.msra.mxu0 0
        %2048 = vmatprep.subr.bf16.mxu0 0
        %2049 = vmatpush1.bf16.msra.mxu0 0
        %2050 = vmatprep.subr.bf16.mxu0 0
        %2051 = vmatpush1.bf16.msra.mxu0 0
        %2052 = vmatprep.subr.bf16.mxu0 0
        %2053 = vmatpush1.bf16.msra.mxu0 0
        %2054 = vmatprep.subr.bf16.mxu0 0
        %2055 = vmatpush1.bf16.msra.mxu0 0
        %2056 = vmatprep.subr.bf16.mxu0 0
        %2057 = vmatpush1.bf16.msra.mxu0 0
        %2058 = vmatprep.subr.bf16.mxu0 0
        %2059 = vmatpush1.bf16.msra.mxu0 0
        %2060 = vmatprep.subr.bf16.mxu0 0
        %2061 = vmatpush1.bf16.msra.mxu0 0
        %2062 = vmatprep.mubr.bf16.mxu0 0
        %2063 = vmatmul.mubr.bf16.gmra.mrb[0].mxu0 %v743
        %v2064 = vpop.f32.mrb[0].mxu0
        %v2065 = vadd.f32 0.0, %v2064
        %v2066 = vpop.f32.mrb[0].mxu0
        %v2067 = vpop.f32.mrb[0].mxu0
        %v2068 = vadd.f32 0.0, %v2067
        %v2069 = vpop.f32.mrb[0].mxu0
        %2070 = vdwg.mxu0
        %2071 = vmatprep.subr.bf16.mxu0 0
        %2072 = vmatpush1.bf16.msra.mxu0 %v1987
        %2073 = vmatprep.subr.bf16.mxu0 0
        %2074 = vmatpush1.bf16.msra.mxu0 0
        %2075 = vmatprep.subr.bf16.mxu0 0
        %2076 = vmatpush1.bf16.msra.mxu0 0
        %2077 = vmatprep.subr.bf16.mxu0 0
        %2078 = vmatpush1.bf16.msra.mxu0 0
        %2079 = vmatprep.subr.bf16.mxu0 0
        %2080 = vmatpush1.bf16.msra.mxu0 0
        %2081 = vmatprep.subr.bf16.mxu0 0
        %2082 = vmatpush1.bf16.msra.mxu0 0
        %2083 = vmatprep.subr.bf16.mxu0 0
        %2084 = vmatpush1.bf16.msra.mxu0 0
        %2085 = vmatprep.subr.bf16.mxu0 0
        %2086 = vmatpush1.bf16.msra.mxu0 0
        %2087 = vmatprep.subr.bf16.mxu0 0
        %2088 = vmatpush1.bf16.msra.mxu0 0
        %2089 = vmatprep.subr.bf16.mxu0 0
        %2090 = vmatpush1.bf16.msra.mxu0 0
        %2091 = vmatprep.subr.bf16.mxu0 0
        %2092 = vmatpush1.bf16.msra.mxu0 0
        %2093 = vmatprep.subr.bf16.mxu0 0
        %2094 = vmatpush1.bf16.msra.mxu0 0
        %2095 = vmatprep.subr.bf16.mxu0 0
        %2096 = vmatpush1.bf16.msra.mxu0 0
        %2097 = vmatprep.subr.bf16.mxu0 0
        %2098 = vmatpush1.bf16.msra.mxu0 0
        %2099 = vmatprep.subr.bf16.mxu0 0
        %2100 = vmatpush1.bf16.msra.mxu0 0
        %2101 = vmatprep.subr.bf16.mxu0 0
        %2102 = vmatpush1.bf16.msra.mxu0 0
        %2103 = vmatprep.mubr.bf16.mxu0 0
        %2104 = vmatmul.mubr.bf16.gmra.mrb[0].mxu0 %v743
        %v2105 = vpop.f32.mrb[0].mxu0
        %v2106 = vadd.f32 0.0, %v2105
        %v2107 = vpop.f32.mrb[0].mxu0
        %v2108 = vpop.f32.mrb[0].mxu0
        %v2109 = vadd.f32 0.0, %v2108
        %v2110 = vpop.f32.mrb[0].mxu0
        %2111 = vdwg.mxu0
        %2112 = vmatprep.subr.bf16.mxu0 0
        %2113 = vmatpush1.bf16.msra.mxu0 %v1988
        %2114 = vmatprep.subr.bf16.mxu0 0
        %2115 = vmatpush1.bf16.msra.mxu0 0
        %2116 = vmatprep.subr.bf16.mxu0 0
        %2117 = vmatpush1.bf16.msra.mxu0 0
        %2118 = vmatprep.subr.bf16.mxu0 0
        %2119 = vmatpush1.bf16.msra.mxu0 0
        %2120 = vmatprep.subr.bf16.mxu0 0
        %2121 = vmatpush1.bf16.msra.mxu0 0
        %2122 = vmatprep.subr.bf16.mxu0 0
        %2123 = vmatpush1.bf16.msra.mxu0 0
        %2124 = vmatprep.subr.bf16.mxu0 0
        %2125 = vmatpush1.bf16.msra.mxu0 0
        %2126 = vmatprep.subr.bf16.mxu0 0
        %2127 = vmatpush1.bf16.msra.mxu0 0
        %2128 = vmatprep.subr.bf16.mxu0 0
        %2129 = vmatpush1.bf16.msra.mxu0 0
        %2130 = vmatprep.subr.bf16.mxu0 0
        %2131 = vmatpush1.bf16.msra.mxu0 0
        %2132 = vmatprep.subr.bf16.mxu0 0
        %2133 = vmatpush1.bf16.msra.mxu0 0
        %2134 = vmatprep.subr.bf16.mxu0 0
        %2135 = vmatpush1.bf16.msra.mxu0 0
        %2136 = vmatprep.subr.bf16.mxu0 0
        %2137 = vmatpush1.bf16.msra.mxu0 0
        %2138 = vmatprep.subr.bf16.mxu0 0
        %2139 = vmatpush1.bf16.msra.mxu0 0
        %2140 = vmatprep.subr.bf16.mxu0 0
        %2141 = vmatpush1.bf16.msra.mxu0 0
        %2142 = vmatprep.subr.bf16.mxu0 0
        %2143 = vmatpush1.bf16.msra.mxu0 0
        %2144 = vmatprep.mubr.bf16.mxu0 0
        %2145 = vmatmul.mubr.bf16.gmra.mrb[0].mxu0 %v743
        %v2146 = vpop.f32.mrb[0].mxu0
        %v2147 = vadd.f32 0.0, %v2146
        %v2148 = vpop.f32.mrb[0].mxu0
        %v2149 = vpop.f32.mrb[0].mxu0
        %v2150 = vadd.f32 0.0, %v2149
        %v2151 = vpop.f32.mrb[0].mxu0
        %2152 = vdwg.mxu0
        %v2153 = vmul.f32 %v2024, 2.0
        %v2154 = vmul.f32 %v2027, 2.0
        %v2155 = vmul.f32 %v2065, 2.0
        %v2156 = vmul.f32 %v2068, 2.0
        %v2157 = vmul.f32 %v2106, 2.0
        %v2158 = vmul.f32 %v2109, 2.0
        %v2159 = vmul.f32 %v2147, 2.0
        %v2160 = vmul.f32 %v2150, 2.0
        %v2161 = vsub.f32 %v2153, %v1809
        %v2162 = vsub.f32 %v2154, %v1810
        %v2163 = vsub.f32 %v2155, %v1811
        %v2164 = vsub.f32 %v2156, %v1812
        %v2165 = vsub.f32 %v2157, %v1813
        %v2166 = vsub.f32 %v2158, %v1814
        %v2167 = vsub.f32 %v2159, %v1815
        %v2168 = vsub.f32 %v2160, %v1816
        %2169 = vmatprep.subr.bf16.mxu0 0
        %2170 = vmatpush1.bf16.msra.mxu0 %v1817
        %2171 = vmatprep.subr.bf16.mxu0 0
        %2172 = vmatpush1.bf16.msra.mxu0 0
        %2173 = vmatprep.subr.bf16.mxu0 0
        %2174 = vmatpush1.bf16.msra.mxu0 0
        %2175 = vmatprep.subr.bf16.mxu0 0
        %2176 = vmatpush1.bf16.msra.mxu0 0
        %2177 = vmatprep.subr.bf16.mxu0 0
        %2178 = vmatpush1.bf16.msra.mxu0 0
        %2179 = vmatprep.subr.bf16.mxu0 0
        %2180 = vmatpush1.bf16.msra.mxu0 0
        %2181 = vmatprep.subr.bf16.mxu0 0
        %2182 = vmatpush1.bf16.msra.mxu0 0
        %2183 = vmatprep.subr.bf16.mxu0 0
        %2184 = vmatpush1.bf16.msra.mxu0 0
        %2185 = vmatprep.subr.bf16.mxu0 0
        %2186 = vmatpush1.bf16.msra.mxu0 0
        %2187 = vmatprep.subr.bf16.mxu0 0
        %2188 = vmatpush1.bf16.msra.mxu0 0
        %2189 = vmatprep.subr.bf16.mxu0 0
        %2190 = vmatpush1.bf16.msra.mxu0 0
        %2191 = vmatprep.subr.bf16.mxu0 0
        %2192 = vmatpush1.bf16.msra.mxu0 0
        %2193 = vmatprep.subr.bf16.mxu0 0
        %2194 = vmatpush1.bf16.msra.mxu0 0
        %2195 = vmatprep.subr.bf16.mxu0 0
        %2196 = vmatpush1.bf16.msra.mxu0 0
        %2197 = vmatprep.subr.bf16.mxu0 0
        %2198 = vmatpush1.bf16.msra.mxu0 0
        %2199 = vmatprep.subr.bf16.mxu0 0
        %2200 = vmatpush1.bf16.msra.mxu0 0
        %2201 = vmatprep.mubr.bf16.mxu0 0
        %2202 = vmatmul.mubr.bf16.gmra.mrb[0].mxu0 %v1099
        %v2203 = vpop.f32.mrb[0].mxu0
        %v2204 = vadd.f32 0.0, %v2203
        %v2205 = vpop.f32.mrb[0].mxu0
        %v2206 = vpop.f32.mrb[0].mxu0
        %v2207 = vadd.f32 0.0, %v2206
        %v2208 = vpop.f32.mrb[0].mxu0
        %2209 = vdwg.mxu0
        %2210 = vmatprep.subr.bf16.mxu0 0
        %2211 = vmatpush1.bf16.msra.mxu0 %v1818
        %2212 = vmatprep.subr.bf16.mxu0 0
        %2213 = vmatpush1.bf16.msra.mxu0 0
        %2214 = vmatprep.subr.bf16.mxu0 0
        %2215 = vmatpush1.bf16.msra.mxu0 0
        %2216 = vmatprep.subr.bf16.mxu0 0
        %2217 = vmatpush1.bf16.msra.mxu0 0
        %2218 = vmatprep.subr.bf16.mxu0 0
        %2219 = vmatpush1.bf16.msra.mxu0 0
        %2220 = vmatprep.subr.bf16.mxu0 0
        %2221 = vmatpush1.bf16.msra.mxu0 0
        %2222 = vmatprep.subr.bf16.mxu0 0
        %2223 = vmatpush1.bf16.msra.mxu0 0
        %2224 = vmatprep.subr.bf16.mxu0 0
        %2225 = vmatpush1.bf16.msra.mxu0 0
        %2226 = vmatprep.subr.bf16.mxu0 0
        %2227 = vmatpush1.bf16.msra.mxu0 0
        %2228 = vmatprep.subr.bf16.mxu0 0
        %2229 = vmatpush1.bf16.msra.mxu0 0
        %2230 = vmatprep.subr.bf16.mxu0 0
        %2231 = vmatpush1.bf16.msra.mxu0 0
        %2232 = vmatprep.subr.bf16.mxu0 0
        %2233 = vmatpush1.bf16.msra.mxu0 0
        %2234 = vmatprep.subr.bf16.mxu0 0
        %2235 = vmatpush1.bf16.msra.mxu0 0
        %2236 = vmatprep.subr.bf16.mxu0 0
        %2237 = vmatpush1.bf16.msra.mxu0 0
        %2238 = vmatprep.subr.bf16.mxu0 0
        %2239 = vmatpush1.bf16.msra.mxu0 0
        %2240 = vmatprep.subr.bf16.mxu0 0
        %2241 = vmatpush1.bf16.msra.mxu0 0
        %2242 = vmatprep.mubr.bf16.mxu0 0
        %2243 = vmatmul.mubr.bf16.gmra.mrb[0].mxu0 %v1099
        %v2244 = vpop.f32.mrb[0].mxu0
        %v2245 = vadd.f32 0.0, %v2244
        %v2246 = vpop.f32.mrb[0].mxu0
        %v2247 = vpop.f32.mrb[0].mxu0
        %v2248 = vadd.f32 0.0, %v2247
        %v2249 = vpop.f32.mrb[0].mxu0
        %2250 = vdwg.mxu0
        %2251 = vmatprep.subr.bf16.mxu0 0
        %2252 = vmatpush1.bf16.msra.mxu0 %v1819
        %2253 = vmatprep.subr.bf16.mxu0 0
        %2254 = vmatpush1.bf16.msra.mxu0 0
        %2255 = vmatprep.subr.bf16.mxu0 0
        %2256 = vmatpush1.bf16.msra.mxu0 0
        %2257 = vmatprep.subr.bf16.mxu0 0
        %2258 = vmatpush1.bf16.msra.mxu0 0
        %2259 = vmatprep.subr.bf16.mxu0 0
        %2260 = vmatpush1.bf16.msra.mxu0 0
        %2261 = vmatprep.subr.bf16.mxu0 0
        %2262 = vmatpush1.bf16.msra.mxu0 0
        %2263 = vmatprep.subr.bf16.mxu0 0
        %2264 = vmatpush1.bf16.msra.mxu0 0
        %2265 = vmatprep.subr.bf16.mxu0 0
        %2266 = vmatpush1.bf16.msra.mxu0 0
        %2267 = vmatprep.subr.bf16.mxu0 0
        %2268 = vmatpush1.bf16.msra.mxu0 0
        %2269 = vmatprep.subr.bf16.mxu0 0
        %2270 = vmatpush1.bf16.msra.mxu0 0
        %2271 = vmatprep.subr.bf16.mxu0 0
        %2272 = vmatpush1.bf16.msra.mxu0 0
        %2273 = vmatprep.subr.bf16.mxu0 0
        %2274 = vmatpush1.bf16.msra.mxu0 0
        %2275 = vmatprep.subr.bf16.mxu0 0
        %2276 = vmatpush1.bf16.msra.mxu0 0
        %2277 = vmatprep.subr.bf16.mxu0 0
        %2278 = vmatpush1.bf16.msra.mxu0 0
        %2279 = vmatprep.subr.bf16.mxu0 0
        %2280 = vmatpush1.bf16.msra.mxu0 0
        %2281 = vmatprep.subr.bf16.mxu0 0
        %2282 = vmatpush1.bf16.msra.mxu0 0
        %2283 = vmatprep.mubr.bf16.mxu0 0
        %2284 = vmatmul.mubr.bf16.gmra.mrb[0].mxu0 %v1099
        %v2285 = vpop.f32.mrb[0].mxu0
        %v2286 = vadd.f32 0.0, %v2285
        %v2287 = vpop.f32.mrb[0].mxu0
        %v2288 = vpop.f32.mrb[0].mxu0
        %v2289 = vadd.f32 0.0, %v2288
        %v2290 = vpop.f32.mrb[0].mxu0
        %2291 = vdwg.mxu0
        %2292 = vmatprep.subr.bf16.mxu0 0
        %2293 = vmatpush1.bf16.msra.mxu0 %v1820
        %2294 = vmatprep.subr.bf16.mxu0 0
        %2295 = vmatpush1.bf16.msra.mxu0 0
        %2296 = vmatprep.subr.bf16.mxu0 0
        %2297 = vmatpush1.bf16.msra.mxu0 0
        %2298 = vmatprep.subr.bf16.mxu0 0
        %2299 = vmatpush1.bf16.msra.mxu0 0
        %2300 = vmatprep.subr.bf16.mxu0 0
        %2301 = vmatpush1.bf16.msra.mxu0 0
        %2302 = vmatprep.subr.bf16.mxu0 0
        %2303 = vmatpush1.bf16.msra.mxu0 0
        %2304 = vmatprep.subr.bf16.mxu0 0
        %2305 = vmatpush1.bf16.msra.mxu0 0
        %2306 = vmatprep.subr.bf16.mxu0 0
        %2307 = vmatpush1.bf16.msra.mxu0 0
        %2308 = vmatprep.subr.bf16.mxu0 0
        %2309 = vmatpush1.bf16.msra.mxu0 0
        %2310 = vmatprep.subr.bf16.mxu0 0
        %2311 = vmatpush1.bf16.msra.mxu0 0
        %2312 = vmatprep.subr.bf16.mxu0 0
        %2313 = vmatpush1.bf16.msra.mxu0 0
        %2314 = vmatprep.subr.bf16.mxu0 0
        %2315 = vmatpush1.bf16.msra.mxu0 0
        %2316 = vmatprep.subr.bf16.mxu0 0
        %2317 = vmatpush1.bf16.msra.mxu0 0
        %2318 = vmatprep.subr.bf16.mxu0 0
        %2319 = vmatpush1.bf16.msra.mxu0 0
        %2320 = vmatprep.subr.bf16.mxu0 0
        %2321 = vmatpush1.bf16.msra.mxu0 0
        %2322 = vmatprep.subr.bf16.mxu0 0
        %2323 = vmatpush1.bf16.msra.mxu0 0
        %2324 = vmatprep.mubr.bf16.mxu0 0
        %2325 = vmatmul.mubr.bf16.gmra.mrb[0].mxu0 %v1099
        %v2326 = vpop.f32.mrb[0].mxu0
        %v2327 = vadd.f32 0.0, %v2326
        %v2328 = vpop.f32.mrb[0].mxu0
        %v2329 = vpop.f32.mrb[0].mxu0
        %v2330 = vadd.f32 0.0, %v2329
        %v2331 = vpop.f32.mrb[0].mxu0
        %2332 = vdwg.mxu0
        %v2333 = vpack.c.bf16 %v2207, %v2204
        %v2334 = vpack.c.bf16 %v2248, %v2245
        %v2335 = vpack.c.bf16 %v2289, %v2286
        %v2336 = vpack.c.bf16 %v2330, %v2327
        %2337 = vmatprep.subr.bf16.mxu0 0
        %2338 = vmatpush1.bf16.msra.mxu0 %v2333
        %2339 = vmatprep.subr.bf16.mxu0 0
        %2340 = vmatpush1.bf16.msra.mxu0 0
        %2341 = vmatprep.subr.bf16.mxu0 0
        %2342 = vmatpush1.bf16.msra.mxu0 0
        %2343 = vmatprep.subr.bf16.mxu0 0
        %2344 = vmatpush1.bf16.msra.mxu0 0
        %2345 = vmatprep.subr.bf16.mxu0 0
        %2346 = vmatpush1.bf16.msra.mxu0 0
        %2347 = vmatprep.subr.bf16.mxu0 0
        %2348 = vmatpush1.bf16.msra.mxu0 0
        %2349 = vmatprep.subr.bf16.mxu0 0
        %2350 = vmatpush1.bf16.msra.mxu0 0
        %2351 = vmatprep.subr.bf16.mxu0 0
        %2352 = vmatpush1.bf16.msra.mxu0 0
        %2353 = vmatprep.subr.bf16.mxu0 0
        %2354 = vmatpush1.bf16.msra.mxu0 0
        %2355 = vmatprep.subr.bf16.mxu0 0
        %2356 = vmatpush1.bf16.msra.mxu0 0
        %2357 = vmatprep.subr.bf16.mxu0 0
        %2358 = vmatpush1.bf16.msra.mxu0 0
        %2359 = vmatprep.subr.bf16.mxu0 0
        %2360 = vmatpush1.bf16.msra.mxu0 0
        %2361 = vmatprep.subr.bf16.mxu0 0
        %2362 = vmatpush1.bf16.msra.mxu0 0
        %2363 = vmatprep.subr.bf16.mxu0 0
        %2364 = vmatpush1.bf16.msra.mxu0 0
        %2365 = vmatprep.subr.bf16.mxu0 0
        %2366 = vmatpush1.bf16.msra.mxu0 0
        %2367 = vmatprep.subr.bf16.mxu0 0
        %2368 = vmatpush1.bf16.msra.mxu0 0
        %2369 = vmatprep.mubr.bf16.mxu0 0
        %2370 = vmatmul.mubr.bf16.gmra.mrb[0].mxu0 %v1099
        %v2371 = vpop.f32.mrb[0].mxu0
        %v2372 = vadd.f32 0.0, %v2371
        %v2373 = vpop.f32.mrb[0].mxu0
        %v2374 = vpop.f32.mrb[0].mxu0
        %v2375 = vadd.f32 0.0, %v2374
        %v2376 = vpop.f32.mrb[0].mxu0
        %2377 = vdwg.mxu0
        %2378 = vmatprep.subr.bf16.mxu0 0
        %2379 = vmatpush1.bf16.msra.mxu0 %v2334
        %2380 = vmatprep.subr.bf16.mxu0 0
        %2381 = vmatpush1.bf16.msra.mxu0 0
        %2382 = vmatprep.subr.bf16.mxu0 0
        %2383 = vmatpush1.bf16.msra.mxu0 0
        %2384 = vmatprep.subr.bf16.mxu0 0
        %2385 = vmatpush1.bf16.msra.mxu0 0
        %2386 = vmatprep.subr.bf16.mxu0 0
        %2387 = vmatpush1.bf16.msra.mxu0 0
        %2388 = vmatprep.subr.bf16.mxu0 0
        %2389 = vmatpush1.bf16.msra.mxu0 0
        %2390 = vmatprep.subr.bf16.mxu0 0
        %2391 = vmatpush1.bf16.msra.mxu0 0
        %2392 = vmatprep.subr.bf16.mxu0 0
        %2393 = vmatpush1.bf16.msra.mxu0 0
        %2394 = vmatprep.subr.bf16.mxu0 0
        %2395 = vmatpush1.bf16.msra.mxu0 0
        %2396 = vmatprep.subr.bf16.mxu0 0
        %2397 = vmatpush1.bf16.msra.mxu0 0
        %2398 = vmatprep.subr.bf16.mxu0 0
        %2399 = vmatpush1.bf16.msra.mxu0 0
        %2400 = vmatprep.subr.bf16.mxu0 0
        %2401 = vmatpush1.bf16.msra.mxu0 0
        %2402 = vmatprep.subr.bf16.mxu0 0
        %2403 = vmatpush1.bf16.msra.mxu0 0
        %2404 = vmatprep.subr.bf16.mxu0 0
        %2405 = vmatpush1.bf16.msra.mxu0 0
        %2406 = vmatprep.subr.bf16.mxu0 0
        %2407 = vmatpush1.bf16.msra.mxu0 0
        %2408 = vmatprep.subr.bf16.mxu0 0
        %2409 = vmatpush1.bf16.msra.mxu0 0
        %2410 = vmatprep.mubr.bf16.mxu0 0
        %2411 = vmatmul.mubr.bf16.gmra.mrb[0].mxu0 %v1099
        %v2412 = vpop.f32.mrb[0].mxu0
        %v2413 = vadd.f32 0.0, %v2412
        %v2414 = vpop.f32.mrb[0].mxu0
        %v2415 = vpop.f32.mrb[0].mxu0
        %v2416 = vadd.f32 0.0, %v2415
        %v2417 = vpop.f32.mrb[0].mxu0
        %2418 = vdwg.mxu0
        %2419 = vmatprep.subr.bf16.mxu0 0
        %2420 = vmatpush1.bf16.msra.mxu0 %v2335
        %2421 = vmatprep.subr.bf16.mxu0 0
        %2422 = vmatpush1.bf16.msra.mxu0 0
        %2423 = vmatprep.subr.bf16.mxu0 0
        %2424 = vmatpush1.bf16.msra.mxu0 0
        %2425 = vmatprep.subr.bf16.mxu0 0
        %2426 = vmatpush1.bf16.msra.mxu0 0
        %2427 = vmatprep.subr.bf16.mxu0 0
        %2428 = vmatpush1.bf16.msra.mxu0 0
        %2429 = vmatprep.subr.bf16.mxu0 0
        %2430 = vmatpush1.bf16.msra.mxu0 0
        %2431 = vmatprep.subr.bf16.mxu0 0
        %2432 = vmatpush1.bf16.msra.mxu0 0
        %2433 = vmatprep.subr.bf16.mxu0 0
        %2434 = vmatpush1.bf16.msra.mxu0 0
        %2435 = vmatprep.subr.bf16.mxu0 0
        %2436 = vmatpush1.bf16.msra.mxu0 0
        %2437 = vmatprep.subr.bf16.mxu0 0
        %2438 = vmatpush1.bf16.msra.mxu0 0
        %2439 = vmatprep.subr.bf16.mxu0 0
        %2440 = vmatpush1.bf16.msra.mxu0 0
        %2441 = vmatprep.subr.bf16.mxu0 0
        %2442 = vmatpush1.bf16.msra.mxu0 0
        %2443 = vmatprep.subr.bf16.mxu0 0
        %2444 = vmatpush1.bf16.msra.mxu0 0
        %2445 = vmatprep.subr.bf16.mxu0 0
        %2446 = vmatpush1.bf16.msra.mxu0 0
        %2447 = vmatprep.subr.bf16.mxu0 0
        %2448 = vmatpush1.bf16.msra.mxu0 0
        %2449 = vmatprep.subr.bf16.mxu0 0
        %2450 = vmatpush1.bf16.msra.mxu0 0
        %2451 = vmatprep.mubr.bf16.mxu0 0
        %2452 = vmatmul.mubr.bf16.gmra.mrb[0].mxu0 %v1099
        %v2453 = vpop.f32.mrb[0].mxu0
        %v2454 = vadd.f32 0.0, %v2453
        %v2455 = vpop.f32.mrb[0].mxu0
        %v2456 = vpop.f32.mrb[0].mxu0
        %v2457 = vadd.f32 0.0, %v2456
        %v2458 = vpop.f32.mrb[0].mxu0
        %2459 = vdwg.mxu0
        %2460 = vmatprep.subr.bf16.mxu0 0
        %2461 = vmatpush1.bf16.msra.mxu0 %v2336
        %2462 = vmatprep.subr.bf16.mxu0 0
        %2463 = vmatpush1.bf16.msra.mxu0 0
        %2464 = vmatprep.subr.bf16.mxu0 0
        %2465 = vmatpush1.bf16.msra.mxu0 0
        %2466 = vmatprep.subr.bf16.mxu0 0
        %2467 = vmatpush1.bf16.msra.mxu0 0
        %2468 = vmatprep.subr.bf16.mxu0 0
        %2469 = vmatpush1.bf16.msra.mxu0 0
        %2470 = vmatprep.subr.bf16.mxu0 0
        %2471 = vmatpush1.bf16.msra.mxu0 0
        %2472 = vmatprep.subr.bf16.mxu0 0
        %2473 = vmatpush1.bf16.msra.mxu0 0
        %2474 = vmatprep.subr.bf16.mxu0 0
        %2475 = vmatpush1.bf16.msra.mxu0 0
        %2476 = vmatprep.subr.bf16.mxu0 0
        %2477 = vmatpush1.bf16.msra.mxu0 0
        %2478 = vmatprep.subr.bf16.mxu0 0
        %2479 = vmatpush1.bf16.msra.mxu0 0
        %2480 = vmatprep.subr.bf16.mxu0 0
        %2481 = vmatpush1.bf16.msra.mxu0 0
        %2482 = vmatprep.subr.bf16.mxu0 0
        %2483 = vmatpush1.bf16.msra.mxu0 0
        %2484 = vmatprep.subr.bf16.mxu0 0
        %2485 = vmatpush1.bf16.msra.mxu0 0
        %2486 = vmatprep.subr.bf16.mxu0 0
        %2487 = vmatpush1.bf16.msra.mxu0 0
        %2488 = vmatprep.subr.bf16.mxu0 0
        %2489 = vmatpush1.bf16.msra.mxu0 0
        %2490 = vmatprep.subr.bf16.mxu0 0
        %2491 = vmatpush1.bf16.msra.mxu0 0
        %2492 = vmatprep.mubr.bf16.mxu0 0
        %2493 = vmatmul.mubr.bf16.gmra.mrb[0].mxu0 %v1099
        %v2494 = vpop.f32.mrb[0].mxu0
        %v2495 = vadd.f32 0.0, %v2494
        %v2496 = vpop.f32.mrb[0].mxu0
        %v2497 = vpop.f32.mrb[0].mxu0
        %v2498 = vadd.f32 0.0, %v2497
        %v2499 = vpop.f32.mrb[0].mxu0
        %2500 = vdwg.mxu0
        %v2501 = vmul.f32 %v2372, 2.0
        %v2502 = vmul.f32 %v2375, 2.0
        %v2503 = vmul.f32 %v2413, 2.0
        %v2504 = vmul.f32 %v2416, 2.0
        %v2505 = vmul.f32 %v2454, 2.0
        %v2506 = vmul.f32 %v2457, 2.0
        %v2507 = vmul.f32 %v2495, 2.0
        %v2508 = vmul.f32 %v2498, 2.0
        %v2509 = vsub.f32 %v2501, %v1809
        %v2510 = vsub.f32 %v2502, %v1810
        %v2511 = vsub.f32 %v2503, %v1811
        %v2512 = vsub.f32 %v2504, %v1812
        %v2513 = vsub.f32 %v2505, %v1813
        %v2514 = vsub.f32 %v2506, %v1814
        %v2515 = vsub.f32 %v2507, %v1815
        %v2516 = vsub.f32 %v2508, %v1816
        %v2517 = vpack.c.bf16 %v2162, %v2161
        %v2518 = vpack.c.bf16 %v2164, %v2163
        %v2519 = vpack.c.bf16 %v2166, %v2165
        %v2520 = vpack.c.bf16 %v2168, %v2167
        %v2521 = vpack.c.bf16 %v2510, %v2509
        %v2522 = vpack.c.bf16 %v2512, %v2511
        %v2523 = vpack.c.bf16 %v2514, %v2513
        %v2524 = vpack.c.bf16 %v2516, %v2515
        %2529 = vrot.lane.b32.xlu0 %v1985, 34
        %v2530 = vpop.permute.xlu0 %2529
        %2531 = vrot.lane.b32.xlu0 %v1986, 34
        %v2532 = vpop.permute.xlu0 %2531
        %2533 = vrot.lane.b32.xlu0 %v1987, 34
        %v2534 = vpop.permute.xlu0 %2533
        %2535 = vrot.lane.b32.xlu0 %v1988, 34
        %v2536 = vpop.permute.xlu0 %2535
        %2541 = vrot.lane.b32.xlu0 %v2517, 68
        %v2542 = vpop.permute.xlu0 %2541
        %2543 = vrot.lane.b32.xlu0 %v2518, 68
        %v2544 = vpop.permute.xlu0 %2543
        %2545 = vrot.lane.b32.xlu0 %v2519, 68
        %v2546 = vpop.permute.xlu0 %2545
        %2547 = vrot.lane.b32.xlu0 %v2520, 68
        %v2548 = vpop.permute.xlu0 %2547
        %2553 = vrot.lane.b32.xlu0 %v2333, 102
        %v2554 = vpop.permute.xlu0 %2553
        %2555 = vrot.lane.b32.xlu0 %v2334, 102
        %v2556 = vpop.permute.xlu0 %2555
        %2557 = vrot.lane.b32.xlu0 %v2335, 102
        %v2558 = vpop.permute.xlu0 %2557
        %2559 = vrot.lane.b32.xlu0 %v2336, 102
        %v2560 = vpop.permute.xlu0 %2559
        %2565 = vrot.lane.b32.xlu0 %v2521, 8
        %v2566 = vpop.permute.xlu0 %2565
        %2567 = vrot.lane.b32.xlu0 %v2522, 8
        %v2568 = vpop.permute.xlu0 %2567
        %2569 = vrot.lane.b32.xlu0 %v2523, 8
        %v2570 = vpop.permute.xlu0 %2569
        %2571 = vrot.lane.b32.xlu0 %v2524, 8
        %v2572 = vpop.permute.xlu0 %2571
        %v2575 = vsel %vm1505, %v1817, %v2530
        %v2578 = vsel %vm1505, %v1818, %v2532
        %v2581 = vsel %vm1505, %v1819, %v2534
        %v2584 = vsel %vm1505, %v1820, %v2536
        %v2586 = vsel %vm1518, %v2575, %v2542
        %v2588 = vsel %vm1518, %v2578, %v2544
        %v2590 = vsel %vm1518, %v2581, %v2546
        %v2592 = vsel %vm1518, %v2584, %v2548
        %v2594 = vsel %vm1527, %v2586, %v2554
        %v2597 = vsel %vm1527, %v2588, %v2556
        %v2600 = vsel %vm1527, %v2590, %v2558
        %v2603 = vsel %vm1527, %v2592, %v2560
        %v2606 = vsel %vm1540, %v2554, %v2566
        %v2608 = vsel %vm1540, %v2556, %v2568
        %v2610 = vsel %vm1540, %v2558, %v2570
        %v2612 = vsel %vm1540, %v2560, %v2572
        %v2613 = vld [vmem:[%s6] sm:$0xf]
        %v2614 = vld [vmem:[%s6 + $0x4] sm:$0xf]
        %v2615 = vld [vmem:[%s6 + $0x8] sm:$0xf]
        %v2616 = vld [vmem:[%s6 + $0xc] sm:$0xf]
        %v2617 = vld [vmem:[%s6 + $0x10] sm:$0xf]
        %v2618 = vld [vmem:[%s6 + $0x14] sm:$0xf]
        %v2619 = vld [vmem:[%s6 + $0x18] sm:$0xf]
        %v2620 = vld [vmem:[%s6 + $0x1c] sm:$0xf]
        %v2621 = vld [vmem:[%s6 + $0x20] sm:$0xf]
        %v2622 = vld [vmem:[%s6 + $0x24] sm:$0xf]
        %v2623 = vld [vmem:[%s6 + $0x28] sm:$0xf]
        %v2624 = vld [vmem:[%s6 + $0x2c] sm:$0xf]
        %v2625 = vld [vmem:[%s6 + $0x30] sm:$0xf]
        %v2626 = vld [vmem:[%s6 + $0x34] sm:$0xf]
        %v2627 = vld [vmem:[%s6 + $0x38] sm:$0xf]
        %v2628 = vld [vmem:[%s6 + $0x3c] sm:$0xf]
        %v2629 = vld [vmem:[%s6 + $0x40] sm:$0xf]
        %v2630 = vld [vmem:[%s6 + $0x44] sm:$0xf]
        %v2631 = vld [vmem:[%s6 + $0x48] sm:$0xf]
        %v2632 = vld [vmem:[%s6 + $0x4c] sm:$0xf]
        %v2633 = vld [vmem:[%s6 + $0x50] sm:$0xf]
        %v2634 = vld [vmem:[%s6 + $0x54] sm:$0x1]
        %v2635 = vld [vmem:[%s7] sm:$0x1]
        %v2637 = vlaneseq
        %v2638 = vshrl.u32 %v2637, 7
        %v2639 = vsub.s32 0, %v2638
        %v2640 = vrot.slane %v2635, %v2639
        %v2664 = vunpack.c.l.b16 %v2613
        %v2665 = vunpack.c.l.b16 %v2614
        %v2666 = vunpack.c.l.b16 %v2615
        %v2667 = vunpack.c.l.b16 %v2616
        %v2668 = vunpack.c.l.b16 %v2617
        %v2669 = vunpack.c.l.b16 %v2618
        %v2670 = vunpack.c.l.b16 %v2619
        %v2671 = vunpack.c.l.b16 %v2620
        %v2672 = vunpack.c.l.b16 %v2621
        %v2673 = vunpack.c.l.b16 %v2622
        %v2674 = vunpack.c.l.b16 %v2623
        %v2675 = vunpack.c.l.b16 %v2624
        %v2676 = vunpack.c.l.b16 %v2625
        %v2677 = vunpack.c.l.b16 %v2626
        %v2678 = vunpack.c.l.b16 %v2627
        %v2679 = vunpack.c.l.b16 %v2628
        %v2680 = vunpack.c.l.b16 %v2629
        %v2681 = vunpack.c.l.b16 %v2630
        %v2682 = vunpack.c.l.b16 %v2631
        %v2683 = vunpack.c.l.b16 %v2632
        %v2684 = vunpack.c.l.b16 %v2633
        %v2685 = vunpack.c.l.b16 %v2634
        %v2686 = vpack.c.b16 %v2665, %v2664
        %v2687 = vpack.c.b16 %v2667, %v2666
        %v2688 = vpack.c.b16 %v2669, %v2668
        %v2689 = vpack.c.b16 %v2671, %v2670
        %v2690 = vpack.c.b16 %v2673, %v2672
        %v2691 = vpack.c.b16 %v2675, %v2674
        %v2692 = vpack.c.b16 %v2677, %v2676
        %v2693 = vpack.c.b16 %v2679, %v2678
        %v2694 = vpack.c.b16 %v2681, %v2680
        %v2695 = vpack.c.b16 %v2683, %v2682
        %v2696 = vpack.c.b16 %v2685, %v2684
        %v2707 = vsel %vm1643, %v2606, 0
        %v2709 = vsel %vm1643, %v2608, 0
        %v2711 = vsel %vm1643, %v2610, 0
        %v2713 = vsel %vm1643, %v2612, 0
        %v2716 = vsel %vm1652, %v2696, 0
        %2718 = vmatprep.subr.bf16.mxu0 0
        %2719 = vmatpush1.bf16.msra.mxu0 %v2686
        %2720 = vmatprep.subr.bf16.mxu0 0
        %2721 = vmatpush1.bf16.msra.mxu0 %v2687
        %2722 = vmatprep.subr.bf16.mxu0 0
        %2723 = vmatpush1.bf16.msra.mxu0 %v2688
        %2724 = vmatprep.subr.bf16.mxu0 0
        %2725 = vmatpush1.bf16.msra.mxu0 %v2689
        %2726 = vmatprep.subr.bf16.mxu0 0
        %2727 = vmatpush1.bf16.msra.mxu0 %v2690
        %2728 = vmatprep.subr.bf16.mxu0 0
        %2729 = vmatpush1.bf16.msra.mxu0 %v2691
        %2730 = vmatprep.subr.bf16.mxu0 0
        %2731 = vmatpush1.bf16.msra.mxu0 %v2692
        %2732 = vmatprep.subr.bf16.mxu0 0
        %2733 = vmatpush1.bf16.msra.mxu0 %v2693
        %2734 = vmatprep.subr.bf16.mxu0 0
        %2735 = vmatpush1.bf16.msra.mxu0 %v2694
        %2736 = vmatprep.subr.bf16.mxu0 0
        %2737 = vmatpush1.bf16.msra.mxu0 %v2695
        %2738 = vmatprep.subr.bf16.mxu0 0
        %2739 = vmatpush1.bf16.msra.mxu0 %v2716
        %2740 = vmatprep.subr.bf16.mxu0 0
        %2741 = vmatpush1.bf16.msra.mxu0 0
        %2742 = vmatprep.subr.bf16.mxu0 0
        %2743 = vmatpush1.bf16.msra.mxu0 0
        %2744 = vmatprep.subr.bf16.mxu0 0
        %2745 = vmatpush1.bf16.msra.mxu0 0
        %2746 = vmatprep.subr.bf16.mxu0 0
        %2747 = vmatpush1.bf16.msra.mxu0 0
        %2748 = vmatprep.subr.bf16.mxu0 0
        %2749 = vmatpush1.bf16.msra.mxu0 0
        %2750 = vmatprep.mubr.bf16.mxu0 %v2707
        %2751 = vmatmul.mubr.bf16.gmra.mrb[0].mxu0 %v2594
        %v2752 = vpop.f32.mrb[0].mxu0
        %v2753 = vadd.f32 %v2640, %v2752
        %v2754 = vpop.f32.mrb[0].mxu0
        %v2755 = vpop.f32.mrb[0].mxu0
        %v2756 = vadd.f32 %v2640, %v2755
        %v2757 = vpop.f32.mrb[0].mxu0
        %2758 = vmatprep.mubr.bf16.mxu0 %v2709
        %2759 = vmatmul.mubr.bf16.gmra.mrb[0].mxu0 %v2597
        %v2760 = vpop.f32.mrb[0].mxu0
        %v2761 = vadd.f32 %v2640, %v2760
        %v2762 = vpop.f32.mrb[0].mxu0
        %v2763 = vpop.f32.mrb[0].mxu0
        %v2764 = vadd.f32 %v2640, %v2763
        %v2765 = vpop.f32.mrb[0].mxu0
        %2766 = vmatprep.mubr.bf16.mxu0 %v2711
        %2767 = vmatmul.mubr.bf16.gmra.mrb[0].mxu0 %v2600
        %v2768 = vpop.f32.mrb[0].mxu0
        %v2769 = vadd.f32 %v2640, %v2768
        %v2770 = vpop.f32.mrb[0].mxu0
        %v2771 = vpop.f32.mrb[0].mxu0
        %v2772 = vadd.f32 %v2640, %v2771
        %v2773 = vpop.f32.mrb[0].mxu0
        %2774 = vmatprep.mubr.bf16.mxu0 %v2713
        %2775 = vmatmul.mubr.bf16.gmra.mrb[0].mxu0 %v2603
        %v2776 = vpop.f32.mrb[0].mxu0
        %v2777 = vadd.f32 %v2640, %v2776
        %v2778 = vpop.f32.mrb[0].mxu0
        %v2779 = vpop.f32.mrb[0].mxu0
        %v2780 = vadd.f32 %v2640, %v2779
        %v2781 = vpop.f32.mrb[0].mxu0
        %2782 = vdwg.mxu0
        %v2783 = vtanh.pop %v2753
        %v2784 = vtanh.pop %v2756
        %v2785 = vtanh.pop %v2761
        %v2786 = vtanh.pop %v2764
        %v2787 = vtanh.pop %v2769
        %v2788 = vtanh.pop %v2772
        %v2789 = vtanh.pop %v2777
        %v2790 = vtanh.pop %v2780
        %2791 = vrot.lane.b32.xlu0 %v683, 32
        %v2792 = vpop.permute.xlu0 %2791
        %2793 = vrot.lane.b32.xlu0 %v684, 32
        %v2794 = vpop.permute.xlu0 %2793
        %2795 = vrot.lane.b32.xlu0 %v685, 32
        %v2796 = vpop.permute.xlu0 %2795
        %2797 = vrot.lane.b32.xlu0 %v686, 32
        %v2798 = vpop.permute.xlu0 %2797
        %2799 = vrot.lane.b32.xlu0 %v687, 32
        %v2800 = vpop.permute.xlu0 %2799
        %2801 = vrot.lane.b32.xlu0 %v688, 32
        %v2802 = vpop.permute.xlu0 %2801
        %2803 = vrot.lane.b32.xlu0 %v689, 32
        %v2804 = vpop.permute.xlu0 %2803
        %2805 = vrot.lane.b32.xlu0 %v690, 32
        %v2806 = vpop.permute.xlu0 %2805
        %v2815 = vmul.f32 %v1754, %v2792
        %v2816 = vmul.f32 %v1756, %v2794
        %v2817 = vmul.f32 %v1758, %v2796
        %v2818 = vmul.f32 %v1760, %v2798
        %v2819 = vmul.f32 %v1762, %v2800
        %v2820 = vmul.f32 %v1764, %v2802
        %v2821 = vmul.f32 %v1766, %v2804
        %v2822 = vmul.f32 %v1768, %v2806
        %v2823 = vsub.f32 1.0, %v1754
        %v2824 = vsub.f32 1.0, %v1756
        %v2825 = vsub.f32 1.0, %v1758
        %v2826 = vsub.f32 1.0, %v1760
        %v2827 = vsub.f32 1.0, %v1762
        %v2828 = vsub.f32 1.0, %v1764
        %v2829 = vsub.f32 1.0, %v1766
        %v2830 = vsub.f32 1.0, %v1768
        %2839 = vrot.lane.b32.xlu0 %v2783, 32
        %v2840 = vpop.permute.xlu0 %2839
        %2841 = vrot.lane.b32.xlu0 %v2784, 32
        %v2842 = vpop.permute.xlu0 %2841
        %2843 = vrot.lane.b32.xlu0 %v2785, 32
        %v2844 = vpop.permute.xlu0 %2843
        %2845 = vrot.lane.b32.xlu0 %v2786, 32
        %v2846 = vpop.permute.xlu0 %2845
        %2847 = vrot.lane.b32.xlu0 %v2787, 32
        %v2848 = vpop.permute.xlu0 %2847
        %2849 = vrot.lane.b32.xlu0 %v2788, 32
        %v2850 = vpop.permute.xlu0 %2849
        %2851 = vrot.lane.b32.xlu0 %v2789, 32
        %v2852 = vpop.permute.xlu0 %2851
        %2853 = vrot.lane.b32.xlu0 %v2790, 32
        %v2854 = vpop.permute.xlu0 %2853
        %v2863 = vmul.f32 %v2823, %v2840
        %v2864 = vmul.f32 %v2824, %v2842
        %v2865 = vmul.f32 %v2825, %v2844
        %v2866 = vmul.f32 %v2826, %v2846
        %v2867 = vmul.f32 %v2827, %v2848
        %v2868 = vmul.f32 %v2828, %v2850
        %v2869 = vmul.f32 %v2829, %v2852
        %v2870 = vmul.f32 %v2830, %v2854
        %v2871 = vadd.f32 %v2815, %v2863
        %v2872 = vadd.f32 %v2816, %v2864
        %v2873 = vadd.f32 %v2817, %v2865
        %v2874 = vadd.f32 %v2818, %v2866
        %v2875 = vadd.f32 %v2819, %v2867
        %v2876 = vadd.f32 %v2820, %v2868
        %v2877 = vadd.f32 %v2821, %v2869
        %v2878 = vadd.f32 %v2822, %v2870
        %2887 = vrot.lane.b32.xlu0 %v2871, 96
        %v2888 = vpop.permute.xlu0 %2887
        %2889 = vrot.lane.b32.xlu0 %v2872, 96
        %v2890 = vpop.permute.xlu0 %2889
        %2891 = vrot.lane.b32.xlu0 %v2873, 96
        %v2892 = vpop.permute.xlu0 %2891
        %2893 = vrot.lane.b32.xlu0 %v2874, 96
        %v2894 = vpop.permute.xlu0 %2893
        %2895 = vrot.lane.b32.xlu0 %v2875, 96
        %v2896 = vpop.permute.xlu0 %2895
        %2897 = vrot.lane.b32.xlu0 %v2876, 96
        %v2898 = vpop.permute.xlu0 %2897
        %2899 = vrot.lane.b32.xlu0 %v2877, 96
        %v2900 = vpop.permute.xlu0 %2899
        %2901 = vrot.lane.b32.xlu0 %v2878, 96
        %v2902 = vpop.permute.xlu0 %2901
        %vm2911 = vcmask 261120
        %2912 = vst.msk [vmem:[#allocation2] sm:$0xff] %vm2911, %v2888
        %2913 = vst.msk [vmem:[#allocation2 + $0x8] sm:$0xff] %vm2911, %v2890
        %2914 = vst.msk [vmem:[#allocation2 + $0x10] sm:$0xff] %vm2911, %v2892
        %2915 = vst.msk [vmem:[#allocation2 + $0x18] sm:$0xff] %vm2911, %v2894
        %2916 = vst.msk [vmem:[#allocation2 + $0x20] sm:$0xff] %vm2911, %v2896
        %2917 = vst.msk [vmem:[#allocation2 + $0x28] sm:$0xff] %vm2911, %v2898
        %2918 = vst.msk [vmem:[#allocation2 + $0x30] sm:$0xff] %vm2911, %v2900
        %2919 = vst.msk [vmem:[#allocation2 + $0x38] sm:$0xff] %vm2911, %v2902
        %v2920 = vld [vmem:[#allocation3] sm:$0xff]
        %v2921 = vld [vmem:[#allocation3 + $0x8] sm:$0xff]
        %v2922 = vld [vmem:[#allocation3 + $0x10] sm:$0xff]
        %v2923 = vld [vmem:[#allocation3 + $0x18] sm:$0xff]
        %v2924 = vld [vmem:[#allocation3 + $0x20] sm:$0xff]
        %v2925 = vld [vmem:[#allocation3 + $0x28] sm:$0xff]
        %v2926 = vld [vmem:[#allocation3 + $0x30] sm:$0xff]
        %v2927 = vld [vmem:[#allocation3 + $0x38] sm:$0xff]
        %2936 = vrot.lane.b32.xlu0 %v2920, 32
        %v2937 = vpop.permute.xlu0 %2936
        %2938 = vrot.lane.b32.xlu0 %v2921, 32
        %v2939 = vpop.permute.xlu0 %2938
        %2940 = vrot.lane.b32.xlu0 %v2922, 32
        %v2941 = vpop.permute.xlu0 %2940
        %2942 = vrot.lane.b32.xlu0 %v2923, 32
        %v2943 = vpop.permute.xlu0 %2942
        %2944 = vrot.lane.b32.xlu0 %v2924, 32
        %v2945 = vpop.permute.xlu0 %2944
        %2946 = vrot.lane.b32.xlu0 %v2925, 32
        %v2947 = vpop.permute.xlu0 %2946
        %2948 = vrot.lane.b32.xlu0 %v2926, 32
        %v2949 = vpop.permute.xlu0 %2948
        %2950 = vrot.lane.b32.xlu0 %v2927, 32
        %v2951 = vpop.permute.xlu0 %2950
        %v2960 = vsel %vm2911, %v2888, %v2937
        %v2961 = vsel %vm2911, %v2890, %v2939
        %v2962 = vsel %vm2911, %v2892, %v2941
        %v2963 = vsel %vm2911, %v2894, %v2943
        %v2964 = vsel %vm2911, %v2896, %v2945
        %v2965 = vsel %vm2911, %v2898, %v2947
        %v2966 = vsel %vm2911, %v2900, %v2949
        %v2967 = vsel %vm2911, %v2902, %v2951
        %v2968 = vpack.c.bf16 %v2961, %v2960
        %v2969 = vpack.c.bf16 %v2963, %v2962
        %v2970 = vpack.c.bf16 %v2965, %v2964
        %v2971 = vpack.c.bf16 %v2967, %v2966
        %2972 = vmatprep.subr.bf16.mxu0 0
        %2973 = vmatpush1.bf16.msra.mxu0 %v2968
        %2974 = vmatprep.subr.bf16.mxu0 0
        %2975 = vmatpush1.bf16.msra.mxu0 0
        %2976 = vmatprep.subr.bf16.mxu0 0
        %2977 = vmatpush1.bf16.msra.mxu0 0
        %2978 = vmatprep.subr.bf16.mxu0 0
        %2979 = vmatpush1.bf16.msra.mxu0 0
        %2980 = vmatprep.subr.bf16.mxu0 0
        %2981 = vmatpush1.bf16.msra.mxu0 0
        %2982 = vmatprep.subr.bf16.mxu0 0
        %2983 = vmatpush1.bf16.msra.mxu0 0
        %2984 = vmatprep.subr.bf16.mxu0 0
        %2985 = vmatpush1.bf16.msra.mxu0 0
        %2986 = vmatprep.subr.bf16.mxu0 0
        %2987 = vmatpush1.bf16.msra.mxu0 0
        %2988 = vmatprep.subr.bf16.mxu0 0
        %2989 = vmatpush1.bf16.msra.mxu0 0
        %2990 = vmatprep.subr.bf16.mxu0 0
        %2991 = vmatpush1.bf16.msra.mxu0 0
        %2992 = vmatprep.subr.bf16.mxu0 0
        %2993 = vmatpush1.bf16.msra.mxu0 0
        %2994 = vmatprep.subr.bf16.mxu0 0
        %2995 = vmatpush1.bf16.msra.mxu0 0
        %2996 = vmatprep.subr.bf16.mxu0 0
        %2997 = vmatpush1.bf16.msra.mxu0 0
        %2998 = vmatprep.subr.bf16.mxu0 0
        %2999 = vmatpush1.bf16.msra.mxu0 0
        %3000 = vmatprep.subr.bf16.mxu0 0
        %3001 = vmatpush1.bf16.msra.mxu0 0
        %3002 = vmatprep.subr.bf16.mxu0 0
        %3003 = vmatpush1.bf16.msra.mxu0 0
        %3004 = vmatprep.mubr.bf16.mxu0 0
        %3005 = vmatmul.mubr.bf16.gmra.mrb[0].mxu0 %v743
        %v3006 = vpop.f32.mrb[0].mxu0
        %v3007 = vadd.f32 0.0, %v3006
        %v3008 = vpop.f32.mrb[0].mxu0
        %v3009 = vpop.f32.mrb[0].mxu0
        %v3010 = vadd.f32 0.0, %v3009
        %v3011 = vpop.f32.mrb[0].mxu0
        %3012 = vdwg.mxu0
        %3013 = vmatprep.subr.bf16.mxu0 0
        %3014 = vmatpush1.bf16.msra.mxu0 %v2969
        %3015 = vmatprep.subr.bf16.mxu0 0
        %3016 = vmatpush1.bf16.msra.mxu0 0
        %3017 = vmatprep.subr.bf16.mxu0 0
        %3018 = vmatpush1.bf16.msra.mxu0 0
        %3019 = vmatprep.subr.bf16.mxu0 0
        %3020 = vmatpush1.bf16.msra.mxu0 0
        %3021 = vmatprep.subr.bf16.mxu0 0
        %3022 = vmatpush1.bf16.msra.mxu0 0
        %3023 = vmatprep.subr.bf16.mxu0 0
        %3024 = vmatpush1.bf16.msra.mxu0 0
        %3025 = vmatprep.subr.bf16.mxu0 0
        %3026 = vmatpush1.bf16.msra.mxu0 0
        %3027 = vmatprep.subr.bf16.mxu0 0
        %3028 = vmatpush1.bf16.msra.mxu0 0
        %3029 = vmatprep.subr.bf16.mxu0 0
        %3030 = vmatpush1.bf16.msra.mxu0 0
        %3031 = vmatprep.subr.bf16.mxu0 0
        %3032 = vmatpush1.bf16.msra.mxu0 0
        %3033 = vmatprep.subr.bf16.mxu0 0
        %3034 = vmatpush1.bf16.msra.mxu0 0
        %3035 = vmatprep.subr.bf16.mxu0 0
        %3036 = vmatpush1.bf16.msra.mxu0 0
        %3037 = vmatprep.subr.bf16.mxu0 0
        %3038 = vmatpush1.bf16.msra.mxu0 0
        %3039 = vmatprep.subr.bf16.mxu0 0
        %3040 = vmatpush1.bf16.msra.mxu0 0
        %3041 = vmatprep.subr.bf16.mxu0 0
        %3042 = vmatpush1.bf16.msra.mxu0 0
        %3043 = vmatprep.subr.bf16.mxu0 0
        %3044 = vmatpush1.bf16.msra.mxu0 0
        %3045 = vmatprep.mubr.bf16.mxu0 0
        %3046 = vmatmul.mubr.bf16.gmra.mrb[0].mxu0 %v743
        %v3047 = vpop.f32.mrb[0].mxu0
        %v3048 = vadd.f32 0.0, %v3047
        %v3049 = vpop.f32.mrb[0].mxu0
        %v3050 = vpop.f32.mrb[0].mxu0
        %v3051 = vadd.f32 0.0, %v3050
        %v3052 = vpop.f32.mrb[0].mxu0
        %3053 = vdwg.mxu0
        %3054 = vmatprep.subr.bf16.mxu0 0
        %3055 = vmatpush1.bf16.msra.mxu0 %v2970
        %3056 = vmatprep.subr.bf16.mxu0 0
        %3057 = vmatpush1.bf16.msra.mxu0 0
        %3058 = vmatprep.subr.bf16.mxu0 0
        %3059 = vmatpush1.bf16.msra.mxu0 0
        %3060 = vmatprep.subr.bf16.mxu0 0
        %3061 = vmatpush1.bf16.msra.mxu0 0
        %3062 = vmatprep.subr.bf16.mxu0 0
        %3063 = vmatpush1.bf16.msra.mxu0 0
        %3064 = vmatprep.subr.bf16.mxu0 0
        %3065 = vmatpush1.bf16.msra.mxu0 0
        %3066 = vmatprep.subr.bf16.mxu0 0
        %3067 = vmatpush1.bf16.msra.mxu0 0
        %3068 = vmatprep.subr.bf16.mxu0 0
        %3069 = vmatpush1.bf16.msra.mxu0 0
        %3070 = vmatprep.subr.bf16.mxu0 0
        %3071 = vmatpush1.bf16.msra.mxu0 0
        %3072 = vmatprep.subr.bf16.mxu0 0
        %3073 = vmatpush1.bf16.msra.mxu0 0
        %3074 = vmatprep.subr.bf16.mxu0 0
        %3075 = vmatpush1.bf16.msra.mxu0 0
        %3076 = vmatprep.subr.bf16.mxu0 0
        %3077 = vmatpush1.bf16.msra.mxu0 0
        %3078 = vmatprep.subr.bf16.mxu0 0
        %3079 = vmatpush1.bf16.msra.mxu0 0
        %3080 = vmatprep.subr.bf16.mxu0 0
        %3081 = vmatpush1.bf16.msra.mxu0 0
        %3082 = vmatprep.subr.bf16.mxu0 0
        %3083 = vmatpush1.bf16.msra.mxu0 0
        %3084 = vmatprep.subr.bf16.mxu0 0
        %3085 = vmatpush1.bf16.msra.mxu0 0
        %3086 = vmatprep.mubr.bf16.mxu0 0
        %3087 = vmatmul.mubr.bf16.gmra.mrb[0].mxu0 %v743
        %v3088 = vpop.f32.mrb[0].mxu0
        %v3089 = vadd.f32 0.0, %v3088
        %v3090 = vpop.f32.mrb[0].mxu0
        %v3091 = vpop.f32.mrb[0].mxu0
        %v3092 = vadd.f32 0.0, %v3091
        %v3093 = vpop.f32.mrb[0].mxu0
        %3094 = vdwg.mxu0
        %3095 = vmatprep.subr.bf16.mxu0 0
        %3096 = vmatpush1.bf16.msra.mxu0 %v2971
        %3097 = vmatprep.subr.bf16.mxu0 0
        %3098 = vmatpush1.bf16.msra.mxu0 0
        %3099 = vmatprep.subr.bf16.mxu0 0
        %3100 = vmatpush1.bf16.msra.mxu0 0
        %3101 = vmatprep.subr.bf16.mxu0 0
        %3102 = vmatpush1.bf16.msra.mxu0 0
        %3103 = vmatprep.subr.bf16.mxu0 0
        %3104 = vmatpush1.bf16.msra.mxu0 0
        %3105 = vmatprep.subr.bf16.mxu0 0
        %3106 = vmatpush1.bf16.msra.mxu0 0
        %3107 = vmatprep.subr.bf16.mxu0 0
        %3108 = vmatpush1.bf16.msra.mxu0 0
        %3109 = vmatprep.subr.bf16.mxu0 0
        %3110 = vmatpush1.bf16.msra.mxu0 0
        %3111 = vmatprep.subr.bf16.mxu0 0
        %3112 = vmatpush1.bf16.msra.mxu0 0
        %3113 = vmatprep.subr.bf16.mxu0 0
        %3114 = vmatpush1.bf16.msra.mxu0 0
        %3115 = vmatprep.subr.bf16.mxu0 0
        %3116 = vmatpush1.bf16.msra.mxu0 0
        %3117 = vmatprep.subr.bf16.mxu0 0
        %3118 = vmatpush1.bf16.msra.mxu0 0
        %3119 = vmatprep.subr.bf16.mxu0 0
        %3120 = vmatpush1.bf16.msra.mxu0 0
        %3121 = vmatprep.subr.bf16.mxu0 0
        %3122 = vmatpush1.bf16.msra.mxu0 0
        %3123 = vmatprep.subr.bf16.mxu0 0
        %3124 = vmatpush1.bf16.msra.mxu0 0
        %3125 = vmatprep.subr.bf16.mxu0 0
        %3126 = vmatpush1.bf16.msra.mxu0 0
        %3127 = vmatprep.mubr.bf16.mxu0 0
        %3128 = vmatmul.mubr.bf16.gmra.mrb[0].mxu0 %v743
        %v3129 = vpop.f32.mrb[0].mxu0
        %v3130 = vadd.f32 0.0, %v3129
        %v3131 = vpop.f32.mrb[0].mxu0
        %v3132 = vpop.f32.mrb[0].mxu0
        %v3133 = vadd.f32 0.0, %v3132
        %v3134 = vpop.f32.mrb[0].mxu0
        %3135 = vdwg.mxu0
        %v3136 = vpack.c.bf16 %v3010, %v3007
        %v3137 = vpack.c.bf16 %v3051, %v3048
        %v3138 = vpack.c.bf16 %v3092, %v3089
        %v3139 = vpack.c.bf16 %v3133, %v3130
        %3140 = vmatprep.subr.bf16.mxu0 0
        %3141 = vmatpush1.bf16.msra.mxu0 %v3136
        %3142 = vmatprep.subr.bf16.mxu0 0
        %3143 = vmatpush1.bf16.msra.mxu0 0
        %3144 = vmatprep.subr.bf16.mxu0 0
        %3145 = vmatpush1.bf16.msra.mxu0 0
        %3146 = vmatprep.subr.bf16.mxu0 0
        %3147 = vmatpush1.bf16.msra.mxu0 0
        %3148 = vmatprep.subr.bf16.mxu0 0
        %3149 = vmatpush1.bf16.msra.mxu0 0
        %3150 = vmatprep.subr.bf16.mxu0 0
        %3151 = vmatpush1.bf16.msra.mxu0 0
        %3152 = vmatprep.subr.bf16.mxu0 0
        %3153 = vmatpush1.bf16.msra.mxu0 0
        %3154 = vmatprep.subr.bf16.mxu0 0
        %3155 = vmatpush1.bf16.msra.mxu0 0
        %3156 = vmatprep.subr.bf16.mxu0 0
        %3157 = vmatpush1.bf16.msra.mxu0 0
        %3158 = vmatprep.subr.bf16.mxu0 0
        %3159 = vmatpush1.bf16.msra.mxu0 0
        %3160 = vmatprep.subr.bf16.mxu0 0
        %3161 = vmatpush1.bf16.msra.mxu0 0
        %3162 = vmatprep.subr.bf16.mxu0 0
        %3163 = vmatpush1.bf16.msra.mxu0 0
        %3164 = vmatprep.subr.bf16.mxu0 0
        %3165 = vmatpush1.bf16.msra.mxu0 0
        %3166 = vmatprep.subr.bf16.mxu0 0
        %3167 = vmatpush1.bf16.msra.mxu0 0
        %3168 = vmatprep.subr.bf16.mxu0 0
        %3169 = vmatpush1.bf16.msra.mxu0 0
        %3170 = vmatprep.subr.bf16.mxu0 0
        %3171 = vmatpush1.bf16.msra.mxu0 0
        %3172 = vmatprep.mubr.bf16.mxu0 0
        %3173 = vmatmul.mubr.bf16.gmra.mrb[0].mxu0 %v743
        %v3174 = vpop.f32.mrb[0].mxu0
        %v3175 = vadd.f32 0.0, %v3174
        %v3176 = vpop.f32.mrb[0].mxu0
        %v3177 = vpop.f32.mrb[0].mxu0
        %v3178 = vadd.f32 0.0, %v3177
        %v3179 = vpop.f32.mrb[0].mxu0
        %3180 = vdwg.mxu0
        %3181 = vmatprep.subr.bf16.mxu0 0
        %3182 = vmatpush1.bf16.msra.mxu0 %v3137
        %3183 = vmatprep.subr.bf16.mxu0 0
        %3184 = vmatpush1.bf16.msra.mxu0 0
        %3185 = vmatprep.subr.bf16.mxu0 0
        %3186 = vmatpush1.bf16.msra.mxu0 0
        %3187 = vmatprep.subr.bf16.mxu0 0
        %3188 = vmatpush1.bf16.msra.mxu0 0
        %3189 = vmatprep.subr.bf16.mxu0 0
        %3190 = vmatpush1.bf16.msra.mxu0 0
        %3191 = vmatprep.subr.bf16.mxu0 0
        %3192 = vmatpush1.bf16.msra.mxu0 0
        %3193 = vmatprep.subr.bf16.mxu0 0
        %3194 = vmatpush1.bf16.msra.mxu0 0
        %3195 = vmatprep.subr.bf16.mxu0 0
        %3196 = vmatpush1.bf16.msra.mxu0 0
        %3197 = vmatprep.subr.bf16.mxu0 0
        %3198 = vmatpush1.bf16.msra.mxu0 0
        %3199 = vmatprep.subr.bf16.mxu0 0
        %3200 = vmatpush1.bf16.msra.mxu0 0
        %3201 = vmatprep.subr.bf16.mxu0 0
        %3202 = vmatpush1.bf16.msra.mxu0 0
        %3203 = vmatprep.subr.bf16.mxu0 0
        %3204 = vmatpush1.bf16.msra.mxu0 0
        %3205 = vmatprep.subr.bf16.mxu0 0
        %3206 = vmatpush1.bf16.msra.mxu0 0
        %3207 = vmatprep.subr.bf16.mxu0 0
        %3208 = vmatpush1.bf16.msra.mxu0 0
        %3209 = vmatprep.subr.bf16.mxu0 0
        %3210 = vmatpush1.bf16.msra.mxu0 0
        %3211 = vmatprep.subr.bf16.mxu0 0
        %3212 = vmatpush1.bf16.msra.mxu0 0
        %3213 = vmatprep.mubr.bf16.mxu0 0
        %3214 = vmatmul.mubr.bf16.gmra.mrb[0].mxu0 %v743
        %v3215 = vpop.f32.mrb[0].mxu0
        %v3216 = vadd.f32 0.0, %v3215
        %v3217 = vpop.f32.mrb[0].mxu0
        %v3218 = vpop.f32.mrb[0].mxu0
        %v3219 = vadd.f32 0.0, %v3218
        %v3220 = vpop.f32.mrb[0].mxu0
        %3221 = vdwg.mxu0
        %3222 = vmatprep.subr.bf16.mxu0 0
        %3223 = vmatpush1.bf16.msra.mxu0 %v3138
        %3224 = vmatprep.subr.bf16.mxu0 0
        %3225 = vmatpush1.bf16.msra.mxu0 0
        %3226 = vmatprep.subr.bf16.mxu0 0
        %3227 = vmatpush1.bf16.msra.mxu0 0
        %3228 = vmatprep.subr.bf16.mxu0 0
        %3229 = vmatpush1.bf16.msra.mxu0 0
        %3230 = vmatprep.subr.bf16.mxu0 0
        %3231 = vmatpush1.bf16.msra.mxu0 0
        %3232 = vmatprep.subr.bf16.mxu0 0
        %3233 = vmatpush1.bf16.msra.mxu0 0
        %3234 = vmatprep.subr.bf16.mxu0 0
        %3235 = vmatpush1.bf16.msra.mxu0 0
        %3236 = vmatprep.subr.bf16.mxu0 0
        %3237 = vmatpush1.bf16.msra.mxu0 0
        %3238 = vmatprep.subr.bf16.mxu0 0
        %3239 = vmatpush1.bf16.msra.mxu0 0
        %3240 = vmatprep.subr.bf16.mxu0 0
        %3241 = vmatpush1.bf16.msra.mxu0 0
        %3242 = vmatprep.subr.bf16.mxu0 0
        %3243 = vmatpush1.bf16.msra.mxu0 0
        %3244 = vmatprep.subr.bf16.mxu0 0
        %3245 = vmatpush1.bf16.msra.mxu0 0
        %3246 = vmatprep.subr.bf16.mxu0 0
        %3247 = vmatpush1.bf16.msra.mxu0 0
        %3248 = vmatprep.subr.bf16.mxu0 0
        %3249 = vmatpush1.bf16.msra.mxu0 0
        %3250 = vmatprep.subr.bf16.mxu0 0
        %3251 = vmatpush1.bf16.msra.mxu0 0
        %3252 = vmatprep.subr.bf16.mxu0 0
        %3253 = vmatpush1.bf16.msra.mxu0 0
        %3254 = vmatprep.mubr.bf16.mxu0 0
        %3255 = vmatmul.mubr.bf16.gmra.mrb[0].mxu0 %v743
        %v3256 = vpop.f32.mrb[0].mxu0
        %v3257 = vadd.f32 0.0, %v3256
        %v3258 = vpop.f32.mrb[0].mxu0
        %v3259 = vpop.f32.mrb[0].mxu0
        %v3260 = vadd.f32 0.0, %v3259
        %v3261 = vpop.f32.mrb[0].mxu0
        %3262 = vdwg.mxu0
        %3263 = vmatprep.subr.bf16.mxu0 0
        %3264 = vmatpush1.bf16.msra.mxu0 %v3139
        %3265 = vmatprep.subr.bf16.mxu0 0
        %3266 = vmatpush1.bf16.msra.mxu0 0
        %3267 = vmatprep.subr.bf16.mxu0 0
        %3268 = vmatpush1.bf16.msra.mxu0 0
        %3269 = vmatprep.subr.bf16.mxu0 0
        %3270 = vmatpush1.bf16.msra.mxu0 0
        %3271 = vmatprep.subr.bf16.mxu0 0
        %3272 = vmatpush1.bf16.msra.mxu0 0
        %3273 = vmatprep.subr.bf16.mxu0 0
        %3274 = vmatpush1.bf16.msra.mxu0 0
        %3275 = vmatprep.subr.bf16.mxu0 0
        %3276 = vmatpush1.bf16.msra.mxu0 0
        %3277 = vmatprep.subr.bf16.mxu0 0
        %3278 = vmatpush1.bf16.msra.mxu0 0
        %3279 = vmatprep.subr.bf16.mxu0 0
        %3280 = vmatpush1.bf16.msra.mxu0 0
        %3281 = vmatprep.subr.bf16.mxu0 0
        %3282 = vmatpush1.bf16.msra.mxu0 0
        %3283 = vmatprep.subr.bf16.mxu0 0
        %3284 = vmatpush1.bf16.msra.mxu0 0
        %3285 = vmatprep.subr.bf16.mxu0 0
        %3286 = vmatpush1.bf16.msra.mxu0 0
        %3287 = vmatprep.subr.bf16.mxu0 0
        %3288 = vmatpush1.bf16.msra.mxu0 0
        %3289 = vmatprep.subr.bf16.mxu0 0
        %3290 = vmatpush1.bf16.msra.mxu0 0
        %3291 = vmatprep.subr.bf16.mxu0 0
        %3292 = vmatpush1.bf16.msra.mxu0 0
        %3293 = vmatprep.subr.bf16.mxu0 0
        %3294 = vmatpush1.bf16.msra.mxu0 0
        %3295 = vmatprep.mubr.bf16.mxu0 0
        %3296 = vmatmul.mubr.bf16.gmra.mrb[0].mxu0 %v743
        %v3297 = vpop.f32.mrb[0].mxu0
        %v3298 = vadd.f32 0.0, %v3297
        %v3299 = vpop.f32.mrb[0].mxu0
        %v3300 = vpop.f32.mrb[0].mxu0
        %v3301 = vadd.f32 0.0, %v3300
        %v3302 = vpop.f32.mrb[0].mxu0
        %3303 = vdwg.mxu0
        %v3304 = vmul.f32 %v3175, 2.0
        %v3305 = vmul.f32 %v3178, 2.0
        %v3306 = vmul.f32 %v3216, 2.0
        %v3307 = vmul.f32 %v3219, 2.0
        %v3308 = vmul.f32 %v3257, 2.0
        %v3309 = vmul.f32 %v3260, 2.0
        %v3310 = vmul.f32 %v3298, 2.0
        %v3311 = vmul.f32 %v3301, 2.0
        %v3312 = vsub.f32 %v3304, %v2960
        %v3313 = vsub.f32 %v3305, %v2961
        %v3314 = vsub.f32 %v3306, %v2962
        %v3315 = vsub.f32 %v3307, %v2963
        %v3316 = vsub.f32 %v3308, %v2964
        %v3317 = vsub.f32 %v3309, %v2965
        %v3318 = vsub.f32 %v3310, %v2966
        %v3319 = vsub.f32 %v3311, %v2967
        %3320 = vmatprep.subr.bf16.mxu0 0
        %3321 = vmatpush1.bf16.msra.mxu0 %v2968
        %3322 = vmatprep.subr.bf16.mxu0 0
        %3323 = vmatpush1.bf16.msra.mxu0 0
        %3324 = vmatprep.subr.bf16.mxu0 0
        %3325 = vmatpush1.bf16.msra.mxu0 0
        %3326 = vmatprep.subr.bf16.mxu0 0
        %3327 = vmatpush1.bf16.msra.mxu0 0
        %3328 = vmatprep.subr.bf16.mxu0 0
        %3329 = vmatpush1.bf16.msra.mxu0 0
        %3330 = vmatprep.subr.bf16.mxu0 0
        %3331 = vmatpush1.bf16.msra.mxu0 0
        %3332 = vmatprep.subr.bf16.mxu0 0
        %3333 = vmatpush1.bf16.msra.mxu0 0
        %3334 = vmatprep.subr.bf16.mxu0 0
        %3335 = vmatpush1.bf16.msra.mxu0 0
        %3336 = vmatprep.subr.bf16.mxu0 0
        %3337 = vmatpush1.bf16.msra.mxu0 0
        %3338 = vmatprep.subr.bf16.mxu0 0
        %3339 = vmatpush1.bf16.msra.mxu0 0
        %3340 = vmatprep.subr.bf16.mxu0 0
        %3341 = vmatpush1.bf16.msra.mxu0 0
        %3342 = vmatprep.subr.bf16.mxu0 0
        %3343 = vmatpush1.bf16.msra.mxu0 0
        %3344 = vmatprep.subr.bf16.mxu0 0
        %3345 = vmatpush1.bf16.msra.mxu0 0
        %3346 = vmatprep.subr.bf16.mxu0 0
        %3347 = vmatpush1.bf16.msra.mxu0 0
        %3348 = vmatprep.subr.bf16.mxu0 0
        %3349 = vmatpush1.bf16.msra.mxu0 0
        %3350 = vmatprep.subr.bf16.mxu0 0
        %3351 = vmatpush1.bf16.msra.mxu0 0
        %3352 = vmatprep.mubr.bf16.mxu0 0
        %3353 = vmatmul.mubr.bf16.gmra.mrb[0].mxu0 %v1099
        %v3354 = vpop.f32.mrb[0].mxu0
        %v3355 = vadd.f32 0.0, %v3354
        %v3356 = vpop.f32.mrb[0].mxu0
        %v3357 = vpop.f32.mrb[0].mxu0
        %v3358 = vadd.f32 0.0, %v3357
        %v3359 = vpop.f32.mrb[0].mxu0
        %3360 = vdwg.mxu0
        %3361 = vmatprep.subr.bf16.mxu0 0
        %3362 = vmatpush1.bf16.msra.mxu0 %v2969
        %3363 = vmatprep.subr.bf16.mxu0 0
        %3364 = vmatpush1.bf16.msra.mxu0 0
        %3365 = vmatprep.subr.bf16.mxu0 0
        %3366 = vmatpush1.bf16.msra.mxu0 0
        %3367 = vmatprep.subr.bf16.mxu0 0
        %3368 = vmatpush1.bf16.msra.mxu0 0
        %3369 = vmatprep.subr.bf16.mxu0 0
        %3370 = vmatpush1.bf16.msra.mxu0 0
        %3371 = vmatprep.subr.bf16.mxu0 0
        %3372 = vmatpush1.bf16.msra.mxu0 0
        %3373 = vmatprep.subr.bf16.mxu0 0
        %3374 = vmatpush1.bf16.msra.mxu0 0
        %3375 = vmatprep.subr.bf16.mxu0 0
        %3376 = vmatpush1.bf16.msra.mxu0 0
        %3377 = vmatprep.subr.bf16.mxu0 0
        %3378 = vmatpush1.bf16.msra.mxu0 0
        %3379 = vmatprep.subr.bf16.mxu0 0
        %3380 = vmatpush1.bf16.msra.mxu0 0
        %3381 = vmatprep.subr.bf16.mxu0 0
        %3382 = vmatpush1.bf16.msra.mxu0 0
        %3383 = vmatprep.subr.bf16.mxu0 0
        %3384 = vmatpush1.bf16.msra.mxu0 0
        %3385 = vmatprep.subr.bf16.mxu0 0
        %3386 = vmatpush1.bf16.msra.mxu0 0
        %3387 = vmatprep.subr.bf16.mxu0 0
        %3388 = vmatpush1.bf16.msra.mxu0 0
        %3389 = vmatprep.subr.bf16.mxu0 0
        %3390 = vmatpush1.bf16.msra.mxu0 0
        %3391 = vmatprep.subr.bf16.mxu0 0
        %3392 = vmatpush1.bf16.msra.mxu0 0
        %3393 = vmatprep.mubr.bf16.mxu0 0
        %3394 = vmatmul.mubr.bf16.gmra.mrb[0].mxu0 %v1099
        %v3395 = vpop.f32.mrb[0].mxu0
        %v3396 = vadd.f32 0.0, %v3395
        %v3397 = vpop.f32.mrb[0].mxu0
        %v3398 = vpop.f32.mrb[0].mxu0
        %v3399 = vadd.f32 0.0, %v3398
        %v3400 = vpop.f32.mrb[0].mxu0
        %3401 = vdwg.mxu0
        %3402 = vmatprep.subr.bf16.mxu0 0
        %3403 = vmatpush1.bf16.msra.mxu0 %v2970
        %3404 = vmatprep.subr.bf16.mxu0 0
        %3405 = vmatpush1.bf16.msra.mxu0 0
        %3406 = vmatprep.subr.bf16.mxu0 0
        %3407 = vmatpush1.bf16.msra.mxu0 0
        %3408 = vmatprep.subr.bf16.mxu0 0
        %3409 = vmatpush1.bf16.msra.mxu0 0
        %3410 = vmatprep.subr.bf16.mxu0 0
        %3411 = vmatpush1.bf16.msra.mxu0 0
        %3412 = vmatprep.subr.bf16.mxu0 0
        %3413 = vmatpush1.bf16.msra.mxu0 0
        %3414 = vmatprep.subr.bf16.mxu0 0
        %3415 = vmatpush1.bf16.msra.mxu0 0
        %3416 = vmatprep.subr.bf16.mxu0 0
        %3417 = vmatpush1.bf16.msra.mxu0 0
        %3418 = vmatprep.subr.bf16.mxu0 0
        %3419 = vmatpush1.bf16.msra.mxu0 0
        %3420 = vmatprep.subr.bf16.mxu0 0
        %3421 = vmatpush1.bf16.msra.mxu0 0
        %3422 = vmatprep.subr.bf16.mxu0 0
        %3423 = vmatpush1.bf16.msra.mxu0 0
        %3424 = vmatprep.subr.bf16.mxu0 0
        %3425 = vmatpush1.bf16.msra.mxu0 0
        %3426 = vmatprep.subr.bf16.mxu0 0
        %3427 = vmatpush1.bf16.msra.mxu0 0
        %3428 = vmatprep.subr.bf16.mxu0 0
        %3429 = vmatpush1.bf16.msra.mxu0 0
        %3430 = vmatprep.subr.bf16.mxu0 0
        %3431 = vmatpush1.bf16.msra.mxu0 0
        %3432 = vmatprep.subr.bf16.mxu0 0
        %3433 = vmatpush1.bf16.msra.mxu0 0
        %3434 = vmatprep.mubr.bf16.mxu0 0
        %3435 = vmatmul.mubr.bf16.gmra.mrb[0].mxu0 %v1099
        %v3436 = vpop.f32.mrb[0].mxu0
        %v3437 = vadd.f32 0.0, %v3436
        %v3438 = vpop.f32.mrb[0].mxu0
        %v3439 = vpop.f32.mrb[0].mxu0
        %v3440 = vadd.f32 0.0, %v3439
        %v3441 = vpop.f32.mrb[0].mxu0
        %3442 = vdwg.mxu0
        %3443 = vmatprep.subr.bf16.mxu0 0
        %3444 = vmatpush1.bf16.msra.mxu0 %v2971
        %3445 = vmatprep.subr.bf16.mxu0 0
        %3446 = vmatpush1.bf16.msra.mxu0 0
        %3447 = vmatprep.subr.bf16.mxu0 0
        %3448 = vmatpush1.bf16.msra.mxu0 0
        %3449 = vmatprep.subr.bf16.mxu0 0
        %3450 = vmatpush1.bf16.msra.mxu0 0
        %3451 = vmatprep.subr.bf16.mxu0 0
        %3452 = vmatpush1.bf16.msra.mxu0 0
        %3453 = vmatprep.subr.bf16.mxu0 0
        %3454 = vmatpush1.bf16.msra.mxu0 0
        %3455 = vmatprep.subr.bf16.mxu0 0
        %3456 = vmatpush1.bf16.msra.mxu0 0
        %3457 = vmatprep.subr.bf16.mxu0 0
        %3458 = vmatpush1.bf16.msra.mxu0 0
        %3459 = vmatprep.subr.bf16.mxu0 0
        %3460 = vmatpush1.bf16.msra.mxu0 0
        %3461 = vmatprep.subr.bf16.mxu0 0
        %3462 = vmatpush1.bf16.msra.mxu0 0
        %3463 = vmatprep.subr.bf16.mxu0 0
        %3464 = vmatpush1.bf16.msra.mxu0 0
        %3465 = vmatprep.subr.bf16.mxu0 0
        %3466 = vmatpush1.bf16.msra.mxu0 0
        %3467 = vmatprep.subr.bf16.mxu0 0
        %3468 = vmatpush1.bf16.msra.mxu0 0
        %3469 = vmatprep.subr.bf16.mxu0 0
        %3470 = vmatpush1.bf16.msra.mxu0 0
        %3471 = vmatprep.subr.bf16.mxu0 0
        %3472 = vmatpush1.bf16.msra.mxu0 0
        %3473 = vmatprep.subr.bf16.mxu0 0
        %3474 = vmatpush1.bf16.msra.mxu0 0
        %3475 = vmatprep.mubr.bf16.mxu0 0
        %3476 = vmatmul.mubr.bf16.gmra.mrb[0].mxu0 %v1099
        %v3477 = vpop.f32.mrb[0].mxu0
        %v3478 = vadd.f32 0.0, %v3477
        %v3479 = vpop.f32.mrb[0].mxu0
        %v3480 = vpop.f32.mrb[0].mxu0
        %v3481 = vadd.f32 0.0, %v3480
        %v3482 = vpop.f32.mrb[0].mxu0
        %3483 = vdwg.mxu0
        %v3484 = vpack.c.bf16 %v3358, %v3355
        %v3485 = vpack.c.bf16 %v3399, %v3396
        %v3486 = vpack.c.bf16 %v3440, %v3437
        %v3487 = vpack.c.bf16 %v3481, %v3478
        %3488 = vmatprep.subr.bf16.mxu0 0
        %3489 = vmatpush1.bf16.msra.mxu0 %v3484
        %3490 = vmatprep.subr.bf16.mxu0 0
        %3491 = vmatpush1.bf16.msra.mxu0 0
        %3492 = vmatprep.subr.bf16.mxu0 0
        %3493 = vmatpush1.bf16.msra.mxu0 0
        %3494 = vmatprep.subr.bf16.mxu0 0
        %3495 = vmatpush1.bf16.msra.mxu0 0
        %3496 = vmatprep.subr.bf16.mxu0 0
        %3497 = vmatpush1.bf16.msra.mxu0 0
        %3498 = vmatprep.subr.bf16.mxu0 0
        %3499 = vmatpush1.bf16.msra.mxu0 0
        %3500 = vmatprep.subr.bf16.mxu0 0
        %3501 = vmatpush1.bf16.msra.mxu0 0
        %3502 = vmatprep.subr.bf16.mxu0 0
        %3503 = vmatpush1.bf16.msra.mxu0 0
        %3504 = vmatprep.subr.bf16.mxu0 0
        %3505 = vmatpush1.bf16.msra.mxu0 0
        %3506 = vmatprep.subr.bf16.mxu0 0
        %3507 = vmatpush1.bf16.msra.mxu0 0
        %3508 = vmatprep.subr.bf16.mxu0 0
        %3509 = vmatpush1.bf16.msra.mxu0 0
        %3510 = vmatprep.subr.bf16.mxu0 0
        %3511 = vmatpush1.bf16.msra.mxu0 0
        %3512 = vmatprep.subr.bf16.mxu0 0
        %3513 = vmatpush1.bf16.msra.mxu0 0
        %3514 = vmatprep.subr.bf16.mxu0 0
        %3515 = vmatpush1.bf16.msra.mxu0 0
        %3516 = vmatprep.subr.bf16.mxu0 0
        %3517 = vmatpush1.bf16.msra.mxu0 0
        %3518 = vmatprep.subr.bf16.mxu0 0
        %3519 = vmatpush1.bf16.msra.mxu0 0
        %3520 = vmatprep.mubr.bf16.mxu0 0
        %3521 = vmatmul.mubr.bf16.gmra.mrb[0].mxu0 %v1099
        %v3522 = vpop.f32.mrb[0].mxu0
        %v3523 = vadd.f32 0.0, %v3522
        %v3524 = vpop.f32.mrb[0].mxu0
        %v3525 = vpop.f32.mrb[0].mxu0
        %v3526 = vadd.f32 0.0, %v3525
        %v3527 = vpop.f32.mrb[0].mxu0
        %3528 = vdwg.mxu0
        %3529 = vmatprep.subr.bf16.mxu0 0
        %3530 = vmatpush1.bf16.msra.mxu0 %v3485
        %3531 = vmatprep.subr.bf16.mxu0 0
        %3532 = vmatpush1.bf16.msra.mxu0 0
        %3533 = vmatprep.subr.bf16.mxu0 0
        %3534 = vmatpush1.bf16.msra.mxu0 0
        %3535 = vmatprep.subr.bf16.mxu0 0
        %3536 = vmatpush1.bf16.msra.mxu0 0
        %3537 = vmatprep.subr.bf16.mxu0 0
        %3538 = vmatpush1.bf16.msra.mxu0 0
        %3539 = vmatprep.subr.bf16.mxu0 0
        %3540 = vmatpush1.bf16.msra.mxu0 0
        %3541 = vmatprep.subr.bf16.mxu0 0
        %3542 = vmatpush1.bf16.msra.mxu0 0
        %3543 = vmatprep.subr.bf16.mxu0 0
        %3544 = vmatpush1.bf16.msra.mxu0 0
        %3545 = vmatprep.subr.bf16.mxu0 0
        %3546 = vmatpush1.bf16.msra.mxu0 0
        %3547 = vmatprep.subr.bf16.mxu0 0
        %3548 = vmatpush1.bf16.msra.mxu0 0
        %3549 = vmatprep.subr.bf16.mxu0 0
        %3550 = vmatpush1.bf16.msra.mxu0 0
        %3551 = vmatprep.subr.bf16.mxu0 0
        %3552 = vmatpush1.bf16.msra.mxu0 0
        %3553 = vmatprep.subr.bf16.mxu0 0
        %3554 = vmatpush1.bf16.msra.mxu0 0
        %3555 = vmatprep.subr.bf16.mxu0 0
        %3556 = vmatpush1.bf16.msra.mxu0 0
        %3557 = vmatprep.subr.bf16.mxu0 0
        %3558 = vmatpush1.bf16.msra.mxu0 0
        %3559 = vmatprep.subr.bf16.mxu0 0
        %3560 = vmatpush1.bf16.msra.mxu0 0
        %3561 = vmatprep.mubr.bf16.mxu0 0
        %3562 = vmatmul.mubr.bf16.gmra.mrb[0].mxu0 %v1099
        %v3563 = vpop.f32.mrb[0].mxu0
        %v3564 = vadd.f32 0.0, %v3563
        %v3565 = vpop.f32.mrb[0].mxu0
        %v3566 = vpop.f32.mrb[0].mxu0
        %v3567 = vadd.f32 0.0, %v3566
        %v3568 = vpop.f32.mrb[0].mxu0
        %3569 = vdwg.mxu0
        %3570 = vmatprep.subr.bf16.mxu0 0
        %3571 = vmatpush1.bf16.msra.mxu0 %v3486
        %3572 = vmatprep.subr.bf16.mxu0 0
        %3573 = vmatpush1.bf16.msra.mxu0 0
        %3574 = vmatprep.subr.bf16.mxu0 0
        %3575 = vmatpush1.bf16.msra.mxu0 0
        %3576 = vmatprep.subr.bf16.mxu0 0
        %3577 = vmatpush1.bf16.msra.mxu0 0
        %3578 = vmatprep.subr.bf16.mxu0 0
        %3579 = vmatpush1.bf16.msra.mxu0 0
        %3580 = vmatprep.subr.bf16.mxu0 0
        %3581 = vmatpush1.bf16.msra.mxu0 0
        %3582 = vmatprep.subr.bf16.mxu0 0
        %3583 = vmatpush1.bf16.msra.mxu0 0
        %3584 = vmatprep.subr.bf16.mxu0 0
        %3585 = vmatpush1.bf16.msra.mxu0 0
        %3586 = vmatprep.subr.bf16.mxu0 0
        %3587 = vmatpush1.bf16.msra.mxu0 0
        %3588 = vmatprep.subr.bf16.mxu0 0
        %3589 = vmatpush1.bf16.msra.mxu0 0
        %3590 = vmatprep.subr.bf16.mxu0 0
        %3591 = vmatpush1.bf16.msra.mxu0 0
        %3592 = vmatprep.subr.bf16.mxu0 0
        %3593 = vmatpush1.bf16.msra.mxu0 0
        %3594 = vmatprep.subr.bf16.mxu0 0
        %3595 = vmatpush1.bf16.msra.mxu0 0
        %3596 = vmatprep.subr.bf16.mxu0 0
        %3597 = vmatpush1.bf16.msra.mxu0 0
        %3598 = vmatprep.subr.bf16.mxu0 0
        %3599 = vmatpush1.bf16.msra.mxu0 0
        %3600 = vmatprep.subr.bf16.mxu0 0
        %3601 = vmatpush1.bf16.msra.mxu0 0
        %3602 = vmatprep.mubr.bf16.mxu0 0
        %3603 = vmatmul.mubr.bf16.gmra.mrb[0].mxu0 %v1099
        %v3604 = vpop.f32.mrb[0].mxu0
        %v3605 = vadd.f32 0.0, %v3604
        %v3606 = vpop.f32.mrb[0].mxu0
        %v3607 = vpop.f32.mrb[0].mxu0
        %v3608 = vadd.f32 0.0, %v3607
        %v3609 = vpop.f32.mrb[0].mxu0
        %3610 = vdwg.mxu0
        %3611 = vmatprep.subr.bf16.mxu0 0
        %3612 = vmatpush1.bf16.msra.mxu0 %v3487
        %3613 = vmatprep.subr.bf16.mxu0 0
        %3614 = vmatpush1.bf16.msra.mxu0 0
        %3615 = vmatprep.subr.bf16.mxu0 0
        %3616 = vmatpush1.bf16.msra.mxu0 0
        %3617 = vmatprep.subr.bf16.mxu0 0
        %3618 = vmatpush1.bf16.msra.mxu0 0
        %3619 = vmatprep.subr.bf16.mxu0 0
        %3620 = vmatpush1.bf16.msra.mxu0 0
        %3621 = vmatprep.subr.bf16.mxu0 0
        %3622 = vmatpush1.bf16.msra.mxu0 0
        %3623 = vmatprep.subr.bf16.mxu0 0
        %3624 = vmatpush1.bf16.msra.mxu0 0
        %3625 = vmatprep.subr.bf16.mxu0 0
        %3626 = vmatpush1.bf16.msra.mxu0 0
        %3627 = vmatprep.subr.bf16.mxu0 0
        %3628 = vmatpush1.bf16.msra.mxu0 0
        %3629 = vmatprep.subr.bf16.mxu0 0
        %3630 = vmatpush1.bf16.msra.mxu0 0
        %3631 = vmatprep.subr.bf16.mxu0 0
        %3632 = vmatpush1.bf16.msra.mxu0 0
        %3633 = vmatprep.subr.bf16.mxu0 0
        %3634 = vmatpush1.bf16.msra.mxu0 0
        %3635 = vmatprep.subr.bf16.mxu0 0
        %3636 = vmatpush1.bf16.msra.mxu0 0
        %3637 = vmatprep.subr.bf16.mxu0 0
        %3638 = vmatpush1.bf16.msra.mxu0 0
        %3639 = vmatprep.subr.bf16.mxu0 0
        %3640 = vmatpush1.bf16.msra.mxu0 0
        %3641 = vmatprep.subr.bf16.mxu0 0
        %3642 = vmatpush1.bf16.msra.mxu0 0
        %3643 = vmatprep.mubr.bf16.mxu0 0
        %3644 = vmatmul.mubr.bf16.gmra.mrb[0].mxu0 %v1099
        %v3645 = vpop.f32.mrb[0].mxu0
        %v3646 = vadd.f32 0.0, %v3645
        %v3647 = vpop.f32.mrb[0].mxu0
        %v3648 = vpop.f32.mrb[0].mxu0
        %v3649 = vadd.f32 0.0, %v3648
        %v3650 = vpop.f32.mrb[0].mxu0
        %3651 = vdwg.mxu0
        %v3652 = vmul.f32 %v3523, 2.0
        %v3653 = vmul.f32 %v3526, 2.0
        %v3654 = vmul.f32 %v3564, 2.0
        %v3655 = vmul.f32 %v3567, 2.0
        %v3656 = vmul.f32 %v3605, 2.0
        %v3657 = vmul.f32 %v3608, 2.0
        %v3658 = vmul.f32 %v3646, 2.0
        %v3659 = vmul.f32 %v3649, 2.0
        %v3660 = vsub.f32 %v3652, %v2960
        %v3661 = vsub.f32 %v3653, %v2961
        %v3662 = vsub.f32 %v3654, %v2962
        %v3663 = vsub.f32 %v3655, %v2963
        %v3664 = vsub.f32 %v3656, %v2964
        %v3665 = vsub.f32 %v3657, %v2965
        %v3666 = vsub.f32 %v3658, %v2966
        %v3667 = vsub.f32 %v3659, %v2967
        %v3668 = vpack.c.bf16 %v3313, %v3312
        %v3669 = vpack.c.bf16 %v3315, %v3314
        %v3670 = vpack.c.bf16 %v3317, %v3316
        %v3671 = vpack.c.bf16 %v3319, %v3318
        %v3672 = vpack.c.bf16 %v3661, %v3660
        %v3673 = vpack.c.bf16 %v3663, %v3662
        %v3674 = vpack.c.bf16 %v3665, %v3664
        %v3675 = vpack.c.bf16 %v3667, %v3666
        %3680 = vrot.lane.b32.xlu0 %v3136, 64
        %v3681 = vpop.permute.xlu0 %3680
        %3682 = vrot.lane.b32.xlu0 %v3137, 64
        %v3683 = vpop.permute.xlu0 %3682
        %3684 = vrot.lane.b32.xlu0 %v3138, 64
        %v3685 = vpop.permute.xlu0 %3684
        %3686 = vrot.lane.b32.xlu0 %v3139, 64
        %v3687 = vpop.permute.xlu0 %3686
        %3692 = vrot.lane.b32.xlu0 %v3484, 64
        %v3693 = vpop.permute.xlu0 %3692
        %3694 = vrot.lane.b32.xlu0 %v3485, 64
        %v3695 = vpop.permute.xlu0 %3694
        %3696 = vrot.lane.b32.xlu0 %v3486, 64
        %v3697 = vpop.permute.xlu0 %3696
        %3698 = vrot.lane.b32.xlu0 %v3487, 64
        %v3699 = vpop.permute.xlu0 %3698
        %vm3700 = vcmask 523264
        %v3703 = vsel %vm3700, %v2968, %v3681
        %v3707 = vsel %vm3700, %v2969, %v3683
        %v3711 = vsel %vm3700, %v2970, %v3685
        %v3715 = vsel %vm3700, %v2971, %v3687
        %v3719 = vsel %vm3700, %v3668, %v3693
        %v3723 = vsel %vm3700, %v3669, %v3695
        %v3727 = vsel %vm3700, %v3670, %v3697
        %v3731 = vsel %vm3700, %v3671, %v3699
        %v3733 = vld [vmem:[%s8] sm:$0xf]
        %v3734 = vld [vmem:[%s8 + $0x4] sm:$0xf]
        %v3735 = vld [vmem:[%s8 + $0x8] sm:$0xf]
        %v3736 = vld [vmem:[%s8 + $0xc] sm:$0xf]
        %v3737 = vld [vmem:[%s8 + $0x10] sm:$0xf]
        %v3738 = vld [vmem:[%s8 + $0x14] sm:$0xf]
        %v3739 = vld [vmem:[%s8 + $0x18] sm:$0xf]
        %v3740 = vld [vmem:[%s8 + $0x1c] sm:$0xf]
        %v3741 = vld [vmem:[%s8 + $0x20] sm:$0xf]
        %v3742 = vld [vmem:[%s8 + $0x24] sm:$0xf]
        %v3743 = vld [vmem:[%s8 + $0x28] sm:$0xf]
        %v3744 = vld [vmem:[%s8 + $0x2c] sm:$0xf]
        %v3745 = vld [vmem:[%s8 + $0x30] sm:$0xf]
        %v3746 = vld [vmem:[%s8 + $0x34] sm:$0xf]
        %v3747 = vld [vmem:[%s8 + $0x38] sm:$0xf]
        %v3748 = vld [vmem:[%s8 + $0x3c] sm:$0xf]
        %v3749 = vld [vmem:[%s8 + $0x40] sm:$0xf]
        %v3750 = vld [vmem:[%s8 + $0x44] sm:$0xf]
        %v3751 = vld [vmem:[%s8 + $0x48] sm:$0xf]
        %v3752 = vld [vmem:[%s8 + $0x4c] sm:$0xf]
        %v3753 = vld [vmem:[%s8 + $0x50] sm:$0xf]
        %v3754 = vld [vmem:[%s8 + $0x54] sm:$0xf]
        %v3755 = vld [vmem:[%s8 + $0x58] sm:$0xf]
        %v3756 = vld [vmem:[%s8 + $0x5c] sm:$0xf]
        %v3757 = vld [vmem:[%s8 + $0x60] sm:$0xf]
        %v3758 = vld [vmem:[%s8 + $0x64] sm:$0xf]
        %v3759 = vld [vmem:[%s8 + $0x68] sm:$0xf]
        %v3760 = vld [vmem:[%s8 + $0x6c] sm:$0xf]
        %v3761 = vld [vmem:[%s8 + $0x70] sm:$0xf]
        %v3762 = vld [vmem:[%s8 + $0x74] sm:$0xf]
        %v3763 = vld [vmem:[%s8 + $0x78] sm:$0xf]
        %v3764 = vld [vmem:[%s8 + $0x7c] sm:$0xf]
        %v3765 = vld [vmem:[%s8 + $0x80] sm:$0xf]
        %v3766 = vld [vmem:[%s8 + $0x84] sm:$0xf]
        %v3767 = vld [vmem:[%s8 + $0x88] sm:$0xf]
        %v3768 = vld [vmem:[%s8 + $0x8c] sm:$0xf]
        %v3769 = vld [vmem:[%s8 + $0x90] sm:$0xf]
        %v3770 = vld [vmem:[%s8 + $0x94] sm:$0xf]
        %v3771 = vld [vmem:[%s8 + $0x98] sm:$0xf]
        %v3772 = vld [vmem:[%s8 + $0x9c] sm:$0xf]
        %v3773 = vld [vmem:[%s9] sm:$0x1]
        %v3775 = vlaneseq
        %v3776 = vshrl.u32 %v3775, 7
        %v3777 = vsub.s32 0, %v3776
        %v3778 = vrot.slane %v3773, %v3777
        %v3820 = vunpack.c.l.b16 %v3733
        %v3821 = vunpack.c.l.b16 %v3734
        %v3822 = vunpack.c.l.b16 %v3735
        %v3823 = vunpack.c.l.b16 %v3736
        %v3824 = vunpack.c.l.b16 %v3737
        %v3825 = vunpack.c.l.b16 %v3738
        %v3826 = vunpack.c.l.b16 %v3739
        %v3827 = vunpack.c.l.b16 %v3740
        %v3828 = vunpack.c.l.b16 %v3741
        %v3829 = vunpack.c.l.b16 %v3742
        %v3830 = vunpack.c.l.b16 %v3743
        %v3831 = vunpack.c.l.b16 %v3744
        %v3832 = vunpack.c.l.b16 %v3745
        %v3833 = vunpack.c.l.b16 %v3746
        %v3834 = vunpack.c.l.b16 %v3747
        %v3835 = vunpack.c.l.b16 %v3748
        %v3836 = vunpack.c.l.b16 %v3749
        %v3837 = vunpack.c.l.b16 %v3750
        %v3838 = vunpack.c.l.b16 %v3751
        %v3839 = vunpack.c.l.b16 %v3752
        %v3840 = vunpack.c.l.b16 %v3753
        %v3841 = vunpack.c.l.b16 %v3754
        %v3842 = vunpack.c.l.b16 %v3755
        %v3843 = vunpack.c.l.b16 %v3756
        %v3844 = vunpack.c.l.b16 %v3757
        %v3845 = vunpack.c.l.b16 %v3758
        %v3846 = vunpack.c.l.b16 %v3759
        %v3847 = vunpack.c.l.b16 %v3760
        %v3848 = vunpack.c.l.b16 %v3761
        %v3849 = vunpack.c.l.b16 %v3762
        %v3850 = vunpack.c.l.b16 %v3763
        %v3851 = vunpack.c.l.b16 %v3764
        %v3852 = vunpack.c.l.b16 %v3765
        %v3853 = vunpack.c.l.b16 %v3766
        %v3854 = vunpack.c.l.b16 %v3767
        %v3855 = vunpack.c.l.b16 %v3768
        %v3856 = vunpack.c.l.b16 %v3769
        %v3857 = vunpack.c.l.b16 %v3770
        %v3858 = vunpack.c.l.b16 %v3771
        %v3859 = vunpack.c.l.b16 %v3772
        %v3860 = vpack.c.b16 %v3821, %v3820
        %v3861 = vpack.c.b16 %v3823, %v3822
        %v3862 = vpack.c.b16 %v3825, %v3824
        %v3863 = vpack.c.b16 %v3827, %v3826
        %v3864 = vpack.c.b16 %v3829, %v3828
        %v3865 = vpack.c.b16 %v3831, %v3830
        %v3866 = vpack.c.b16 %v3833, %v3832
        %v3867 = vpack.c.b16 %v3835, %v3834
        %v3868 = vpack.c.b16 %v3837, %v3836
        %v3869 = vpack.c.b16 %v3839, %v3838
        %v3870 = vpack.c.b16 %v3841, %v3840
        %v3871 = vpack.c.b16 %v3843, %v3842
        %v3872 = vpack.c.b16 %v3845, %v3844
        %v3873 = vpack.c.b16 %v3847, %v3846
        %v3874 = vpack.c.b16 %v3849, %v3848
        %v3875 = vpack.c.b16 %v3851, %v3850
        %v3876 = vpack.c.b16 %v3853, %v3852
        %v3877 = vpack.c.b16 %v3855, %v3854
        %v3878 = vpack.c.b16 %v3857, %v3856
        %v3879 = vpack.c.b16 %v3859, %v3858
        %v3901 = vsel %vm3700, %v3672, 0
        %v3904 = vsel %vm3700, %v3673, 0
        %v3907 = vsel %vm3700, %v3674, 0
        %v3910 = vsel %vm3700, %v3675, 0
        %3912 = vmatprep.subr.bf16.mxu0 0
        %3913 = vmatpush1.bf16.msra.mxu0 %v3860
        %3914 = vmatprep.subr.bf16.mxu0 0
        %3915 = vmatpush1.bf16.msra.mxu0 %v3861
        %3916 = vmatprep.subr.bf16.mxu0 0
        %3917 = vmatpush1.bf16.msra.mxu0 %v3862
        %3918 = vmatprep.subr.bf16.mxu0 0
        %3919 = vmatpush1.bf16.msra.mxu0 %v3863
        %3920 = vmatprep.subr.bf16.mxu0 0
        %3921 = vmatpush1.bf16.msra.mxu0 %v3864
        %3922 = vmatprep.subr.bf16.mxu0 0
        %3923 = vmatpush1.bf16.msra.mxu0 %v3865
        %3924 = vmatprep.subr.bf16.mxu0 0
        %3925 = vmatpush1.bf16.msra.mxu0 %v3866
        %3926 = vmatprep.subr.bf16.mxu0 0
        %3927 = vmatpush1.bf16.msra.mxu0 %v3867
        %3928 = vmatprep.subr.bf16.mxu0 0
        %3929 = vmatpush1.bf16.msra.mxu0 %v3868
        %3930 = vmatprep.subr.bf16.mxu0 0
        %3931 = vmatpush1.bf16.msra.mxu0 %v3869
        %3932 = vmatprep.subr.bf16.mxu0 0
        %3933 = vmatpush1.bf16.msra.mxu0 %v3870
        %3934 = vmatprep.subr.bf16.mxu0 0
        %3935 = vmatpush1.bf16.msra.mxu0 %v3871
        %3936 = vmatprep.subr.bf16.mxu0 0
        %3937 = vmatpush1.bf16.msra.mxu0 %v3872
        %3938 = vmatprep.subr.bf16.mxu0 0
        %3939 = vmatpush1.bf16.msra.mxu0 %v3873
        %3940 = vmatprep.subr.bf16.mxu0 0
        %3941 = vmatpush1.bf16.msra.mxu0 %v3874
        %3942 = vmatprep.subr.bf16.mxu0 0
        %3943 = vmatpush1.bf16.msra.mxu0 %v3875
        %3944 = vmatprep.mubr.bf16.mxu0 %v3719
        %3945 = vmatmul.mubr.bf16.gmra.mrb[0].mxu0 %v3703
        %v3946 = vpop.f32.mrb[0].mxu0
        %v3947 = vadd.f32 %v3778, %v3946
        %v3948 = vpop.f32.mrb[0].mxu0
        %v3949 = vpop.f32.mrb[0].mxu0
        %v3950 = vadd.f32 %v3778, %v3949
        %v3951 = vpop.f32.mrb[0].mxu0
        %3952 = vmatprep.mubr.bf16.mxu0 %v3723
        %3953 = vmatmul.mubr.bf16.gmra.mrb[0].mxu0 %v3707
        %v3954 = vpop.f32.mrb[0].mxu0
        %v3955 = vadd.f32 %v3778, %v3954
        %v3956 = vpop.f32.mrb[0].mxu0
        %v3957 = vpop.f32.mrb[0].mxu0
        %v3958 = vadd.f32 %v3778, %v3957
        %v3959 = vpop.f32.mrb[0].mxu0
        %3960 = vmatprep.mubr.bf16.mxu0 %v3727
        %3961 = vmatmul.mubr.bf16.gmra.mrb[0].mxu0 %v3711
        %v3962 = vpop.f32.mrb[0].mxu0
        %v3963 = vadd.f32 %v3778, %v3962
        %v3964 = vpop.f32.mrb[0].mxu0
        %v3965 = vpop.f32.mrb[0].mxu0
        %v3966 = vadd.f32 %v3778, %v3965
        %v3967 = vpop.f32.mrb[0].mxu0
        %3968 = vmatprep.mubr.bf16.mxu0 %v3731
        %3969 = vmatmul.mubr.bf16.gmra.mrb[0].mxu0 %v3715
        %v3970 = vpop.f32.mrb[0].mxu0
        %v3971 = vadd.f32 %v3778, %v3970
        %v3972 = vpop.f32.mrb[0].mxu0
        %v3973 = vpop.f32.mrb[0].mxu0
        %v3974 = vadd.f32 %v3778, %v3973
        %v3975 = vpop.f32.mrb[0].mxu0
        %3976 = vdwg.mxu0
        %3977 = vmatprep.subr.bf16.mxu0 0
        %3978 = vmatpush1.bf16.msra.mxu0 %v3876
        %3979 = vmatprep.subr.bf16.mxu0 0
        %3980 = vmatpush1.bf16.msra.mxu0 %v3877
        %3981 = vmatprep.subr.bf16.mxu0 0
        %3982 = vmatpush1.bf16.msra.mxu0 %v3878
        %3983 = vmatprep.subr.bf16.mxu0 0
        %3984 = vmatpush1.bf16.msra.mxu0 %v3879
        %3985 = vmatprep.subr.bf16.mxu0 0
        %3986 = vmatpush1.bf16.msra.mxu0 0
        %3987 = vmatprep.subr.bf16.mxu0 0
        %3988 = vmatpush1.bf16.msra.mxu0 0
        %3989 = vmatprep.subr.bf16.mxu0 0
        %3990 = vmatpush1.bf16.msra.mxu0 0
        %3991 = vmatprep.subr.bf16.mxu0 0
        %3992 = vmatpush1.bf16.msra.mxu0 0
        %3993 = vmatprep.subr.bf16.mxu0 0
        %3994 = vmatpush1.bf16.msra.mxu0 0
        %3995 = vmatprep.subr.bf16.mxu0 0
        %3996 = vmatpush1.bf16.msra.mxu0 0
        %3997 = vmatprep.subr.bf16.mxu0 0
        %3998 = vmatpush1.bf16.msra.mxu0 0
        %3999 = vmatprep.subr.bf16.mxu0 0
        %4000 = vmatpush1.bf16.msra.mxu0 0
        %4001 = vmatprep.subr.bf16.mxu0 0
        %4002 = vmatpush1.bf16.msra.mxu0 0
        %4003 = vmatprep.subr.bf16.mxu0 0
        %4004 = vmatpush1.bf16.msra.mxu0 0
        %4005 = vmatprep.subr.bf16.mxu0 0
        %4006 = vmatpush1.bf16.msra.mxu0 0
        %4007 = vmatprep.subr.bf16.mxu0 0
        %4008 = vmatpush1.bf16.msra.mxu0 0
        %4009 = vmatprep.mubr.bf16.mxu0 0
        %4010 = vmatmul.mubr.bf16.gmra.mrb[0].mxu0 %v3901
        %v4011 = vpop.f32.mrb[0].mxu0
        %v4012 = vadd.f32 %v3947, %v4011
        %v4013 = vpop.f32.mrb[0].mxu0
        %v4014 = vpop.f32.mrb[0].mxu0
        %v4015 = vadd.f32 %v3950, %v4014
        %v4016 = vpop.f32.mrb[0].mxu0
        %4017 = vmatprep.mubr.bf16.mxu0 0
        %4018 = vmatmul.mubr.bf16.gmra.mrb[0].mxu0 %v3904
        %v4019 = vpop.f32.mrb[0].mxu0
        %v4020 = vadd.f32 %v3955, %v4019
        %v4021 = vpop.f32.mrb[0].mxu0
        %v4022 = vpop.f32.mrb[0].mxu0
        %v4023 = vadd.f32 %v3958, %v4022
        %v4024 = vpop.f32.mrb[0].mxu0
        %4025 = vmatprep.mubr.bf16.mxu0 0
        %4026 = vmatmul.mubr.bf16.gmra.mrb[0].mxu0 %v3907
        %v4027 = vpop.f32.mrb[0].mxu0
        %v4028 = vadd.f32 %v3963, %v4027
        %v4029 = vpop.f32.mrb[0].mxu0
        %v4030 = vpop.f32.mrb[0].mxu0
        %v4031 = vadd.f32 %v3966, %v4030
        %v4032 = vpop.f32.mrb[0].mxu0
        %4033 = vmatprep.mubr.bf16.mxu0 0
        %4034 = vmatmul.mubr.bf16.gmra.mrb[0].mxu0 %v3910
        %v4035 = vpop.f32.mrb[0].mxu0
        %v4036 = vadd.f32 %v3971, %v4035
        %v4037 = vpop.f32.mrb[0].mxu0
        %v4038 = vpop.f32.mrb[0].mxu0
        %v4039 = vadd.f32 %v3974, %v4038
        %v4040 = vpop.f32.mrb[0].mxu0
        %4041 = vdwg.mxu0
        %v4042 = vxor.u32 %v4012, 2147483648
        %v4043 = vxor.u32 %v4015, 2147483648
        %v4044 = vxor.u32 %v4020, 2147483648
        %v4045 = vxor.u32 %v4023, 2147483648
        %v4046 = vxor.u32 %v4028, 2147483648
        %v4047 = vxor.u32 %v4031, 2147483648
        %v4048 = vxor.u32 %v4036, 2147483648
        %v4049 = vxor.u32 %v4039, 2147483648
        %v4050 = vmul.f32 %v4042, 1.442695
        %v4051 = vpow.pop %v4050
        %v4052 = vmul.f32 %v4043, 1.442695
        %v4053 = vpow.pop %v4052
        %v4054 = vmul.f32 %v4044, 1.442695
        %v4055 = vpow.pop %v4054
        %v4056 = vmul.f32 %v4045, 1.442695
        %v4057 = vpow.pop %v4056
        %v4058 = vmul.f32 %v4046, 1.442695
        %v4059 = vpow.pop %v4058
        %v4060 = vmul.f32 %v4047, 1.442695
        %v4061 = vpow.pop %v4060
        %v4062 = vmul.f32 %v4048, 1.442695
        %v4063 = vpow.pop %v4062
        %v4064 = vmul.f32 %v4049, 1.442695
        %v4065 = vpow.pop %v4064
        %v4066 = vadd.f32 %v4051, 1.0
        %v4067 = vadd.f32 %v4053, 1.0
        %v4068 = vadd.f32 %v4055, 1.0
        %v4069 = vadd.f32 %v4057, 1.0
        %v4070 = vadd.f32 %v4059, 1.0
        %v4071 = vadd.f32 %v4061, 1.0
        %v4072 = vadd.f32 %v4063, 1.0
        %v4073 = vadd.f32 %v4065, 1.0
        %v4074 = vrcp.pop %v4066
        %v4075 = vmul.f32 1.0, %v4074
        %v4076 = vrcp.pop %v4067
        %v4077 = vmul.f32 1.0, %v4076
        %v4078 = vrcp.pop %v4068
        %v4079 = vmul.f32 1.0, %v4078
        %v4080 = vrcp.pop %v4069
        %v4081 = vmul.f32 1.0, %v4080
        %v4082 = vrcp.pop %v4070
        %v4083 = vmul.f32 1.0, %v4082
        %v4084 = vrcp.pop %v4071
        %v4085 = vmul.f32 1.0, %v4084
        %v4086 = vrcp.pop %v4072
        %v4087 = vmul.f32 1.0, %v4086
        %v4088 = vrcp.pop %v4073
        %v4089 = vmul.f32 1.0, %v4088
        %v4090 = vmul.f32 %v4075, %v2920
        %v4091 = vmul.f32 %v4077, %v2921
        %v4092 = vmul.f32 %v4079, %v2922
        %v4093 = vmul.f32 %v4081, %v2923
        %v4094 = vmul.f32 %v4083, %v2924
        %v4095 = vmul.f32 %v4085, %v2925
        %v4096 = vmul.f32 %v4087, %v2926
        %v4097 = vmul.f32 %v4089, %v2927
        %4106 = vrot.lane.b32.xlu0 %v4090, 32
        %v4107 = vpop.permute.xlu0 %4106
        %4108 = vrot.lane.b32.xlu0 %v4091, 32
        %v4109 = vpop.permute.xlu0 %4108
        %4110 = vrot.lane.b32.xlu0 %v4092, 32
        %v4111 = vpop.permute.xlu0 %4110
        %4112 = vrot.lane.b32.xlu0 %v4093, 32
        %v4113 = vpop.permute.xlu0 %4112
        %4114 = vrot.lane.b32.xlu0 %v4094, 32
        %v4115 = vpop.permute.xlu0 %4114
        %4116 = vrot.lane.b32.xlu0 %v4095, 32
        %v4117 = vpop.permute.xlu0 %4116
        %4118 = vrot.lane.b32.xlu0 %v4096, 32
        %v4119 = vpop.permute.xlu0 %4118
        %4120 = vrot.lane.b32.xlu0 %v4097, 32
        %v4121 = vpop.permute.xlu0 %4120
        %v4130 = vsel %vm2911, %v2888, %v4107
        %v4131 = vsel %vm2911, %v2890, %v4109
        %v4132 = vsel %vm2911, %v2892, %v4111
        %v4133 = vsel %vm2911, %v2894, %v4113
        %v4134 = vsel %vm2911, %v2896, %v4115
        %v4135 = vsel %vm2911, %v2898, %v4117
        %v4136 = vsel %vm2911, %v2900, %v4119
        %v4137 = vsel %vm2911, %v2902, %v4121
        %v4138 = vpack.c.bf16 %v4131, %v4130
        %v4139 = vpack.c.bf16 %v4133, %v4132
        %v4140 = vpack.c.bf16 %v4135, %v4134
        %v4141 = vpack.c.bf16 %v4137, %v4136
        %4142 = vmatprep.subr.bf16.mxu0 0
        %4143 = vmatpush1.bf16.msra.mxu0 %v4138
        %4144 = vmatprep.subr.bf16.mxu0 0
        %4145 = vmatpush1.bf16.msra.mxu0 0
        %4146 = vmatprep.subr.bf16.mxu0 0
        %4147 = vmatpush1.bf16.msra.mxu0 0
        %4148 = vmatprep.subr.bf16.mxu0 0
        %4149 = vmatpush1.bf16.msra.mxu0 0
        %4150 = vmatprep.subr.bf16.mxu0 0
        %4151 = vmatpush1.bf16.msra.mxu0 0
        %4152 = vmatprep.subr.bf16.mxu0 0
        %4153 = vmatpush1.bf16.msra.mxu0 0
        %4154 = vmatprep.subr.bf16.mxu0 0
        %4155 = vmatpush1.bf16.msra.mxu0 0
        %4156 = vmatprep.subr.bf16.mxu0 0
        %4157 = vmatpush1.bf16.msra.mxu0 0
        %4158 = vmatprep.subr.bf16.mxu0 0
        %4159 = vmatpush1.bf16.msra.mxu0 0
        %4160 = vmatprep.subr.bf16.mxu0 0
        %4161 = vmatpush1.bf16.msra.mxu0 0
        %4162 = vmatprep.subr.bf16.mxu0 0
        %4163 = vmatpush1.bf16.msra.mxu0 0
        %4164 = vmatprep.subr.bf16.mxu0 0
        %4165 = vmatpush1.bf16.msra.mxu0 0
        %4166 = vmatprep.subr.bf16.mxu0 0
        %4167 = vmatpush1.bf16.msra.mxu0 0
        %4168 = vmatprep.subr.bf16.mxu0 0
        %4169 = vmatpush1.bf16.msra.mxu0 0
        %4170 = vmatprep.subr.bf16.mxu0 0
        %4171 = vmatpush1.bf16.msra.mxu0 0
        %4172 = vmatprep.subr.bf16.mxu0 0
        %4173 = vmatpush1.bf16.msra.mxu0 0
        %4174 = vmatprep.mubr.bf16.mxu0 0
        %4175 = vmatmul.mubr.bf16.gmra.mrb[0].mxu0 %v743
        %v4176 = vpop.f32.mrb[0].mxu0
        %v4177 = vadd.f32 0.0, %v4176
        %v4178 = vpop.f32.mrb[0].mxu0
        %v4179 = vpop.f32.mrb[0].mxu0
        %v4180 = vadd.f32 0.0, %v4179
        %v4181 = vpop.f32.mrb[0].mxu0
        %4182 = vdwg.mxu0
        %4183 = vmatprep.subr.bf16.mxu0 0
        %4184 = vmatpush1.bf16.msra.mxu0 %v4139
        %4185 = vmatprep.subr.bf16.mxu0 0
        %4186 = vmatpush1.bf16.msra.mxu0 0
        %4187 = vmatprep.subr.bf16.mxu0 0
        %4188 = vmatpush1.bf16.msra.mxu0 0
        %4189 = vmatprep.subr.bf16.mxu0 0
        %4190 = vmatpush1.bf16.msra.mxu0 0
        %4191 = vmatprep.subr.bf16.mxu0 0
        %4192 = vmatpush1.bf16.msra.mxu0 0
        %4193 = vmatprep.subr.bf16.mxu0 0
        %4194 = vmatpush1.bf16.msra.mxu0 0
        %4195 = vmatprep.subr.bf16.mxu0 0
        %4196 = vmatpush1.bf16.msra.mxu0 0
        %4197 = vmatprep.subr.bf16.mxu0 0
        %4198 = vmatpush1.bf16.msra.mxu0 0
        %4199 = vmatprep.subr.bf16.mxu0 0
        %4200 = vmatpush1.bf16.msra.mxu0 0
        %4201 = vmatprep.subr.bf16.mxu0 0
        %4202 = vmatpush1.bf16.msra.mxu0 0
        %4203 = vmatprep.subr.bf16.mxu0 0
        %4204 = vmatpush1.bf16.msra.mxu0 0
        %4205 = vmatprep.subr.bf16.mxu0 0
        %4206 = vmatpush1.bf16.msra.mxu0 0
        %4207 = vmatprep.subr.bf16.mxu0 0
        %4208 = vmatpush1.bf16.msra.mxu0 0
        %4209 = vmatprep.subr.bf16.mxu0 0
        %4210 = vmatpush1.bf16.msra.mxu0 0
        %4211 = vmatprep.subr.bf16.mxu0 0
        %4212 = vmatpush1.bf16.msra.mxu0 0
        %4213 = vmatprep.subr.bf16.mxu0 0
        %4214 = vmatpush1.bf16.msra.mxu0 0
        %4215 = vmatprep.mubr.bf16.mxu0 0
        %4216 = vmatmul.mubr.bf16.gmra.mrb[0].mxu0 %v743
        %v4217 = vpop.f32.mrb[0].mxu0
        %v4218 = vadd.f32 0.0, %v4217
        %v4219 = vpop.f32.mrb[0].mxu0
        %v4220 = vpop.f32.mrb[0].mxu0
        %v4221 = vadd.f32 0.0, %v4220
        %v4222 = vpop.f32.mrb[0].mxu0
        %4223 = vdwg.mxu0
        %4224 = vmatprep.subr.bf16.mxu0 0
        %4225 = vmatpush1.bf16.msra.mxu0 %v4140
        %4226 = vmatprep.subr.bf16.mxu0 0
        %4227 = vmatpush1.bf16.msra.mxu0 0
        %4228 = vmatprep.subr.bf16.mxu0 0
        %4229 = vmatpush1.bf16.msra.mxu0 0
        %4230 = vmatprep.subr.bf16.mxu0 0
        %4231 = vmatpush1.bf16.msra.mxu0 0
        %4232 = vmatprep.subr.bf16.mxu0 0
        %4233 = vmatpush1.bf16.msra.mxu0 0
        %4234 = vmatprep.subr.bf16.mxu0 0
        %4235 = vmatpush1.bf16.msra.mxu0 0
        %4236 = vmatprep.subr.bf16.mxu0 0
        %4237 = vmatpush1.bf16.msra.mxu0 0
        %4238 = vmatprep.subr.bf16.mxu0 0
        %4239 = vmatpush1.bf16.msra.mxu0 0
        %4240 = vmatprep.subr.bf16.mxu0 0
        %4241 = vmatpush1.bf16.msra.mxu0 0
        %4242 = vmatprep.subr.bf16.mxu0 0
        %4243 = vmatpush1.bf16.msra.mxu0 0
        %4244 = vmatprep.subr.bf16.mxu0 0
        %4245 = vmatpush1.bf16.msra.mxu0 0
        %4246 = vmatprep.subr.bf16.mxu0 0
        %4247 = vmatpush1.bf16.msra.mxu0 0
        %4248 = vmatprep.subr.bf16.mxu0 0
        %4249 = vmatpush1.bf16.msra.mxu0 0
        %4250 = vmatprep.subr.bf16.mxu0 0
        %4251 = vmatpush1.bf16.msra.mxu0 0
        %4252 = vmatprep.subr.bf16.mxu0 0
        %4253 = vmatpush1.bf16.msra.mxu0 0
        %4254 = vmatprep.subr.bf16.mxu0 0
        %4255 = vmatpush1.bf16.msra.mxu0 0
        %4256 = vmatprep.mubr.bf16.mxu0 0
        %4257 = vmatmul.mubr.bf16.gmra.mrb[0].mxu0 %v743
        %v4258 = vpop.f32.mrb[0].mxu0
        %v4259 = vadd.f32 0.0, %v4258
        %v4260 = vpop.f32.mrb[0].mxu0
        %v4261 = vpop.f32.mrb[0].mxu0
        %v4262 = vadd.f32 0.0, %v4261
        %v4263 = vpop.f32.mrb[0].mxu0
        %4264 = vdwg.mxu0
        %4265 = vmatprep.subr.bf16.mxu0 0
        %4266 = vmatpush1.bf16.msra.mxu0 %v4141
        %4267 = vmatprep.subr.bf16.mxu0 0
        %4268 = vmatpush1.bf16.msra.mxu0 0
        %4269 = vmatprep.subr.bf16.mxu0 0
        %4270 = vmatpush1.bf16.msra.mxu0 0
        %4271 = vmatprep.subr.bf16.mxu0 0
        %4272 = vmatpush1.bf16.msra.mxu0 0
        %4273 = vmatprep.subr.bf16.mxu0 0
        %4274 = vmatpush1.bf16.msra.mxu0 0
        %4275 = vmatprep.subr.bf16.mxu0 0
        %4276 = vmatpush1.bf16.msra.mxu0 0
        %4277 = vmatprep.subr.bf16.mxu0 0
        %4278 = vmatpush1.bf16.msra.mxu0 0
        %4279 = vmatprep.subr.bf16.mxu0 0
        %4280 = vmatpush1.bf16.msra.mxu0 0
        %4281 = vmatprep.subr.bf16.mxu0 0
        %4282 = vmatpush1.bf16.msra.mxu0 0
        %4283 = vmatprep.subr.bf16.mxu0 0
        %4284 = vmatpush1.bf16.msra.mxu0 0
        %4285 = vmatprep.subr.bf16.mxu0 0
        %4286 = vmatpush1.bf16.msra.mxu0 0
        %4287 = vmatprep.subr.bf16.mxu0 0
        %4288 = vmatpush1.bf16.msra.mxu0 0
        %4289 = vmatprep.subr.bf16.mxu0 0
        %4290 = vmatpush1.bf16.msra.mxu0 0
        %4291 = vmatprep.subr.bf16.mxu0 0
        %4292 = vmatpush1.bf16.msra.mxu0 0
        %4293 = vmatprep.subr.bf16.mxu0 0
        %4294 = vmatpush1.bf16.msra.mxu0 0
        %4295 = vmatprep.subr.bf16.mxu0 0
        %4296 = vmatpush1.bf16.msra.mxu0 0
        %4297 = vmatprep.mubr.bf16.mxu0 0
        %4298 = vmatmul.mubr.bf16.gmra.mrb[0].mxu0 %v743
        %v4299 = vpop.f32.mrb[0].mxu0
        %v4300 = vadd.f32 0.0, %v4299
        %v4301 = vpop.f32.mrb[0].mxu0
        %v4302 = vpop.f32.mrb[0].mxu0
        %v4303 = vadd.f32 0.0, %v4302
        %v4304 = vpop.f32.mrb[0].mxu0
        %4305 = vdwg.mxu0
        %v4306 = vpack.c.bf16 %v4180, %v4177
        %v4307 = vpack.c.bf16 %v4221, %v4218
        %v4308 = vpack.c.bf16 %v4262, %v4259
        %v4309 = vpack.c.bf16 %v4303, %v4300
        %4310 = vmatprep.subr.bf16.mxu0 0
        %4311 = vmatpush1.bf16.msra.mxu0 %v4306
        %4312 = vmatprep.subr.bf16.mxu0 0
        %4313 = vmatpush1.bf16.msra.mxu0 0
        %4314 = vmatprep.subr.bf16.mxu0 0
        %4315 = vmatpush1.bf16.msra.mxu0 0
        %4316 = vmatprep.subr.bf16.mxu0 0
        %4317 = vmatpush1.bf16.msra.mxu0 0
        %4318 = vmatprep.subr.bf16.mxu0 0
        %4319 = vmatpush1.bf16.msra.mxu0 0
        %4320 = vmatprep.subr.bf16.mxu0 0
        %4321 = vmatpush1.bf16.msra.mxu0 0
        %4322 = vmatprep.subr.bf16.mxu0 0
        %4323 = vmatpush1.bf16.msra.mxu0 0
        %4324 = vmatprep.subr.bf16.mxu0 0
        %4325 = vmatpush1.bf16.msra.mxu0 0
        %4326 = vmatprep.subr.bf16.mxu0 0
        %4327 = vmatpush1.bf16.msra.mxu0 0
        %4328 = vmatprep.subr.bf16.mxu0 0
        %4329 = vmatpush1.bf16.msra.mxu0 0
        %4330 = vmatprep.subr.bf16.mxu0 0
        %4331 = vmatpush1.bf16.msra.mxu0 0
        %4332 = vmatprep.subr.bf16.mxu0 0
        %4333 = vmatpush1.bf16.msra.mxu0 0
        %4334 = vmatprep.subr.bf16.mxu0 0
        %4335 = vmatpush1.bf16.msra.mxu0 0
        %4336 = vmatprep.subr.bf16.mxu0 0
        %4337 = vmatpush1.bf16.msra.mxu0 0
        %4338 = vmatprep.subr.bf16.mxu0 0
        %4339 = vmatpush1.bf16.msra.mxu0 0
        %4340 = vmatprep.subr.bf16.mxu0 0
        %4341 = vmatpush1.bf16.msra.mxu0 0
        %4342 = vmatprep.mubr.bf16.mxu0 0
        %4343 = vmatmul.mubr.bf16.gmra.mrb[0].mxu0 %v743
        %v4344 = vpop.f32.mrb[0].mxu0
        %v4345 = vadd.f32 0.0, %v4344
        %v4346 = vpop.f32.mrb[0].mxu0
        %v4347 = vpop.f32.mrb[0].mxu0
        %v4348 = vadd.f32 0.0, %v4347
        %v4349 = vpop.f32.mrb[0].mxu0
        %4350 = vdwg.mxu0
        %4351 = vmatprep.subr.bf16.mxu0 0
        %4352 = vmatpush1.bf16.msra.mxu0 %v4307
        %4353 = vmatprep.subr.bf16.mxu0 0
        %4354 = vmatpush1.bf16.msra.mxu0 0
        %4355 = vmatprep.subr.bf16.mxu0 0
        %4356 = vmatpush1.bf16.msra.mxu0 0
        %4357 = vmatprep.subr.bf16.mxu0 0
        %4358 = vmatpush1.bf16.msra.mxu0 0
        %4359 = vmatprep.subr.bf16.mxu0 0
        %4360 = vmatpush1.bf16.msra.mxu0 0
        %4361 = vmatprep.subr.bf16.mxu0 0
        %4362 = vmatpush1.bf16.msra.mxu0 0
        %4363 = vmatprep.subr.bf16.mxu0 0
        %4364 = vmatpush1.bf16.msra.mxu0 0
        %4365 = vmatprep.subr.bf16.mxu0 0
        %4366 = vmatpush1.bf16.msra.mxu0 0
        %4367 = vmatprep.subr.bf16.mxu0 0
        %4368 = vmatpush1.bf16.msra.mxu0 0
        %4369 = vmatprep.subr.bf16.mxu0 0
        %4370 = vmatpush1.bf16.msra.mxu0 0
        %4371 = vmatprep.subr.bf16.mxu0 0
        %4372 = vmatpush1.bf16.msra.mxu0 0
        %4373 = vmatprep.subr.bf16.mxu0 0
        %4374 = vmatpush1.bf16.msra.mxu0 0
        %4375 = vmatprep.subr.bf16.mxu0 0
        %4376 = vmatpush1.bf16.msra.mxu0 0
        %4377 = vmatprep.subr.bf16.mxu0 0
        %4378 = vmatpush1.bf16.msra.mxu0 0
        %4379 = vmatprep.subr.bf16.mxu0 0
        %4380 = vmatpush1.bf16.msra.mxu0 0
        %4381 = vmatprep.subr.bf16.mxu0 0
        %4382 = vmatpush1.bf16.msra.mxu0 0
        %4383 = vmatprep.mubr.bf16.mxu0 0
        %4384 = vmatmul.mubr.bf16.gmra.mrb[0].mxu0 %v743
        %v4385 = vpop.f32.mrb[0].mxu0
        %v4386 = vadd.f32 0.0, %v4385
        %v4387 = vpop.f32.mrb[0].mxu0
        %v4388 = vpop.f32.mrb[0].mxu0
        %v4389 = vadd.f32 0.0, %v4388
        %v4390 = vpop.f32.mrb[0].mxu0
        %4391 = vdwg.mxu0
        %4392 = vmatprep.subr.bf16.mxu0 0
        %4393 = vmatpush1.bf16.msra.mxu0 %v4308
        %4394 = vmatprep.subr.bf16.mxu0 0
        %4395 = vmatpush1.bf16.msra.mxu0 0
        %4396 = vmatprep.subr.bf16.mxu0 0
        %4397 = vmatpush1.bf16.msra.mxu0 0
        %4398 = vmatprep.subr.bf16.mxu0 0
        %4399 = vmatpush1.bf16.msra.mxu0 0
        %4400 = vmatprep.subr.bf16.mxu0 0
        %4401 = vmatpush1.bf16.msra.mxu0 0
        %4402 = vmatprep.subr.bf16.mxu0 0
        %4403 = vmatpush1.bf16.msra.mxu0 0
        %4404 = vmatprep.subr.bf16.mxu0 0
        %4405 = vmatpush1.bf16.msra.mxu0 0
        %4406 = vmatprep.subr.bf16.mxu0 0
        %4407 = vmatpush1.bf16.msra.mxu0 0
        %4408 = vmatprep.subr.bf16.mxu0 0
        %4409 = vmatpush1.bf16.msra.mxu0 0
        %4410 = vmatprep.subr.bf16.mxu0 0
        %4411 = vmatpush1.bf16.msra.mxu0 0
        %4412 = vmatprep.subr.bf16.mxu0 0
        %4413 = vmatpush1.bf16.msra.mxu0 0
        %4414 = vmatprep.subr.bf16.mxu0 0
        %4415 = vmatpush1.bf16.msra.mxu0 0
        %4416 = vmatprep.subr.bf16.mxu0 0
        %4417 = vmatpush1.bf16.msra.mxu0 0
        %4418 = vmatprep.subr.bf16.mxu0 0
        %4419 = vmatpush1.bf16.msra.mxu0 0
        %4420 = vmatprep.subr.bf16.mxu0 0
        %4421 = vmatpush1.bf16.msra.mxu0 0
        %4422 = vmatprep.subr.bf16.mxu0 0
        %4423 = vmatpush1.bf16.msra.mxu0 0
        %4424 = vmatprep.mubr.bf16.mxu0 0
        %4425 = vmatmul.mubr.bf16.gmra.mrb[0].mxu0 %v743
        %v4426 = vpop.f32.mrb[0].mxu0
        %v4427 = vadd.f32 0.0, %v4426
        %v4428 = vpop.f32.mrb[0].mxu0
        %v4429 = vpop.f32.mrb[0].mxu0
        %v4430 = vadd.f32 0.0, %v4429
        %v4431 = vpop.f32.mrb[0].mxu0
        %4432 = vdwg.mxu0
        %4433 = vmatprep.subr.bf16.mxu0 0
        %4434 = vmatpush1.bf16.msra.mxu0 %v4309
        %4435 = vmatprep.subr.bf16.mxu0 0
        %4436 = vmatpush1.bf16.msra.mxu0 0
        %4437 = vmatprep.subr.bf16.mxu0 0
        %4438 = vmatpush1.bf16.msra.mxu0 0
        %4439 = vmatprep.subr.bf16.mxu0 0
        %4440 = vmatpush1.bf16.msra.mxu0 0
        %4441 = vmatprep.subr.bf16.mxu0 0
        %4442 = vmatpush1.bf16.msra.mxu0 0
        %4443 = vmatprep.subr.bf16.mxu0 0
        %4444 = vmatpush1.bf16.msra.mxu0 0
        %4445 = vmatprep.subr.bf16.mxu0 0
        %4446 = vmatpush1.bf16.msra.mxu0 0
        %4447 = vmatprep.subr.bf16.mxu0 0
        %4448 = vmatpush1.bf16.msra.mxu0 0
        %4449 = vmatprep.subr.bf16.mxu0 0
        %4450 = vmatpush1.bf16.msra.mxu0 0
        %4451 = vmatprep.subr.bf16.mxu0 0
        %4452 = vmatpush1.bf16.msra.mxu0 0
        %4453 = vmatprep.subr.bf16.mxu0 0
        %4454 = vmatpush1.bf16.msra.mxu0 0
        %4455 = vmatprep.subr.bf16.mxu0 0
        %4456 = vmatpush1.bf16.msra.mxu0 0
        %4457 = vmatprep.subr.bf16.mxu0 0
        %4458 = vmatpush1.bf16.msra.mxu0 0
        %4459 = vmatprep.subr.bf16.mxu0 0
        %4460 = vmatpush1.bf16.msra.mxu0 0
        %4461 = vmatprep.subr.bf16.mxu0 0
        %4462 = vmatpush1.bf16.msra.mxu0 0
        %4463 = vmatprep.subr.bf16.mxu0 0
        %4464 = vmatpush1.bf16.msra.mxu0 0
        %4465 = vmatprep.mubr.bf16.mxu0 0
        %4466 = vmatmul.mubr.bf16.gmra.mrb[0].mxu0 %v743
        %v4467 = vpop.f32.mrb[0].mxu0
        %v4468 = vadd.f32 0.0, %v4467
        %v4469 = vpop.f32.mrb[0].mxu0
        %v4470 = vpop.f32.mrb[0].mxu0
        %v4471 = vadd.f32 0.0, %v4470
        %v4472 = vpop.f32.mrb[0].mxu0
        %4473 = vdwg.mxu0
        %v4474 = vmul.f32 %v4345, 2.0
        %v4475 = vmul.f32 %v4348, 2.0
        %v4476 = vmul.f32 %v4386, 2.0
        %v4477 = vmul.f32 %v4389, 2.0
        %v4478 = vmul.f32 %v4427, 2.0
        %v4479 = vmul.f32 %v4430, 2.0
        %v4480 = vmul.f32 %v4468, 2.0
        %v4481 = vmul.f32 %v4471, 2.0
        %v4482 = vsub.f32 %v4474, %v4130
        %v4483 = vsub.f32 %v4475, %v4131
        %v4484 = vsub.f32 %v4476, %v4132
        %v4485 = vsub.f32 %v4477, %v4133
        %v4486 = vsub.f32 %v4478, %v4134
        %v4487 = vsub.f32 %v4479, %v4135
        %v4488 = vsub.f32 %v4480, %v4136
        %v4489 = vsub.f32 %v4481, %v4137
        %4490 = vmatprep.subr.bf16.mxu0 0
        %4491 = vmatpush1.bf16.msra.mxu0 %v4138
        %4492 = vmatprep.subr.bf16.mxu0 0
        %4493 = vmatpush1.bf16.msra.mxu0 0
        %4494 = vmatprep.subr.bf16.mxu0 0
        %4495 = vmatpush1.bf16.msra.mxu0 0
        %4496 = vmatprep.subr.bf16.mxu0 0
        %4497 = vmatpush1.bf16.msra.mxu0 0
        %4498 = vmatprep.subr.bf16.mxu0 0
        %4499 = vmatpush1.bf16.msra.mxu0 0
        %4500 = vmatprep.subr.bf16.mxu0 0
        %4501 = vmatpush1.bf16.msra.mxu0 0
        %4502 = vmatprep.subr.bf16.mxu0 0
        %4503 = vmatpush1.bf16.msra.mxu0 0
        %4504 = vmatprep.subr.bf16.mxu0 0
        %4505 = vmatpush1.bf16.msra.mxu0 0
        %4506 = vmatprep.subr.bf16.mxu0 0
        %4507 = vmatpush1.bf16.msra.mxu0 0
        %4508 = vmatprep.subr.bf16.mxu0 0
        %4509 = vmatpush1.bf16.msra.mxu0 0
        %4510 = vmatprep.subr.bf16.mxu0 0
        %4511 = vmatpush1.bf16.msra.mxu0 0
        %4512 = vmatprep.subr.bf16.mxu0 0
        %4513 = vmatpush1.bf16.msra.mxu0 0
        %4514 = vmatprep.subr.bf16.mxu0 0
        %4515 = vmatpush1.bf16.msra.mxu0 0
        %4516 = vmatprep.subr.bf16.mxu0 0
        %4517 = vmatpush1.bf16.msra.mxu0 0
        %4518 = vmatprep.subr.bf16.mxu0 0
        %4519 = vmatpush1.bf16.msra.mxu0 0
        %4520 = vmatprep.subr.bf16.mxu0 0
        %4521 = vmatpush1.bf16.msra.mxu0 0
        %4522 = vmatprep.mubr.bf16.mxu0 0
        %4523 = vmatmul.mubr.bf16.gmra.mrb[0].mxu0 %v1099
        %v4524 = vpop.f32.mrb[0].mxu0
        %v4525 = vadd.f32 0.0, %v4524
        %v4526 = vpop.f32.mrb[0].mxu0
        %v4527 = vpop.f32.mrb[0].mxu0
        %v4528 = vadd.f32 0.0, %v4527
        %v4529 = vpop.f32.mrb[0].mxu0
        %4530 = vdwg.mxu0
        %4531 = vmatprep.subr.bf16.mxu0 0
        %4532 = vmatpush1.bf16.msra.mxu0 %v4139
        %4533 = vmatprep.subr.bf16.mxu0 0
        %4534 = vmatpush1.bf16.msra.mxu0 0
        %4535 = vmatprep.subr.bf16.mxu0 0
        %4536 = vmatpush1.bf16.msra.mxu0 0
        %4537 = vmatprep.subr.bf16.mxu0 0
        %4538 = vmatpush1.bf16.msra.mxu0 0
        %4539 = vmatprep.subr.bf16.mxu0 0
        %4540 = vmatpush1.bf16.msra.mxu0 0
        %4541 = vmatprep.subr.bf16.mxu0 0
        %4542 = vmatpush1.bf16.msra.mxu0 0
        %4543 = vmatprep.subr.bf16.mxu0 0
        %4544 = vmatpush1.bf16.msra.mxu0 0
        %4545 = vmatprep.subr.bf16.mxu0 0
        %4546 = vmatpush1.bf16.msra.mxu0 0
        %4547 = vmatprep.subr.bf16.mxu0 0
        %4548 = vmatpush1.bf16.msra.mxu0 0
        %4549 = vmatprep.subr.bf16.mxu0 0
        %4550 = vmatpush1.bf16.msra.mxu0 0
        %4551 = vmatprep.subr.bf16.mxu0 0
        %4552 = vmatpush1.bf16.msra.mxu0 0
        %4553 = vmatprep.subr.bf16.mxu0 0
        %4554 = vmatpush1.bf16.msra.mxu0 0
        %4555 = vmatprep.subr.bf16.mxu0 0
        %4556 = vmatpush1.bf16.msra.mxu0 0
        %4557 = vmatprep.subr.bf16.mxu0 0
        %4558 = vmatpush1.bf16.msra.mxu0 0
        %4559 = vmatprep.subr.bf16.mxu0 0
        %4560 = vmatpush1.bf16.msra.mxu0 0
        %4561 = vmatprep.subr.bf16.mxu0 0
        %4562 = vmatpush1.bf16.msra.mxu0 0
        %4563 = vmatprep.mubr.bf16.mxu0 0
        %4564 = vmatmul.mubr.bf16.gmra.mrb[0].mxu0 %v1099
        %v4565 = vpop.f32.mrb[0].mxu0
        %v4566 = vadd.f32 0.0, %v4565
        %v4567 = vpop.f32.mrb[0].mxu0
        %v4568 = vpop.f32.mrb[0].mxu0
        %v4569 = vadd.f32 0.0, %v4568
        %v4570 = vpop.f32.mrb[0].mxu0
        %4571 = vdwg.mxu0
        %4572 = vmatprep.subr.bf16.mxu0 0
        %4573 = vmatpush1.bf16.msra.mxu0 %v4140
        %4574 = vmatprep.subr.bf16.mxu0 0
        %4575 = vmatpush1.bf16.msra.mxu0 0
        %4576 = vmatprep.subr.bf16.mxu0 0
        %4577 = vmatpush1.bf16.msra.mxu0 0
        %4578 = vmatprep.subr.bf16.mxu0 0
        %4579 = vmatpush1.bf16.msra.mxu0 0
        %4580 = vmatprep.subr.bf16.mxu0 0
        %4581 = vmatpush1.bf16.msra.mxu0 0
        %4582 = vmatprep.subr.bf16.mxu0 0
        %4583 = vmatpush1.bf16.msra.mxu0 0
        %4584 = vmatprep.subr.bf16.mxu0 0
        %4585 = vmatpush1.bf16.msra.mxu0 0
        %4586 = vmatprep.subr.bf16.mxu0 0
        %4587 = vmatpush1.bf16.msra.mxu0 0
        %4588 = vmatprep.subr.bf16.mxu0 0
        %4589 = vmatpush1.bf16.msra.mxu0 0
        %4590 = vmatprep.subr.bf16.mxu0 0
        %4591 = vmatpush1.bf16.msra.mxu0 0
        %4592 = vmatprep.subr.bf16.mxu0 0
        %4593 = vmatpush1.bf16.msra.mxu0 0
        %4594 = vmatprep.subr.bf16.mxu0 0
        %4595 = vmatpush1.bf16.msra.mxu0 0
        %4596 = vmatprep.subr.bf16.mxu0 0
        %4597 = vmatpush1.bf16.msra.mxu0 0
        %4598 = vmatprep.subr.bf16.mxu0 0
        %4599 = vmatpush1.bf16.msra.mxu0 0
        %4600 = vmatprep.subr.bf16.mxu0 0
        %4601 = vmatpush1.bf16.msra.mxu0 0
        %4602 = vmatprep.subr.bf16.mxu0 0
        %4603 = vmatpush1.bf16.msra.mxu0 0
        %4604 = vmatprep.mubr.bf16.mxu0 0
        %4605 = vmatmul.mubr.bf16.gmra.mrb[0].mxu0 %v1099
        %v4606 = vpop.f32.mrb[0].mxu0
        %v4607 = vadd.f32 0.0, %v4606
        %v4608 = vpop.f32.mrb[0].mxu0
        %v4609 = vpop.f32.mrb[0].mxu0
        %v4610 = vadd.f32 0.0, %v4609
        %v4611 = vpop.f32.mrb[0].mxu0
        %4612 = vdwg.mxu0
        %4613 = vmatprep.subr.bf16.mxu0 0
        %4614 = vmatpush1.bf16.msra.mxu0 %v4141
        %4615 = vmatprep.subr.bf16.mxu0 0
        %4616 = vmatpush1.bf16.msra.mxu0 0
        %4617 = vmatprep.subr.bf16.mxu0 0
        %4618 = vmatpush1.bf16.msra.mxu0 0
        %4619 = vmatprep.subr.bf16.mxu0 0
        %4620 = vmatpush1.bf16.msra.mxu0 0
        %4621 = vmatprep.subr.bf16.mxu0 0
        %4622 = vmatpush1.bf16.msra.mxu0 0
        %4623 = vmatprep.subr.bf16.mxu0 0
        %4624 = vmatpush1.bf16.msra.mxu0 0
        %4625 = vmatprep.subr.bf16.mxu0 0
        %4626 = vmatpush1.bf16.msra.mxu0 0
        %4627 = vmatprep.subr.bf16.mxu0 0
        %4628 = vmatpush1.bf16.msra.mxu0 0
        %4629 = vmatprep.subr.bf16.mxu0 0
        %4630 = vmatpush1.bf16.msra.mxu0 0
        %4631 = vmatprep.subr.bf16.mxu0 0
        %4632 = vmatpush1.bf16.msra.mxu0 0
        %4633 = vmatprep.subr.bf16.mxu0 0
        %4634 = vmatpush1.bf16.msra.mxu0 0
        %4635 = vmatprep.subr.bf16.mxu0 0
        %4636 = vmatpush1.bf16.msra.mxu0 0
        %4637 = vmatprep.subr.bf16.mxu0 0
        %4638 = vmatpush1.bf16.msra.mxu0 0
        %4639 = vmatprep.subr.bf16.mxu0 0
        %4640 = vmatpush1.bf16.msra.mxu0 0
        %4641 = vmatprep.subr.bf16.mxu0 0
        %4642 = vmatpush1.bf16.msra.mxu0 0
        %4643 = vmatprep.subr.bf16.mxu0 0
        %4644 = vmatpush1.bf16.msra.mxu0 0
        %4645 = vmatprep.mubr.bf16.mxu0 0
        %4646 = vmatmul.mubr.bf16.gmra.mrb[0].mxu0 %v1099
        %v4647 = vpop.f32.mrb[0].mxu0
        %v4648 = vadd.f32 0.0, %v4647
        %v4649 = vpop.f32.mrb[0].mxu0
        %v4650 = vpop.f32.mrb[0].mxu0
        %v4651 = vadd.f32 0.0, %v4650
        %v4652 = vpop.f32.mrb[0].mxu0
        %4653 = vdwg.mxu0
        %v4654 = vpack.c.bf16 %v4528, %v4525
        %v4655 = vpack.c.bf16 %v4569, %v4566
        %v4656 = vpack.c.bf16 %v4610, %v4607
        %v4657 = vpack.c.bf16 %v4651, %v4648
        %4658 = vmatprep.subr.bf16.mxu0 0
        %4659 = vmatpush1.bf16.msra.mxu0 %v4654
        %4660 = vmatprep.subr.bf16.mxu0 0
        %4661 = vmatpush1.bf16.msra.mxu0 0
        %4662 = vmatprep.subr.bf16.mxu0 0
        %4663 = vmatpush1.bf16.msra.mxu0 0
        %4664 = vmatprep.subr.bf16.mxu0 0
        %4665 = vmatpush1.bf16.msra.mxu0 0
        %4666 = vmatprep.subr.bf16.mxu0 0
        %4667 = vmatpush1.bf16.msra.mxu0 0
        %4668 = vmatprep.subr.bf16.mxu0 0
        %4669 = vmatpush1.bf16.msra.mxu0 0
        %4670 = vmatprep.subr.bf16.mxu0 0
        %4671 = vmatpush1.bf16.msra.mxu0 0
        %4672 = vmatprep.subr.bf16.mxu0 0
        %4673 = vmatpush1.bf16.msra.mxu0 0
        %4674 = vmatprep.subr.bf16.mxu0 0
        %4675 = vmatpush1.bf16.msra.mxu0 0
        %4676 = vmatprep.subr.bf16.mxu0 0
        %4677 = vmatpush1.bf16.msra.mxu0 0
        %4678 = vmatprep.subr.bf16.mxu0 0
        %4679 = vmatpush1.bf16.msra.mxu0 0
        %4680 = vmatprep.subr.bf16.mxu0 0
        %4681 = vmatpush1.bf16.msra.mxu0 0
        %4682 = vmatprep.subr.bf16.mxu0 0
        %4683 = vmatpush1.bf16.msra.mxu0 0
        %4684 = vmatprep.subr.bf16.mxu0 0
        %4685 = vmatpush1.bf16.msra.mxu0 0
        %4686 = vmatprep.subr.bf16.mxu0 0
        %4687 = vmatpush1.bf16.msra.mxu0 0
        %4688 = vmatprep.subr.bf16.mxu0 0
        %4689 = vmatpush1.bf16.msra.mxu0 0
        %4690 = vmatprep.mubr.bf16.mxu0 0
        %4691 = vmatmul.mubr.bf16.gmra.mrb[0].mxu0 %v1099
        %v4692 = vpop.f32.mrb[0].mxu0
        %v4693 = vadd.f32 0.0, %v4692
        %v4694 = vpop.f32.mrb[0].mxu0
        %v4695 = vpop.f32.mrb[0].mxu0
        %v4696 = vadd.f32 0.0, %v4695
        %v4697 = vpop.f32.mrb[0].mxu0
        %4698 = vdwg.mxu0
        %4699 = vmatprep.subr.bf16.mxu0 0
        %4700 = vmatpush1.bf16.msra.mxu0 %v4655
        %4701 = vmatprep.subr.bf16.mxu0 0
        %4702 = vmatpush1.bf16.msra.mxu0 0
        %4703 = vmatprep.subr.bf16.mxu0 0
        %4704 = vmatpush1.bf16.msra.mxu0 0
        %4705 = vmatprep.subr.bf16.mxu0 0
        %4706 = vmatpush1.bf16.msra.mxu0 0
        %4707 = vmatprep.subr.bf16.mxu0 0
        %4708 = vmatpush1.bf16.msra.mxu0 0
        %4709 = vmatprep.subr.bf16.mxu0 0
        %4710 = vmatpush1.bf16.msra.mxu0 0
        %4711 = vmatprep.subr.bf16.mxu0 0
        %4712 = vmatpush1.bf16.msra.mxu0 0
        %4713 = vmatprep.subr.bf16.mxu0 0
        %4714 = vmatpush1.bf16.msra.mxu0 0
        %4715 = vmatprep.subr.bf16.mxu0 0
        %4716 = vmatpush1.bf16.msra.mxu0 0
        %4717 = vmatprep.subr.bf16.mxu0 0
        %4718 = vmatpush1.bf16.msra.mxu0 0
        %4719 = vmatprep.subr.bf16.mxu0 0
        %4720 = vmatpush1.bf16.msra.mxu0 0
        %4721 = vmatprep.subr.bf16.mxu0 0
        %4722 = vmatpush1.bf16.msra.mxu0 0
        %4723 = vmatprep.subr.bf16.mxu0 0
        %4724 = vmatpush1.bf16.msra.mxu0 0
        %4725 = vmatprep.subr.bf16.mxu0 0
        %4726 = vmatpush1.bf16.msra.mxu0 0
        %4727 = vmatprep.subr.bf16.mxu0 0
        %4728 = vmatpush1.bf16.msra.mxu0 0
        %4729 = vmatprep.subr.bf16.mxu0 0
        %4730 = vmatpush1.bf16.msra.mxu0 0
        %4731 = vmatprep.mubr.bf16.mxu0 0
        %4732 = vmatmul.mubr.bf16.gmra.mrb[0].mxu0 %v1099
        %v4733 = vpop.f32.mrb[0].mxu0
        %v4734 = vadd.f32 0.0, %v4733
        %v4735 = vpop.f32.mrb[0].mxu0
        %v4736 = vpop.f32.mrb[0].mxu0
        %v4737 = vadd.f32 0.0, %v4736
        %v4738 = vpop.f32.mrb[0].mxu0
        %4739 = vdwg.mxu0
        %4740 = vmatprep.subr.bf16.mxu0 0
        %4741 = vmatpush1.bf16.msra.mxu0 %v4656
        %4742 = vmatprep.subr.bf16.mxu0 0
        %4743 = vmatpush1.bf16.msra.mxu0 0
        %4744 = vmatprep.subr.bf16.mxu0 0
        %4745 = vmatpush1.bf16.msra.mxu0 0
        %4746 = vmatprep.subr.bf16.mxu0 0
        %4747 = vmatpush1.bf16.msra.mxu0 0
        %4748 = vmatprep.subr.bf16.mxu0 0
        %4749 = vmatpush1.bf16.msra.mxu0 0
        %4750 = vmatprep.subr.bf16.mxu0 0
        %4751 = vmatpush1.bf16.msra.mxu0 0
        %4752 = vmatprep.subr.bf16.mxu0 0
        %4753 = vmatpush1.bf16.msra.mxu0 0
        %4754 = vmatprep.subr.bf16.mxu0 0
        %4755 = vmatpush1.bf16.msra.mxu0 0
        %4756 = vmatprep.subr.bf16.mxu0 0
        %4757 = vmatpush1.bf16.msra.mxu0 0
        %4758 = vmatprep.subr.bf16.mxu0 0
        %4759 = vmatpush1.bf16.msra.mxu0 0
        %4760 = vmatprep.subr.bf16.mxu0 0
        %4761 = vmatpush1.bf16.msra.mxu0 0
        %4762 = vmatprep.subr.bf16.mxu0 0
        %4763 = vmatpush1.bf16.msra.mxu0 0
        %4764 = vmatprep.subr.bf16.mxu0 0
        %4765 = vmatpush1.bf16.msra.mxu0 0
        %4766 = vmatprep.subr.bf16.mxu0 0
        %4767 = vmatpush1.bf16.msra.mxu0 0
        %4768 = vmatprep.subr.bf16.mxu0 0
        %4769 = vmatpush1.bf16.msra.mxu0 0
        %4770 = vmatprep.subr.bf16.mxu0 0
        %4771 = vmatpush1.bf16.msra.mxu0 0
        %4772 = vmatprep.mubr.bf16.mxu0 0
        %4773 = vmatmul.mubr.bf16.gmra.mrb[0].mxu0 %v1099
        %v4774 = vpop.f32.mrb[0].mxu0
        %v4775 = vadd.f32 0.0, %v4774
        %v4776 = vpop.f32.mrb[0].mxu0
        %v4777 = vpop.f32.mrb[0].mxu0
        %v4778 = vadd.f32 0.0, %v4777
        %v4779 = vpop.f32.mrb[0].mxu0
        %4780 = vdwg.mxu0
        %4781 = vmatprep.subr.bf16.mxu0 0
        %4782 = vmatpush1.bf16.msra.mxu0 %v4657
        %4783 = vmatprep.subr.bf16.mxu0 0
        %4784 = vmatpush1.bf16.msra.mxu0 0
        %4785 = vmatprep.subr.bf16.mxu0 0
        %4786 = vmatpush1.bf16.msra.mxu0 0
        %4787 = vmatprep.subr.bf16.mxu0 0
        %4788 = vmatpush1.bf16.msra.mxu0 0
        %4789 = vmatprep.subr.bf16.mxu0 0
        %4790 = vmatpush1.bf16.msra.mxu0 0
        %4791 = vmatprep.subr.bf16.mxu0 0
        %4792 = vmatpush1.bf16.msra.mxu0 0
        %4793 = vmatprep.subr.bf16.mxu0 0
        %4794 = vmatpush1.bf16.msra.mxu0 0
        %4795 = vmatprep.subr.bf16.mxu0 0
        %4796 = vmatpush1.bf16.msra.mxu0 0
        %4797 = vmatprep.subr.bf16.mxu0 0
        %4798 = vmatpush1.bf16.msra.mxu0 0
        %4799 = vmatprep.subr.bf16.mxu0 0
        %4800 = vmatpush1.bf16.msra.mxu0 0
        %4801 = vmatprep.subr.bf16.mxu0 0
        %4802 = vmatpush1.bf16.msra.mxu0 0
        %4803 = vmatprep.subr.bf16.mxu0 0
        %4804 = vmatpush1.bf16.msra.mxu0 0
        %4805 = vmatprep.subr.bf16.mxu0 0
        %4806 = vmatpush1.bf16.msra.mxu0 0
        %4807 = vmatprep.subr.bf16.mxu0 0
        %4808 = vmatpush1.bf16.msra.mxu0 0
        %4809 = vmatprep.subr.bf16.mxu0 0
        %4810 = vmatpush1.bf16.msra.mxu0 0
        %4811 = vmatprep.subr.bf16.mxu0 0
        %4812 = vmatpush1.bf16.msra.mxu0 0
        %4813 = vmatprep.mubr.bf16.mxu0 0
        %4814 = vmatmul.mubr.bf16.gmra.mrb[0].mxu0 %v1099
        %v4815 = vpop.f32.mrb[0].mxu0
        %v4816 = vadd.f32 0.0, %v4815
        %v4817 = vpop.f32.mrb[0].mxu0
        %v4818 = vpop.f32.mrb[0].mxu0
        %v4819 = vadd.f32 0.0, %v4818
        %v4820 = vpop.f32.mrb[0].mxu0
        %4821 = vdwg.mxu0
        %v4822 = vmul.f32 %v4693, 2.0
        %v4823 = vmul.f32 %v4696, 2.0
        %v4824 = vmul.f32 %v4734, 2.0
        %v4825 = vmul.f32 %v4737, 2.0
        %v4826 = vmul.f32 %v4775, 2.0
        %v4827 = vmul.f32 %v4778, 2.0
        %v4828 = vmul.f32 %v4816, 2.0
        %v4829 = vmul.f32 %v4819, 2.0
        %v4830 = vsub.f32 %v4822, %v4130
        %v4831 = vsub.f32 %v4823, %v4131
        %v4832 = vsub.f32 %v4824, %v4132
        %v4833 = vsub.f32 %v4825, %v4133
        %v4834 = vsub.f32 %v4826, %v4134
        %v4835 = vsub.f32 %v4827, %v4135
        %v4836 = vsub.f32 %v4828, %v4136
        %v4837 = vsub.f32 %v4829, %v4137
        %v4838 = vpack.c.bf16 %v4483, %v4482
        %v4839 = vpack.c.bf16 %v4485, %v4484
        %v4840 = vpack.c.bf16 %v4487, %v4486
        %v4841 = vpack.c.bf16 %v4489, %v4488
        %v4842 = vpack.c.bf16 %v4831, %v4830
        %v4843 = vpack.c.bf16 %v4833, %v4832
        %v4844 = vpack.c.bf16 %v4835, %v4834
        %v4845 = vpack.c.bf16 %v4837, %v4836
        %4850 = vrot.lane.b32.xlu0 %v4306, 64
        %v4851 = vpop.permute.xlu0 %4850
        %4852 = vrot.lane.b32.xlu0 %v4307, 64
        %v4853 = vpop.permute.xlu0 %4852
        %4854 = vrot.lane.b32.xlu0 %v4308, 64
        %v4855 = vpop.permute.xlu0 %4854
        %4856 = vrot.lane.b32.xlu0 %v4309, 64
        %v4857 = vpop.permute.xlu0 %4856
        %4862 = vrot.lane.b32.xlu0 %v4654, 64
        %v4863 = vpop.permute.xlu0 %4862
        %4864 = vrot.lane.b32.xlu0 %v4655, 64
        %v4865 = vpop.permute.xlu0 %4864
        %4866 = vrot.lane.b32.xlu0 %v4656, 64
        %v4867 = vpop.permute.xlu0 %4866
        %4868 = vrot.lane.b32.xlu0 %v4657, 64
        %v4869 = vpop.permute.xlu0 %4868
        %v4872 = vsel %vm3700, %v4138, %v4851
        %v4876 = vsel %vm3700, %v4139, %v4853
        %v4880 = vsel %vm3700, %v4140, %v4855
        %v4884 = vsel %vm3700, %v4141, %v4857
        %v4888 = vsel %vm3700, %v4838, %v4863
        %v4892 = vsel %vm3700, %v4839, %v4865
        %v4896 = vsel %vm3700, %v4840, %v4867
        %v4900 = vsel %vm3700, %v4841, %v4869
        %v4902 = vld [vmem:[%s10] sm:$0xf]
        %v4903 = vld [vmem:[%s10 + $0x4] sm:$0xf]
        %v4904 = vld [vmem:[%s10 + $0x8] sm:$0xf]
        %v4905 = vld [vmem:[%s10 + $0xc] sm:$0xf]
        %v4906 = vld [vmem:[%s10 + $0x10] sm:$0xf]
        %v4907 = vld [vmem:[%s10 + $0x14] sm:$0xf]
        %v4908 = vld [vmem:[%s10 + $0x18] sm:$0xf]
        %v4909 = vld [vmem:[%s10 + $0x1c] sm:$0xf]
        %v4910 = vld [vmem:[%s10 + $0x20] sm:$0xf]
        %v4911 = vld [vmem:[%s10 + $0x24] sm:$0xf]
        %v4912 = vld [vmem:[%s10 + $0x28] sm:$0xf]
        %v4913 = vld [vmem:[%s10 + $0x2c] sm:$0xf]
        %v4914 = vld [vmem:[%s10 + $0x30] sm:$0xf]
        %v4915 = vld [vmem:[%s10 + $0x34] sm:$0xf]
        %v4916 = vld [vmem:[%s10 + $0x38] sm:$0xf]
        %v4917 = vld [vmem:[%s10 + $0x3c] sm:$0xf]
        %v4918 = vld [vmem:[%s10 + $0x40] sm:$0xf]
        %v4919 = vld [vmem:[%s10 + $0x44] sm:$0xf]
        %v4920 = vld [vmem:[%s10 + $0x48] sm:$0xf]
        %v4921 = vld [vmem:[%s10 + $0x4c] sm:$0xf]
        %v4922 = vld [vmem:[%s10 + $0x50] sm:$0xf]
        %v4923 = vld [vmem:[%s10 + $0x54] sm:$0xf]
        %v4924 = vld [vmem:[%s10 + $0x58] sm:$0xf]
        %v4925 = vld [vmem:[%s10 + $0x5c] sm:$0xf]
        %v4926 = vld [vmem:[%s10 + $0x60] sm:$0xf]
        %v4927 = vld [vmem:[%s10 + $0x64] sm:$0xf]
        %v4928 = vld [vmem:[%s10 + $0x68] sm:$0xf]
        %v4929 = vld [vmem:[%s10 + $0x6c] sm:$0xf]
        %v4930 = vld [vmem:[%s10 + $0x70] sm:$0xf]
        %v4931 = vld [vmem:[%s10 + $0x74] sm:$0xf]
        %v4932 = vld [vmem:[%s10 + $0x78] sm:$0xf]
        %v4933 = vld [vmem:[%s10 + $0x7c] sm:$0xf]
        %v4934 = vld [vmem:[%s10 + $0x80] sm:$0xf]
        %v4935 = vld [vmem:[%s10 + $0x84] sm:$0xf]
        %v4936 = vld [vmem:[%s10 + $0x88] sm:$0xf]
        %v4937 = vld [vmem:[%s10 + $0x8c] sm:$0xf]
        %v4938 = vld [vmem:[%s10 + $0x90] sm:$0xf]
        %v4939 = vld [vmem:[%s10 + $0x94] sm:$0xf]
        %v4940 = vld [vmem:[%s10 + $0x98] sm:$0xf]
        %v4941 = vld [vmem:[%s10 + $0x9c] sm:$0xf]
        %v4942 = vld [vmem:[%s11] sm:$0x1]
        %v4944 = vlaneseq
        %v4945 = vshrl.u32 %v4944, 7
        %v4946 = vsub.s32 0, %v4945
        %v4947 = vrot.slane %v4942, %v4946
        %v4989 = vunpack.c.l.b16 %v4902
        %v4990 = vunpack.c.l.b16 %v4903
        %v4991 = vunpack.c.l.b16 %v4904
        %v4992 = vunpack.c.l.b16 %v4905
        %v4993 = vunpack.c.l.b16 %v4906
        %v4994 = vunpack.c.l.b16 %v4907
        %v4995 = vunpack.c.l.b16 %v4908
        %v4996 = vunpack.c.l.b16 %v4909
        %v4997 = vunpack.c.l.b16 %v4910
        %v4998 = vunpack.c.l.b16 %v4911
        %v4999 = vunpack.c.l.b16 %v4912
        %v5000 = vunpack.c.l.b16 %v4913
        %v5001 = vunpack.c.l.b16 %v4914
        %v5002 = vunpack.c.l.b16 %v4915
        %v5003 = vunpack.c.l.b16 %v4916
        %v5004 = vunpack.c.l.b16 %v4917
        %v5005 = vunpack.c.l.b16 %v4918
        %v5006 = vunpack.c.l.b16 %v4919
        %v5007 = vunpack.c.l.b16 %v4920
        %v5008 = vunpack.c.l.b16 %v4921
        %v5009 = vunpack.c.l.b16 %v4922
        %v5010 = vunpack.c.l.b16 %v4923
        %v5011 = vunpack.c.l.b16 %v4924
        %v5012 = vunpack.c.l.b16 %v4925
        %v5013 = vunpack.c.l.b16 %v4926
        %v5014 = vunpack.c.l.b16 %v4927
        %v5015 = vunpack.c.l.b16 %v4928
        %v5016 = vunpack.c.l.b16 %v4929
        %v5017 = vunpack.c.l.b16 %v4930
        %v5018 = vunpack.c.l.b16 %v4931
        %v5019 = vunpack.c.l.b16 %v4932
        %v5020 = vunpack.c.l.b16 %v4933
        %v5021 = vunpack.c.l.b16 %v4934
        %v5022 = vunpack.c.l.b16 %v4935
        %v5023 = vunpack.c.l.b16 %v4936
        %v5024 = vunpack.c.l.b16 %v4937
        %v5025 = vunpack.c.l.b16 %v4938
        %v5026 = vunpack.c.l.b16 %v4939
        %v5027 = vunpack.c.l.b16 %v4940
        %v5028 = vunpack.c.l.b16 %v4941
        %v5029 = vpack.c.b16 %v4990, %v4989
        %v5030 = vpack.c.b16 %v4992, %v4991
        %v5031 = vpack.c.b16 %v4994, %v4993
        %v5032 = vpack.c.b16 %v4996, %v4995
        %v5033 = vpack.c.b16 %v4998, %v4997
        %v5034 = vpack.c.b16 %v5000, %v4999
        %v5035 = vpack.c.b16 %v5002, %v5001
        %v5036 = vpack.c.b16 %v5004, %v5003
        %v5037 = vpack.c.b16 %v5006, %v5005
        %v5038 = vpack.c.b16 %v5008, %v5007
        %v5039 = vpack.c.b16 %v5010, %v5009
        %v5040 = vpack.c.b16 %v5012, %v5011
        %v5041 = vpack.c.b16 %v5014, %v5013
        %v5042 = vpack.c.b16 %v5016, %v5015
        %v5043 = vpack.c.b16 %v5018, %v5017
        %v5044 = vpack.c.b16 %v5020, %v5019
        %v5045 = vpack.c.b16 %v5022, %v5021
        %v5046 = vpack.c.b16 %v5024, %v5023
        %v5047 = vpack.c.b16 %v5026, %v5025
        %v5048 = vpack.c.b16 %v5028, %v5027
        %v5070 = vsel %vm3700, %v4842, 0
        %v5073 = vsel %vm3700, %v4843, 0
        %v5076 = vsel %vm3700, %v4844, 0
        %v5079 = vsel %vm3700, %v4845, 0
        %5081 = vmatprep.subr.bf16.mxu0 0
        %5082 = vmatpush1.bf16.msra.mxu0 %v5029
        %5083 = vmatprep.subr.bf16.mxu0 0
        %5084 = vmatpush1.bf16.msra.mxu0 %v5030
        %5085 = vmatprep.subr.bf16.mxu0 0
        %5086 = vmatpush1.bf16.msra.mxu0 %v5031
        %5087 = vmatprep.subr.bf16.mxu0 0
        %5088 = vmatpush1.bf16.msra.mxu0 %v5032
        %5089 = vmatprep.subr.bf16.mxu0 0
        %5090 = vmatpush1.bf16.msra.mxu0 %v5033
        %5091 = vmatprep.subr.bf16.mxu0 0
        %5092 = vmatpush1.bf16.msra.mxu0 %v5034
        %5093 = vmatprep.subr.bf16.mxu0 0
        %5094 = vmatpush1.bf16.msra.mxu0 %v5035
        %5095 = vmatprep.subr.bf16.mxu0 0
        %5096 = vmatpush1.bf16.msra.mxu0 %v5036
        %5097 = vmatprep.subr.bf16.mxu0 0
        %5098 = vmatpush1.bf16.msra.mxu0 %v5037
        %5099 = vmatprep.subr.bf16.mxu0 0
        %5100 = vmatpush1.bf16.msra.mxu0 %v5038
        %5101 = vmatprep.subr.bf16.mxu0 0
        %5102 = vmatpush1.bf16.msra.mxu0 %v5039
        %5103 = vmatprep.subr.bf16.mxu0 0
        %5104 = vmatpush1.bf16.msra.mxu0 %v5040
        %5105 = vmatprep.subr.bf16.mxu0 0
        %5106 = vmatpush1.bf16.msra.mxu0 %v5041
        %5107 = vmatprep.subr.bf16.mxu0 0
        %5108 = vmatpush1.bf16.msra.mxu0 %v5042
        %5109 = vmatprep.subr.bf16.mxu0 0
        %5110 = vmatpush1.bf16.msra.mxu0 %v5043
        %5111 = vmatprep.subr.bf16.mxu0 0
        %5112 = vmatpush1.bf16.msra.mxu0 %v5044
        %5113 = vmatprep.mubr.bf16.mxu0 %v4888
        %5114 = vmatmul.mubr.bf16.gmra.mrb[0].mxu0 %v4872
        %v5115 = vpop.f32.mrb[0].mxu0
        %v5116 = vadd.f32 %v4947, %v5115
        %v5117 = vpop.f32.mrb[0].mxu0
        %v5118 = vpop.f32.mrb[0].mxu0
        %v5119 = vadd.f32 %v4947, %v5118
        %v5120 = vpop.f32.mrb[0].mxu0
        %5121 = vmatprep.mubr.bf16.mxu0 %v4892
        %5122 = vmatmul.mubr.bf16.gmra.mrb[0].mxu0 %v4876
        %v5123 = vpop.f32.mrb[0].mxu0
        %v5124 = vadd.f32 %v4947, %v5123
        %v5125 = vpop.f32.mrb[0].mxu0
        %v5126 = vpop.f32.mrb[0].mxu0
        %v5127 = vadd.f32 %v4947, %v5126
        %v5128 = vpop.f32.mrb[0].mxu0
        %5129 = vmatprep.mubr.bf16.mxu0 %v4896
        %5130 = vmatmul.mubr.bf16.gmra.mrb[0].mxu0 %v4880
        %v5131 = vpop.f32.mrb[0].mxu0
        %v5132 = vadd.f32 %v4947, %v5131
        %v5133 = vpop.f32.mrb[0].mxu0
        %v5134 = vpop.f32.mrb[0].mxu0
        %v5135 = vadd.f32 %v4947, %v5134
        %v5136 = vpop.f32.mrb[0].mxu0
        %5137 = vmatprep.mubr.bf16.mxu0 %v4900
        %5138 = vmatmul.mubr.bf16.gmra.mrb[0].mxu0 %v4884
        %v5139 = vpop.f32.mrb[0].mxu0
        %v5140 = vadd.f32 %v4947, %v5139
        %v5141 = vpop.f32.mrb[0].mxu0
        %v5142 = vpop.f32.mrb[0].mxu0
        %v5143 = vadd.f32 %v4947, %v5142
        %v5144 = vpop.f32.mrb[0].mxu0
        %5145 = vdwg.mxu0
        %5146 = vmatprep.subr.bf16.mxu0 0
        %5147 = vmatpush1.bf16.msra.mxu0 %v5045
        %5148 = vmatprep.subr.bf16.mxu0 0
        %5149 = vmatpush1.bf16.msra.mxu0 %v5046
        %5150 = vmatprep.subr.bf16.mxu0 0
        %5151 = vmatpush1.bf16.msra.mxu0 %v5047
        %5152 = vmatprep.subr.bf16.mxu0 0
        %5153 = vmatpush1.bf16.msra.mxu0 %v5048
        %5154 = vmatprep.subr.bf16.mxu0 0
        %5155 = vmatpush1.bf16.msra.mxu0 0
        %5156 = vmatprep.subr.bf16.mxu0 0
        %5157 = vmatpush1.bf16.msra.mxu0 0
        %5158 = vmatprep.subr.bf16.mxu0 0
        %5159 = vmatpush1.bf16.msra.mxu0 0
        %5160 = vmatprep.subr.bf16.mxu0 0
        %5161 = vmatpush1.bf16.msra.mxu0 0
        %5162 = vmatprep.subr.bf16.mxu0 0
        %5163 = vmatpush1.bf16.msra.mxu0 0
        %5164 = vmatprep.subr.bf16.mxu0 0
        %5165 = vmatpush1.bf16.msra.mxu0 0
        %5166 = vmatprep.subr.bf16.mxu0 0
        %5167 = vmatpush1.bf16.msra.mxu0 0
        %5168 = vmatprep.subr.bf16.mxu0 0
        %5169 = vmatpush1.bf16.msra.mxu0 0
        %5170 = vmatprep.subr.bf16.mxu0 0
        %5171 = vmatpush1.bf16.msra.mxu0 0
        %5172 = vmatprep.subr.bf16.mxu0 0
        %5173 = vmatpush1.bf16.msra.mxu0 0
        %5174 = vmatprep.subr.bf16.mxu0 0
        %5175 = vmatpush1.bf16.msra.mxu0 0
        %5176 = vmatprep.subr.bf16.mxu0 0
        %5177 = vmatpush1.bf16.msra.mxu0 0
        %5178 = vmatprep.mubr.bf16.mxu0 0
        %5179 = vmatmul.mubr.bf16.gmra.mrb[0].mxu0 %v5070
        %v5180 = vpop.f32.mrb[0].mxu0
        %v5181 = vadd.f32 %v5116, %v5180
        %v5182 = vpop.f32.mrb[0].mxu0
        %v5183 = vpop.f32.mrb[0].mxu0
        %v5184 = vadd.f32 %v5119, %v5183
        %v5185 = vpop.f32.mrb[0].mxu0
        %5186 = vmatprep.mubr.bf16.mxu0 0
        %5187 = vmatmul.mubr.bf16.gmra.mrb[0].mxu0 %v5073
        %v5188 = vpop.f32.mrb[0].mxu0
        %v5189 = vadd.f32 %v5124, %v5188
        %v5190 = vpop.f32.mrb[0].mxu0
        %v5191 = vpop.f32.mrb[0].mxu0
        %v5192 = vadd.f32 %v5127, %v5191
        %v5193 = vpop.f32.mrb[0].mxu0
        %5194 = vmatprep.mubr.bf16.mxu0 0
        %5195 = vmatmul.mubr.bf16.gmra.mrb[0].mxu0 %v5076
        %v5196 = vpop.f32.mrb[0].mxu0
        %v5197 = vadd.f32 %v5132, %v5196
        %v5198 = vpop.f32.mrb[0].mxu0
        %v5199 = vpop.f32.mrb[0].mxu0
        %v5200 = vadd.f32 %v5135, %v5199
        %v5201 = vpop.f32.mrb[0].mxu0
        %5202 = vmatprep.mubr.bf16.mxu0 0
        %5203 = vmatmul.mubr.bf16.gmra.mrb[0].mxu0 %v5079
        %v5204 = vpop.f32.mrb[0].mxu0
        %v5205 = vadd.f32 %v5140, %v5204
        %v5206 = vpop.f32.mrb[0].mxu0
        %v5207 = vpop.f32.mrb[0].mxu0
        %v5208 = vadd.f32 %v5143, %v5207
        %v5209 = vpop.f32.mrb[0].mxu0
        %5210 = vdwg.mxu0
        %v5211 = vtanh.pop %v5181
        %v5212 = vtanh.pop %v5184
        %v5213 = vtanh.pop %v5189
        %v5214 = vtanh.pop %v5192
        %v5215 = vtanh.pop %v5197
        %v5216 = vtanh.pop %v5200
        %v5217 = vtanh.pop %v5205
        %v5218 = vtanh.pop %v5208
        %v5219 = vmul.f32 %v4075, %v2937
        %v5220 = vmul.f32 %v4077, %v2939
        %v5221 = vmul.f32 %v4079, %v2941
        %v5222 = vmul.f32 %v4081, %v2943
        %v5223 = vmul.f32 %v4083, %v2945
        %v5224 = vmul.f32 %v4085, %v2947
        %v5225 = vmul.f32 %v4087, %v2949
        %v5226 = vmul.f32 %v4089, %v2951
        %v5227 = vsub.f32 1.0, %v4075
        %v5228 = vsub.f32 1.0, %v4077
        %v5229 = vsub.f32 1.0, %v4079
        %v5230 = vsub.f32 1.0, %v4081
        %v5231 = vsub.f32 1.0, %v4083
        %v5232 = vsub.f32 1.0, %v4085
        %v5233 = vsub.f32 1.0, %v4087
        %v5234 = vsub.f32 1.0, %v4089
        %5243 = vrot.lane.b32.xlu0 %v5211, 32
        %v5244 = vpop.permute.xlu0 %5243
        %5245 = vrot.lane.b32.xlu0 %v5212, 32
        %v5246 = vpop.permute.xlu0 %5245
        %5247 = vrot.lane.b32.xlu0 %v5213, 32
        %v5248 = vpop.permute.xlu0 %5247
        %5249 = vrot.lane.b32.xlu0 %v5214, 32
        %v5250 = vpop.permute.xlu0 %5249
        %5251 = vrot.lane.b32.xlu0 %v5215, 32
        %v5252 = vpop.permute.xlu0 %5251
        %5253 = vrot.lane.b32.xlu0 %v5216, 32
        %v5254 = vpop.permute.xlu0 %5253
        %5255 = vrot.lane.b32.xlu0 %v5217, 32
        %v5256 = vpop.permute.xlu0 %5255
        %5257 = vrot.lane.b32.xlu0 %v5218, 32
        %v5258 = vpop.permute.xlu0 %5257
        %v5267 = vmul.f32 %v5227, %v5244
        %v5268 = vmul.f32 %v5228, %v5246
        %v5269 = vmul.f32 %v5229, %v5248
        %v5270 = vmul.f32 %v5230, %v5250
        %v5271 = vmul.f32 %v5231, %v5252
        %v5272 = vmul.f32 %v5232, %v5254
        %v5273 = vmul.f32 %v5233, %v5256
        %v5274 = vmul.f32 %v5234, %v5258
        %v5275 = vadd.f32 %v5219, %v5267
        %v5276 = vadd.f32 %v5220, %v5268
        %v5277 = vadd.f32 %v5221, %v5269
        %v5278 = vadd.f32 %v5222, %v5270
        %v5279 = vadd.f32 %v5223, %v5271
        %v5280 = vadd.f32 %v5224, %v5272
        %v5281 = vadd.f32 %v5225, %v5273
        %v5282 = vadd.f32 %v5226, %v5274
        %5291 = vrot.lane.b32.xlu0 %v5275, 96
        %v5292 = vpop.permute.xlu0 %5291
        %5293 = vrot.lane.b32.xlu0 %v5276, 96
        %v5294 = vpop.permute.xlu0 %5293
        %5295 = vrot.lane.b32.xlu0 %v5277, 96
        %v5296 = vpop.permute.xlu0 %5295
        %5297 = vrot.lane.b32.xlu0 %v5278, 96
        %v5298 = vpop.permute.xlu0 %5297
        %5299 = vrot.lane.b32.xlu0 %v5279, 96
        %v5300 = vpop.permute.xlu0 %5299
        %5301 = vrot.lane.b32.xlu0 %v5280, 96
        %v5302 = vpop.permute.xlu0 %5301
        %5303 = vrot.lane.b32.xlu0 %v5281, 96
        %v5304 = vpop.permute.xlu0 %5303
        %5305 = vrot.lane.b32.xlu0 %v5282, 96
        %v5306 = vpop.permute.xlu0 %5305
        %5315 = vst.msk [vmem:[#allocation3] sm:$0xff] %vm2911, %v5292
        %5316 = vst.msk [vmem:[#allocation3 + $0x8] sm:$0xff] %vm2911, %v5294
        %5317 = vst.msk [vmem:[#allocation3 + $0x10] sm:$0xff] %vm2911, %v5296
        %5318 = vst.msk [vmem:[#allocation3 + $0x18] sm:$0xff] %vm2911, %v5298
        %5319 = vst.msk [vmem:[#allocation3 + $0x20] sm:$0xff] %vm2911, %v5300
        %5320 = vst.msk [vmem:[#allocation3 + $0x28] sm:$0xff] %vm2911, %v5302
        %5321 = vst.msk [vmem:[#allocation3 + $0x30] sm:$0xff] %vm2911, %v5304
        %5322 = vst.msk [vmem:[#allocation3 + $0x38] sm:$0xff] %vm2911, %v5306
        %v5323 = vpack.c.bf16 %v5276, %v5275
        %v5324 = vpack.c.bf16 %v5278, %v5277
        %v5325 = vpack.c.bf16 %v5280, %v5279
        %v5326 = vpack.c.bf16 %v5282, %v5281
        %v5327 = vld [vmem:[%s12] sm:$0xf]
        %v5328 = vld [vmem:[%s12 + $0x4] sm:$0xf]
        %v5329 = vld [vmem:[%s12 + $0x8] sm:$0xf]
        %v5330 = vld [vmem:[%s12 + $0xc] sm:$0xf]
        %v5331 = vld [vmem:[%s13] sm:$0x1]
        %v5333 = vlaneseq
        %v5334 = vshrl.u32 %v5333, 7
        %v5335 = vsub.s32 0, %v5334
        %v5336 = vrot.slane %v5331, %v5335
        %5342 = vrot.lane.b32.xlu0 %v5323, 96
        %v5343 = vpop.permute.xlu0 %5342
        %5344 = vrot.lane.b32.xlu0 %v5324, 96
        %v5345 = vpop.permute.xlu0 %5344
        %5346 = vrot.lane.b32.xlu0 %v5325, 96
        %v5347 = vpop.permute.xlu0 %5346
        %5348 = vrot.lane.b32.xlu0 %v5326, 96
        %v5349 = vpop.permute.xlu0 %5348
        %v5354 = vunpack.c.l.b16 %v5327
        %v5355 = vunpack.c.l.b16 %v5328
        %v5356 = vunpack.c.l.b16 %v5329
        %v5357 = vunpack.c.l.b16 %v5330
        %v5358 = vpack.c.b16 %v5355, %v5354
        %v5359 = vpack.c.b16 %v5357, %v5356
        %v5363 = vsel %vm2911, %v5343, 0
        %v5366 = vsel %vm2911, %v5345, 0
        %v5369 = vsel %vm2911, %v5347, 0
        %v5372 = vsel %vm2911, %v5349, 0
        %5374 = vmatprep.subr.bf16.mxu0 0
        %5375 = vmatpush1.bf16.msra.mxu0 %v5358
        %5376 = vmatprep.subr.bf16.mxu0 0
        %5377 = vmatpush1.bf16.msra.mxu0 %v5359
        %5378 = vmatprep.subr.bf16.mxu0 0
        %5379 = vmatpush1.bf16.msra.mxu0 0
        %5380 = vmatprep.subr.bf16.mxu0 0
        %5381 = vmatpush1.bf16.msra.mxu0 0
        %5382 = vmatprep.subr.bf16.mxu0 0
        %5383 = vmatpush1.bf16.msra.mxu0 0
        %5384 = vmatprep.subr.bf16.mxu0 0
        %5385 = vmatpush1.bf16.msra.mxu0 0
        %5386 = vmatprep.subr.bf16.mxu0 0
        %5387 = vmatpush1.bf16.msra.mxu0 0
        %5388 = vmatprep.subr.bf16.mxu0 0
        %5389 = vmatpush1.bf16.msra.mxu0 0
        %5390 = vmatprep.subr.bf16.mxu0 0
        %5391 = vmatpush1.bf16.msra.mxu0 0
        %5392 = vmatprep.subr.bf16.mxu0 0
        %5393 = vmatpush1.bf16.msra.mxu0 0
        %5394 = vmatprep.subr.bf16.mxu0 0
        %5395 = vmatpush1.bf16.msra.mxu0 0
        %5396 = vmatprep.subr.bf16.mxu0 0
        %5397 = vmatpush1.bf16.msra.mxu0 0
        %5398 = vmatprep.subr.bf16.mxu0 0
        %5399 = vmatpush1.bf16.msra.mxu0 0
        %5400 = vmatprep.subr.bf16.mxu0 0
        %5401 = vmatpush1.bf16.msra.mxu0 0
        %5402 = vmatprep.subr.bf16.mxu0 0
        %5403 = vmatpush1.bf16.msra.mxu0 0
        %5404 = vmatprep.subr.bf16.mxu0 0
        %5405 = vmatpush1.bf16.msra.mxu0 0
        %5406 = vmatprep.mubr.bf16.mxu0 0
        %5407 = vmatmul.mubr.bf16.gmra.mrb[0].mxu0 %v5363
        %v5408 = vpop.f32.mrb[0].mxu0
        %v5409 = vadd.f32 %v5336, %v5408
        %v5410 = vpop.f32.mrb[0].mxu0
        %v5411 = vpop.f32.mrb[0].mxu0
        %v5412 = vadd.f32 %v5336, %v5411
        %v5413 = vpop.f32.mrb[0].mxu0
        %5414 = vmatprep.mubr.bf16.mxu0 0
        %5415 = vmatmul.mubr.bf16.gmra.mrb[0].mxu0 %v5366
        %v5416 = vpop.f32.mrb[0].mxu0
        %v5417 = vadd.f32 %v5336, %v5416
        %v5418 = vpop.f32.mrb[0].mxu0
        %v5419 = vpop.f32.mrb[0].mxu0
        %v5420 = vadd.f32 %v5336, %v5419
        %v5421 = vpop.f32.mrb[0].mxu0
        %5422 = vmatprep.mubr.bf16.mxu0 0
        %5423 = vmatmul.mubr.bf16.gmra.mrb[0].mxu0 %v5369
        %v5424 = vpop.f32.mrb[0].mxu0
        %v5425 = vadd.f32 %v5336, %v5424
        %v5426 = vpop.f32.mrb[0].mxu0
        %v5427 = vpop.f32.mrb[0].mxu0
        %v5428 = vadd.f32 %v5336, %v5427
        %v5429 = vpop.f32.mrb[0].mxu0
        %5430 = vmatprep.mubr.bf16.mxu0 0
        %5431 = vmatmul.mubr.bf16.gmra.mrb[0].mxu0 %v5372
        %v5432 = vpop.f32.mrb[0].mxu0
        %v5433 = vadd.f32 %v5336, %v5432
        %v5434 = vpop.f32.mrb[0].mxu0
        %v5435 = vpop.f32.mrb[0].mxu0
        %v5436 = vadd.f32 %v5336, %v5435
        %v5437 = vpop.f32.mrb[0].mxu0
        %5438 = vdwg.mxu0
        %5439 = vst.msk [vmem:[#allocation4] sm:$0xff] %vm723, %v5409
        %5440 = vst.msk [vmem:[#allocation4 + $0x8] sm:$0xff] %vm723, %v5412
        %5441 = vst.msk [vmem:[#allocation4 + $0x10] sm:$0xff] %vm723, %v5417
        %5442 = vst.msk [vmem:[#allocation4 + $0x18] sm:$0xff] %vm723, %v5420
        %5443 = vst.msk [vmem:[#allocation4 + $0x20] sm:$0xff] %vm723, %v5425
        %5444 = vst.msk [vmem:[#allocation4 + $0x28] sm:$0xff] %vm723, %v5428
        %5445 = vst.msk [vmem:[#allocation4 + $0x30] sm:$0xff] %vm723, %v5433
        %5446 = vst.msk [vmem:[#allocation4 + $0x38] sm:$0xff] %vm723, %v5436
        %5447 = vst.msk [vmem:[%s607] sm:$0xff] %vm723, %v5409
        %5448 = vst.msk [vmem:[%s607 + $0x8] sm:$0xff] %vm723, %v5412
        %5449 = vst.msk [vmem:[%s607 + $0x10] sm:$0xff] %vm723, %v5417
        %5450 = vst.msk [vmem:[%s607 + $0x18] sm:$0xff] %vm723, %v5420
        %5451 = vst.msk [vmem:[%s607 + $0x20] sm:$0xff] %vm723, %v5425
        %5452 = vst.msk [vmem:[%s607 + $0x28] sm:$0xff] %vm723, %v5428
        %5453 = vst.msk [vmem:[%s607 + $0x30] sm:$0xff] %vm723, %v5433
        %5454 = vst.msk [vmem:[%s607 + $0x38] sm:$0xff] %vm723, %v5436
        %s5455 = smul.u32 4, %s35
        %p5456 = scmp.lt.s32.totalorder %s36, 6
        %s5457 = scalar_select %p5456, %s36, 6
        %p5458 = scmp.lt.s32.totalorder %s5455, 7
        %s5459 = scalar_select %p5458, %s5455, 7
        %s5460 = smul.addr %s5459, 2
        %s5461 = smul.addr %s5457, 16
        %s5462 = sadd.s32 %s5460, %s5461
        %s5463 = smul.addr %s5462, 8
        %s5464 = scalar_lea.vmem %s14, %s5463
        // Predicated region
        $region119: #{tpu_custom_call.1} parent=105 // pred_check
          %p5465 = pneg %p348
        $region120: #{tpu_custom_call.1} parent=105 // pred_check_branch
          %5467 = sbr.rel (%p5465) target = $region122
        $region121: #{tpu_custom_call.1} parent=105 // pred_region
          %s5468 = smul.u32 4, %s35
        $region122: #{tpu_custom_call.1} parent=105 // pred_fallthru
          _
      $region106: #{tpu_custom_call.1} parent=5 // pred_fallthru
        _
      %p5469 = scmp.le.s32.totalorder 2, %s26
      // Predicated region
      $region123: #{tpu_custom_call.1} parent=5 // pred_check
        %p5470 = pneg %p5469
      $region124: #{tpu_custom_call.1} parent=5 // pred_check_branch
        %5472 = sbr.rel (%p5470) target = $region126
      $region125: #{tpu_custom_call.1} parent=5 // pred_region
        %s5473 = ssub.s32 %s26, 2
        // Predicated region
        $region127: #{tpu_custom_call.1} parent=125 // pred_check
          %p5474 = pneg %p354
        $region128: #{tpu_custom_call.1} parent=125 // pred_check_branch
          %5476 = sbr.rel (%p5474) target = $region130
        $region129: #{tpu_custom_call.1} parent=125 // pred_region
          %s5477 = smul.u32 4, %s37
          %p5478 = scmp.lt.s32.totalorder %s38, 6
          %s5479 = scalar_select %p5478, %s38, 6
          %p5480 = scmp.lt.s32.totalorder %s5477, 7
          %s5481 = scalar_select %p5480, %s5477, 7
          %s5482 = smul.addr %s5481, 2
          %s5483 = smul.addr %s5479, 16
          %s5484 = sadd.s32 %s5482, %s5483
          %s5485 = smul.addr %s5484, 8
          %s5486 = scalar_lea.vmem %s14, %s5485
        $region130: #{tpu_custom_call.1} parent=125 // pred_fallthru
          _
      $region126: #{tpu_custom_call.1} parent=5 // pred_fallthru
        _
    $region6: #{tpu_custom_call.1} parent=1 // loop_footer
      %s30 = sadd.s32 1, %s26
    $region7: #{tpu_custom_call.1} parent=1 // loop_footer_branch
      %25 = sbr.rel target = $region3
    $region8: #{tpu_custom_call.1} parent=1 // loop_exit
      _

</llo_original>
